<compile_context>
chip_gen: v5e
topology: v5e:2x2
jax: 0.10.0
libtpu: 0.0.40
codegen_flags: <defaults>
</compile_context>

<pallas_src>
import math
import functools

import jax
import jax.numpy as jnp
from jax import lax
from jax.experimental import pallas as pl
from jax.experimental.pallas import tpu as pltpu

_BF16 = jnp.bfloat16
_F32 = jnp.float32


@functools.lru_cache(maxsize=None)
def _vmem_limit_bytes():
    """Generation-aware scoped-VMEM limit (~3/4 of physical VMEM, capped at 100 MiB)."""
    cap = 64 * 1024 * 1024
    try:
        info = pltpu.get_tpu_info()
        cap = int(getattr(info, "vmem_capacity_bytes", cap) or cap)
    except Exception:
        pass
    return min((cap * 3) // 4, 100 * 1024 * 1024)


def _pick_tile(n, target=256):
    """Largest multiple-of-8 divisor of n that is <= target; falls back to the full axis."""
    if n <= target:
        return n
    start = target - (target % 8)
    for cand in range(start, 7, -8):
        if n % cand == 0:
            return cand
    return n


def _layer_norm(v, gb_ref, eps=1e-5):
    mu = jnp.mean(v, axis=-1, keepdims=True)
    c = v - mu
    var = jnp.mean(c * c, axis=-1, keepdims=True)
    return c * lax.rsqrt(var + eps) * gb_ref[0:1, :] + gb_ref[1:2, :]


# ----------------------------------------------------------------------------
# 1) FeatureFusion: per-level MLP (Linear->ReLU->Linear) fused with the 1x1
#    fusion conv.  Grid = (B, HW tiles); feature levels reduced in-kernel with
#    fori_loop(unroll=True) so the weights stay resident (constant index_maps).
# ----------------------------------------------------------------------------
def fusion_kernel(x_ref, w1_ref, b1_ref, w2_ref, b2_ref, wc_ref, bc_ref,
                  of_ref, ob_ref, *, num_features):
    t = x_ref.shape[2]
    dmid = w1_ref.shape[2]

    def body(f, acc):
        x = x_ref[0, f].astype(_BF16)                                            # (t, Cin)
        h = jnp.dot(x, w1_ref[f], preferred_element_type=_F32) + b1_ref[f]       # (t, Dmid)
        h = jnp.maximum(h, 0.0)
        y = jnp.dot(h.astype(_BF16), w2_ref[f], preferred_element_type=_F32) + b2_ref[f]
        # contribution of this feature level to the 1x1 fusion conv
        return acc + jnp.dot(y.astype(_BF16), wc_ref[f], preferred_element_type=_F32)

    acc = lax.fori_loop(0, num_features, body, jnp.zeros((t, dmid), _F32), unroll=True)
    acc = acc + bc_ref[...]
    of_ref[0] = acc                      # f32 model output (dropout = identity in eval)
    ob_ref[0] = acc.astype(_BF16)        # bf16 activation stream for the transformer


def feature_fusion(x, fp):
    # x: (B, F, HW, Cin) f32 (free reshape of the channel-last input)
    B, F, HW, Cin = x.shape
    Dmid = fp["w1"].shape[-1]
    t = _pick_tile(HW)
    grid = (B, HW // t)

    def const_spec(a):
        nd = a.ndim
        return pl.BlockSpec(a.shape, lambda b, n, nd=nd: (0,) * nd)

    return pl.pallas_call(
        functools.partial(fusion_kernel, num_features=F),
        out_shape=(jax.ShapeDtypeStruct((B, HW, Dmid), _F32),
                   jax.ShapeDtypeStruct((B, HW, Dmid), _BF16)),
        grid_spec=pltpu.PrefetchScalarGridSpec(
            num_scalar_prefetch=0,
            grid=grid,
            in_specs=[pl.BlockSpec((1, F, t, Cin), lambda b, n: (b, 0, n, 0))]
                     + [const_spec(fp[k]) for k in ("w1", "b1", "w2", "b2", "wc", "bc")],
            out_specs=[pl.BlockSpec((1, t, Dmid), lambda b, n: (b, n, 0)),
                       pl.BlockSpec((1, t, Dmid), lambda b, n: (b, n, 0))],
        ),
        compiler_params=pltpu.CompilerParams(
            dimension_semantics=("parallel", "parallel"),
            vmem_limit_bytes=_vmem_limit_bytes()),
    )(x, fp["w1"], fp["b1"], fp["w2"], fp["b2"], fp["wc"], fp["bc"])


# ----------------------------------------------------------------------------
# 2a) Attention sublayer of ResidualAttentionBlock.  Grid = (B, num_heads);
#     per-head fused QKV matmul, per-head fused output projection accumulated
#     into a lane-dense (S, D) f32 scratch; residual added at the last head.
# ----------------------------------------------------------------------------
def attn_kernel(x_ref, wqkv_ref, bqkv_ref, wo_ref, bo_ref, ln1_ref,
                o_ref, ln_scr, acc_scr, *, head_dim):
    h = pl.program_id(1)

    @pl.when(h == 0)
    def _():
        xn = _layer_norm(x_ref[0].astype(_F32), ln1_ref)
        ln_scr[...] = xn.astype(_BF16)
        acc_scr[...] = jnp.zeros_like(acc_scr)

    xnb = ln_scr[...]                                                            # (S, D) bf16
    qkv = jnp.dot(xnb, wqkv_ref[0], preferred_element_type=_F32) + bqkv_ref[0]  # (S, 3*hd)
    scale = 1.0 / math.sqrt(head_dim)
    q = (qkv[:, :head_dim] * scale).astype(_BF16)
    k = qkv[:, head_dim:2 * head_dim].astype(_BF16)
    v = qkv[:, 2 * head_dim:].astype(_BF16)

    s = lax.dot_general(q, k, (((1,), (1,)), ((), ())),
                        preferred_element_type=_F32)                            # (S, S)
    s = s - jnp.max(s, axis=-1, keepdims=True)
    p = jnp.exp(s)
    p = p * pl.reciprocal(jnp.sum(p, axis=-1, keepdims=True), approx=True)
    ctx = jnp.dot(p.astype(_BF16), v, preferred_element_type=_F32)               # (S, hd)
    # fused per-head output projection: lane-dense (S, D) accumulation, no hd-wide stores
    acc_scr[...] += jnp.dot(ctx.astype(_BF16), wo_ref[0], preferred_element_type=_F32)

    @pl.when(h == pl.num_programs(1) - 1)
    def _():
        o_ref[0] = (x_ref[0].astype(_F32) + acc_scr[...] + bo_ref[...]).astype(o_ref.dtype)


def attention_sublayer(x, bp, num_heads):
    # x: (B, S, D) bf16
    B, S, D = x.shape
    hd = D // num_heads
    return pl.pallas_call(
        functools.partial(attn_kernel, head_dim=hd),
        out_shape=jax.ShapeDtypeStruct((B, S, D), _BF16),
        grid_spec=pltpu.PrefetchScalarGridSpec(
            num_scalar_prefetch=0,
            grid=(B, num_heads),
            in_specs=[
                pl.BlockSpec((1, S, D), lambda b, h: (b, 0, 0)),
                pl.BlockSpec((1, D, 3 * hd), lambda b, h: (h, 0, 0)),
                pl.BlockSpec((1, 1, 3 * hd), lambda b, h: (h, 0, 0)),
                pl.BlockSpec((1, hd, D), lambda b, h: (h, 0, 0)),
                pl.BlockSpec((1, D), lambda b, h: (0, 0)),
                pl.BlockSpec((2, D), lambda b, h: (0, 0)),
            ],
            out_specs=pl.BlockSpec((1, S, D), lambda b, h: (b, 0, 0)),
            scratch_shapes=[pltpu.VMEM((S, D), _BF16),    # LN1(x), reused across heads
                            pltpu.VMEM((S, D), _F32)],    # lane-dense attention accumulator
        ),
        compiler_params=pltpu.CompilerParams(
            dimension_semantics=("parallel", "arbitrary"),
            vmem_limit_bytes=_vmem_limit_bytes()),
    )(x, bp["wqkv"], bp["bqkv"], bp["wo"], bp["bo"], bp["ln1"])


# ----------------------------------------------------------------------------
# 2b) MLP sublayer (LN2 -> Linear -> QuickGELU -> Linear + residual), token-tiled.
# ----------------------------------------------------------------------------
def mlp_kernel(x_ref, ln2_ref, wfc_ref, bfc_ref, wpj_ref, bpj_ref, o_ref):
    x = x_ref[0].astype(_F32)                                                    # (tS, D)
    xn = _layer_norm(x, ln2_ref)
    h1 = jnp.dot(xn.astype(_BF16), wfc_ref[...], preferred_element_type=_F32) + bfc_ref[...]
    # QuickGELU; sigmoid evaluated in bf16 (EUP bf16 path on v6e/v7x, promoted on v5e)
    gate = jax.nn.sigmoid((1.702 * h1).astype(_BF16)).astype(_F32)
    h1 = h1 * gate
    y = jnp.dot(h1.astype(_BF16), wpj_ref[...], preferred_element_type=_F32) + bpj_ref[...]
    o_ref[0] = (x + y).astype(o_ref.dtype)


def mlp_sublayer(x, bp):
    # x: (B, S, D) bf16
    B, S, D = x.shape
    t = _pick_tile(S)

    def const_spec(a):
        nd = a.ndim
        return pl.BlockSpec(a.shape, lambda b, n, nd=nd: (0,) * nd)

    return pl.pallas_call(
        mlp_kernel,
        out_shape=jax.ShapeDtypeStruct((B, S, D), _BF16),
        grid_spec=pltpu.PrefetchScalarGridSpec(
            num_scalar_prefetch=0,
            grid=(B, S // t),
            in_specs=[pl.BlockSpec((1, t, D), lambda b, n: (b, n, 0))]
                     + [const_spec(bp[k]) for k in ("ln2", "wfc", "bfc", "wpj", "bpj")],
            out_specs=pl.BlockSpec((1, t, D), lambda b, n: (b, n, 0)),
        ),
        compiler_params=pltpu.CompilerParams(
            dimension_semantics=("parallel", "parallel"),
            vmem_limit_bytes=_vmem_limit_bytes()),
    )(x, bp["ln2"], bp["wfc"], bp["bfc"], bp["wpj"], bp["bpj"])


# ----------------------------------------------------------------------------
# 3) Final 1x1 conv (mid_dim -> num_classes) as a per-batch matmul (bf16 MXU,
#    lane-dense HW output).
# ----------------------------------------------------------------------------
def proj_kernel(x_ref, w_ref, b_ref, o_ref):
    x = x_ref[0]                                                                 # (D, HW) bf16
    o_ref[0] = jnp.dot(w_ref[...], x, preferred_element_type=_F32) + b_ref[...]


def linear_projection(x_bd_hw, w, b, H, W):
    # x_bd_hw: (B, D, HW) bf16; w: (C, D) bf16; b: (C, 1) f32
    B, D, HW = x_bd_hw.shape
    C = w.shape[0]
    out = pl.pallas_call(
        proj_kernel,
        out_shape=jax.ShapeDtypeStruct((B, C, HW), _F32),
        grid_spec=pltpu.PrefetchScalarGridSpec(
            num_scalar_prefetch=0,
            grid=(B,),
            in_specs=[pl.BlockSpec((1, D, HW), lambda bi: (bi, 0, 0)),
                      pl.BlockSpec((C, D), lambda bi: (0, 0)),
                      pl.BlockSpec((C, 1), lambda bi: (0, 0))],
            out_specs=pl.BlockSpec((1, C, HW), lambda bi: (bi, 0, 0)),
        ),
        compiler_params=pltpu.CompilerParams(
            dimension_semantics=("parallel",),
            vmem_limit_bytes=_vmem_limit_bytes()),
    )(x_bd_hw, w, b)
    return out.reshape(B, C, H, W)


# ----------------------------------------------------------------------------
# Full FeatureDecoder forward
# ----------------------------------------------------------------------------
def feature_decoder_forward(feature_map, params, num_heads):
    # feature_map: (B, F, H, W, Cin) f32
    B, F, H, W, Cin = feature_map.shape
    Dmid = params["fusion"]["w1"].shape[-1]
    HW = H * W

    # --- FeatureFusion (free reshape only; bf16 cast happens in-kernel) ---
    fused_flat, seq = feature_fusion(feature_map.reshape(B, F, HW, Cin), params["fusion"])
    fused = fused_flat.reshape(B, H, W, Dmid)            # f32 model output

    # --- Transformer blocks over the S = H*W token axis (bf16 activation stream) ---
    for bp in params["blocks"]:
        seq = attention_sublayer(seq, bp, num_heads)
        seq = mlp_sublayer(seq, bp)

    # --- mirror torch `.permute(1,0,2).reshape(b, -1, h, w)`: raw row-major reshape ---
    x_bd_hw = seq.reshape(B, Dmid, HW)

    # --- linear_projection (1x1 conv) ---
    logits = linear_projection(x_bd_hw, params["wproj"], params["bproj"], H, W)
    return fused, logits


# ----------------------------------------------------------------------------
# Deterministic parameter initialization (synthetic; shapes follow __init__).
# Matmul weights are stored bf16 in (in, out) layout; biases / LN params are f32.
# ----------------------------------------------------------------------------
def init_params(key, in_dim, mid_dim, num_heads, num_layers, num_features, num_classes):
    state = {"key": key}

    def nrm(shape, dtype=_F32, scale=0.05):
        state["key"], sub = jax.random.split(state["key"])
        return (scale * jax.random.normal(sub, shape)).astype(dtype)

    hd = mid_dim // num_heads
    fusion = dict(
        w1=nrm((num_features, in_dim, mid_dim), _BF16),
        b1=nrm((num_features, 1, mid_dim)),
        w2=nrm((num_features, mid_dim, mid_dim), _BF16),
        b2=nrm((num_features, 1, mid_dim)),
        # 1x1 conv weight split per feature level, stored (in, out):
        # wc[f] == Wconv[:, f*mid_dim:(f+1)*mid_dim].T
        wc=nrm((num_features, mid_dim, mid_dim), _BF16),
        bc=nrm((1, mid_dim)),
    )
    blocks = []
    for _ in range(num_layers):
        blocks.append(dict(
            # per-head fused QKV, (num_heads, D, 3*hd): wqkv[h] = [Wq_h^T | Wk_h^T | Wv_h^T]
            wqkv=nrm((num_heads, mid_dim, 3 * hd), _BF16),
            bqkv=nrm((num_heads, 1, 3 * hd)),
            # per-head output projection, (num_heads, hd, D): wo[h] = Wo[:, h*hd:(h+1)*hd].T
            wo=nrm((num_heads, hd, mid_dim), _BF16),
            bo=nrm((1, mid_dim)),
            # row 0 = gamma (~1), row 1 = beta
            ln1=jnp.concatenate([1.0 + nrm((1, mid_dim)), nrm((1, mid_dim))], 0),
            ln2=jnp.concatenate([1.0 + nrm((1, mid_dim)), nrm((1, mid_dim))], 0),
            wfc=nrm((mid_dim, 4 * mid_dim), _BF16),
            bfc=nrm((1, 4 * mid_dim)),
            wpj=nrm((4 * mid_dim, mid_dim), _BF16),
            bpj=nrm((1, mid_dim)),
        ))
    wproj = nrm((num_classes, mid_dim), _BF16)
    bproj = nrm((num_classes, 1))
    return dict(fusion=fusion, blocks=blocks, wproj=wproj, bproj=bproj)


# TODO(synk): the frozen CLIP ViT encoder, text encoder, GradCAM and the affinity-map
#             (fused @ fused^T).sigmoid() of WeCLIPModel.forward are outside the
#             FeatureDecoder scope and are not implemented as Pallas kernels here.

if __name__ == "__main__":
    # small shapes consistent with the module
    B, F, H, W = 2, 3, 4, 4
    in_dim, mid_dim = 64, 128
    num_heads, num_layers, num_classes = 4, 2, 8

    key = jax.random.PRNGKey(0)
    k_x, k_p = jax.random.split(key)
    feature_map = jax.random.normal(k_x, (B, F, H, W, in_dim), dtype=jnp.float32)
    params = init_params(k_p, in_dim, mid_dim, num_heads, num_layers, F, num_classes)

    fwd = jax.jit(functools.partial(feature_decoder_forward, num_heads=num_heads))
    fused, logits = fwd(feature_map, params)
    fused = jax.block_until_ready(fused)
    logits = jax.block_until_ready(logits)

    assert fused.shape == (B, H, W, mid_dim), fused.shape
    assert logits.shape == (B, num_classes, H, W), logits.shape
    assert bool(jnp.all(jnp.isfinite(fused))) and bool(jnp.all(jnp.isfinite(logits)))
    print("KERNEL_OK")
</pallas_src>

<mosaic_0001>
module attributes {stable_mosaic.version = 11 : i64} {
  func.func @fusion_kernel(%arg0: i32, %arg1: i32, %arg2: memref<1x3x16x64xf32, #tpu.memory_space<vmem>>, %arg3: memref<3x64x128xbf16, #tpu.memory_space<vmem>>, %arg4: memref<3x1x128xf32, #tpu.memory_space<vmem>>, %arg5: memref<3x128x128xbf16, #tpu.memory_space<vmem>>, %arg6: memref<3x1x128xf32, #tpu.memory_space<vmem>>, %arg7: memref<3x128x128xbf16, #tpu.memory_space<vmem>>, %arg8: memref<1x128xf32, #tpu.memory_space<vmem>>, %arg9: memref<1x16x128xf32, #tpu.memory_space<vmem>>, %arg10: memref<1x16x128xbf16, #tpu.memory_space<vmem>>) attributes {dimension_semantics = [#tpu.dimension_semantics<parallel>, #tpu.dimension_semantics<parallel>], iteration_bounds = array<i64: 2, 1>, scalar_prefetch = 0 : i64, scratch_operands = 0 : i64, tpu.core_type = #tpu.core_type<tc>, window_params = [{transform_indices = @transform_0, window_bounds = array<i64: 1, 3, 16, 64>}, {pipeline_mode = #tpu.pipeline_mode<synchronous>, transform_indices = @transform_1, window_bounds = array<i64: 3, 64, 128>}, {pipeline_mode = #tpu.pipeline_mode<synchronous>, transform_indices = @transform_2, window_bounds = array<i64: 3, 1, 128>}, {pipeline_mode = #tpu.pipeline_mode<synchronous>, transform_indices = @transform_3, window_bounds = array<i64: 3, 128, 128>}, {pipeline_mode = #tpu.pipeline_mode<synchronous>, transform_indices = @transform_4, window_bounds = array<i64: 3, 1, 128>}, {pipeline_mode = #tpu.pipeline_mode<synchronous>, transform_indices = @transform_5, window_bounds = array<i64: 3, 128, 128>}, {pipeline_mode = #tpu.pipeline_mode<synchronous>, transform_indices = @transform_6, window_bounds = array<i64: 1, 128>}, {transform_indices = @transform_7, window_bounds = array<i64: 1, 16, 128>}, {transform_indices = @transform_8, window_bounds = array<i64: 1, 16, 128>}]} {
    %cst = arith.constant 0.000000e+00 : f32
    %0 = vector.broadcast %cst : f32 to vector<16x128xf32>
    %c0_i32 = arith.constant 0 : i32
    %c0 = arith.constant 0 : index
    %1 = arith.index_cast %c0_i32 : i32 to index
    %c0_0 = arith.constant 0 : index
    %c0_1 = arith.constant 0 : index
    %2 = vector.load %arg2[%c0, %1, %c0_0, %c0_1] : memref<1x3x16x64xf32, #tpu.memory_space<vmem>>, vector<1x1x16x64xf32>
    %3 = vector.shape_cast %2 : vector<1x1x16x64xf32> to vector<16x64xf32>
    %4 = arith.truncf %3 : vector<16x64xf32> to vector<16x64xbf16>
    %5 = arith.index_cast %c0_i32 : i32 to index
    %c0_2 = arith.constant 0 : index
    %c0_3 = arith.constant 0 : index
    %6 = vector.load %arg3[%5, %c0_2, %c0_3] : memref<3x64x128xbf16, #tpu.memory_space<vmem>>, vector<1x64x128xbf16>
    %7 = vector.shape_cast %6 : vector<1x64x128xbf16> to vector<64x128xbf16>
    %cst_4 = arith.constant dense<0.000000e+00> : vector<16x128xf32>
    %8 = tpu.matmul %4, %7, %cst_4 {dimension_numbers = #tpu.dot_dimension_numbers<[1], [0], [0], [1], [0, 0, 1, 1], [], []>} : vector<16x64xbf16>, vector<64x128xbf16>, vector<16x128xf32> -> vector<16x128xf32>
    %9 = arith.index_cast %c0_i32 : i32 to index
    %c0_5 = arith.constant 0 : index
    %c0_6 = arith.constant 0 : index
    %10 = vector.load %arg4[%9, %c0_5, %c0_6] : memref<3x1x128xf32, #tpu.memory_space<vmem>>, vector<1x1x128xf32>
    %11 = vector.shape_cast %10 : vector<1x1x128xf32> to vector<1x128xf32>
    %12 = vector.broadcast %11 : vector<1x128xf32> to vector<16x128xf32>
    %13 = arith.addf %8, %12 : vector<16x128xf32>
    %cst_7 = arith.constant 0.000000e+00 : f32
    %14 = vector.broadcast %cst_7 : f32 to vector<16x128xf32>
    %15 = arith.maximumf %13, %14 : vector<16x128xf32>
    %16 = arith.truncf %15 : vector<16x128xf32> to vector<16x128xbf16>
    %17 = arith.index_cast %c0_i32 : i32 to index
    %c0_8 = arith.constant 0 : index
    %c0_9 = arith.constant 0 : index
    %18 = vector.load %arg5[%17, %c0_8, %c0_9] : memref<3x128x128xbf16, #tpu.memory_space<vmem>>, vector<1x128x128xbf16>
    %19 = vector.shape_cast %18 : vector<1x128x128xbf16> to vector<128x128xbf16>
    %cst_10 = arith.constant dense<0.000000e+00> : vector<16x128xf32>
    %20 = tpu.matmul %16, %19, %cst_10 {dimension_numbers = #tpu.dot_dimension_numbers<[1], [0], [0], [1], [0, 0, 1, 1], [], []>} : vector<16x128xbf16>, vector<128x128xbf16>, vector<16x128xf32> -> vector<16x128xf32>
    %21 = arith.index_cast %c0_i32 : i32 to index
    %c0_11 = arith.constant 0 : index
    %c0_12 = arith.constant 0 : index
    %22 = vector.load %arg6[%21, %c0_11, %c0_12] : memref<3x1x128xf32, #tpu.memory_space<vmem>>, vector<1x1x128xf32>
    %23 = vector.shape_cast %22 : vector<1x1x128xf32> to vector<1x128xf32>
    %24 = vector.broadcast %23 : vector<1x128xf32> to vector<16x128xf32>
    %25 = arith.addf %20, %24 : vector<16x128xf32>
    %26 = arith.truncf %25 : vector<16x128xf32> to vector<16x128xbf16>
    %27 = arith.index_cast %c0_i32 : i32 to index
    %c0_13 = arith.constant 0 : index
    %c0_14 = arith.constant 0 : index
    %28 = vector.load %arg7[%27, %c0_13, %c0_14] : memref<3x128x128xbf16, #tpu.memory_space<vmem>>, vector<1x128x128xbf16>
    %29 = vector.shape_cast %28 : vector<1x128x128xbf16> to vector<128x128xbf16>
    %cst_15 = arith.constant dense<0.000000e+00> : vector<16x128xf32>
    %30 = tpu.matmul %26, %29, %cst_15 {dimension_numbers = #tpu.dot_dimension_numbers<[1], [0], [0], [1], [0, 0, 1, 1], [], []>} : vector<16x128xbf16>, vector<128x128xbf16>, vector<16x128xf32> -> vector<16x128xf32>
    %31 = arith.addf %0, %30 : vector<16x128xf32>
    %c1_i32 = arith.constant 1 : i32
    %c0_16 = arith.constant 0 : index
    %32 = arith.index_cast %c1_i32 : i32 to index
    %c0_17 = arith.constant 0 : index
    %c0_18 = arith.constant 0 : index
    %33 = vector.load %arg2[%c0_16, %32, %c0_17, %c0_18] : memref<1x3x16x64xf32, #tpu.memory_space<vmem>>, vector<1x1x16x64xf32>
    %34 = vector.shape_cast %33 : vector<1x1x16x64xf32> to vector<16x64xf32>
    %35 = arith.truncf %34 : vector<16x64xf32> to vector<16x64xbf16>
    %36 = arith.index_cast %c1_i32 : i32 to index
    %c0_19 = arith.constant 0 : index
    %c0_20 = arith.constant 0 : index
    %37 = vector.load %arg3[%36, %c0_19, %c0_20] : memref<3x64x128xbf16, #tpu.memory_space<vmem>>, vector<1x64x128xbf16>
    %38 = vector.shape_cast %37 : vector<1x64x128xbf16> to vector<64x128xbf16>
    %cst_21 = arith.constant dense<0.000000e+00> : vector<16x128xf32>
    %39 = tpu.matmul %35, %38, %cst_21 {dimension_numbers = #tpu.dot_dimension_numbers<[1], [0], [0], [1], [0, 0, 1, 1], [], []>} : vector<16x64xbf16>, vector<64x128xbf16>, vector<16x128xf32> -> vector<16x128xf32>
    %40 = arith.index_cast %c1_i32 : i32 to index
    %c0_22 = arith.constant 0 : index
    %c0_23 = arith.constant 0 : index
    %41 = vector.load %arg4[%40, %c0_22, %c0_23] : memref<3x1x128xf32, #tpu.memory_space<vmem>>, vector<1x1x128xf32>
    %42 = vector.shape_cast %41 : vector<1x1x128xf32> to vector<1x128xf32>
    %43 = vector.broadcast %42 : vector<1x128xf32> to vector<16x128xf32>
    %44 = arith.addf %39, %43 : vector<16x128xf32>
    %cst_24 = arith.constant 0.000000e+00 : f32
    %45 = vector.broadcast %cst_24 : f32 to vector<16x128xf32>
    %46 = arith.maximumf %44, %45 : vector<16x128xf32>
    %47 = arith.truncf %46 : vector<16x128xf32> to vector<16x128xbf16>
    %48 = arith.index_cast %c1_i32 : i32 to index
    %c0_25 = arith.constant 0 : index
    %c0_26 = arith.constant 0 : index
    %49 = vector.load %arg5[%48, %c0_25, %c0_26] : memref<3x128x128xbf16, #tpu.memory_space<vmem>>, vector<1x128x128xbf16>
    %50 = vector.shape_cast %49 : vector<1x128x128xbf16> to vector<128x128xbf16>
    %cst_27 = arith.constant dense<0.000000e+00> : vector<16x128xf32>
    %51 = tpu.matmul %47, %50, %cst_27 {dimension_numbers = #tpu.dot_dimension_numbers<[1], [0], [0], [1], [0, 0, 1, 1], [], []>} : vector<16x128xbf16>, vector<128x128xbf16>, vector<16x128xf32> -> vector<16x128xf32>
    %52 = arith.index_cast %c1_i32 : i32 to index
    %c0_28 = arith.constant 0 : index
    %c0_29 = arith.constant 0 : index
    %53 = vector.load %arg6[%52, %c0_28, %c0_29] : memref<3x1x128xf32, #tpu.memory_space<vmem>>, vector<1x1x128xf32>
    %54 = vector.shape_cast %53 : vector<1x1x128xf32> to vector<1x128xf32>
    %55 = vector.broadcast %54 : vector<1x128xf32> to vector<16x128xf32>
    %56 = arith.addf %51, %55 : vector<16x128xf32>
    %57 = arith.truncf %56 : vector<16x128xf32> to vector<16x128xbf16>
    %58 = arith.index_cast %c1_i32 : i32 to index
    %c0_30 = arith.constant 0 : index
    %c0_31 = arith.constant 0 : index
    %59 = vector.load %arg7[%58, %c0_30, %c0_31] : memref<3x128x128xbf16, #tpu.memory_space<vmem>>, vector<1x128x128xbf16>
    %60 = vector.shape_cast %59 : vector<1x128x128xbf16> to vector<128x128xbf16>
    %cst_32 = arith.constant dense<0.000000e+00> : vector<16x128xf32>
    %61 = tpu.matmul %57, %60, %cst_32 {dimension_numbers = #tpu.dot_dimension_numbers<[1], [0], [0], [1], [0, 0, 1, 1], [], []>} : vector<16x128xbf16>, vector<128x128xbf16>, vector<16x128xf32> -> vector<16x128xf32>
    %62 = arith.addf %31, %61 : vector<16x128xf32>
    %c2_i32 = arith.constant 2 : i32
    %c0_33 = arith.constant 0 : index
    %63 = arith.index_cast %c2_i32 : i32 to index
    %c0_34 = arith.constant 0 : index
    %c0_35 = arith.constant 0 : index
    %64 = vector.load %arg2[%c0_33, %63, %c0_34, %c0_35] : memref<1x3x16x64xf32, #tpu.memory_space<vmem>>, vector<1x1x16x64xf32>
    %65 = vector.shape_cast %64 : vector<1x1x16x64xf32> to vector<16x64xf32>
    %66 = arith.truncf %65 : vector<16x64xf32> to vector<16x64xbf16>
    %67 = arith.index_cast %c2_i32 : i32 to index
    %c0_36 = arith.constant 0 : index
    %c0_37 = arith.constant 0 : index
    %68 = vector.load %arg3[%67, %c0_36, %c0_37] : memref<3x64x128xbf16, #tpu.memory_space<vmem>>, vector<1x64x128xbf16>
    %69 = vector.shape_cast %68 : vector<1x64x128xbf16> to vector<64x128xbf16>
    %cst_38 = arith.constant dense<0.000000e+00> : vector<16x128xf32>
    %70 = tpu.matmul %66, %69, %cst_38 {dimension_numbers = #tpu.dot_dimension_numbers<[1], [0], [0], [1], [0, 0, 1, 1], [], []>} : vector<16x64xbf16>, vector<64x128xbf16>, vector<16x128xf32> -> vector<16x128xf32>
    %71 = arith.index_cast %c2_i32 : i32 to index
    %c0_39 = arith.constant 0 : index
    %c0_40 = arith.constant 0 : index
    %72 = vector.load %arg4[%71, %c0_39, %c0_40] : memref<3x1x128xf32, #tpu.memory_space<vmem>>, vector<1x1x128xf32>
    %73 = vector.shape_cast %72 : vector<1x1x128xf32> to vector<1x128xf32>
    %74 = vector.broadcast %73 : vector<1x128xf32> to vector<16x128xf32>
    %75 = arith.addf %70, %74 : vector<16x128xf32>
    %cst_41 = arith.constant 0.000000e+00 : f32
    %76 = vector.broadcast %cst_41 : f32 to vector<16x128xf32>
    %77 = arith.maximumf %75, %76 : vector<16x128xf32>
    %78 = arith.truncf %77 : vector<16x128xf32> to vector<16x128xbf16>
    %79 = arith.index_cast %c2_i32 : i32 to index
    %c0_42 = arith.constant 0 : index
    %c0_43 = arith.constant 0 : index
    %80 = vector.load %arg5[%79, %c0_42, %c0_43] : memref<3x128x128xbf16, #tpu.memory_space<vmem>>, vector<1x128x128xbf16>
    %81 = vector.shape_cast %80 : vector<1x128x128xbf16> to vector<128x128xbf16>
    %cst_44 = arith.constant dense<0.000000e+00> : vector<16x128xf32>
    %82 = tpu.matmul %78, %81, %cst_44 {dimension_numbers = #tpu.dot_dimension_numbers<[1], [0], [0], [1], [0, 0, 1, 1], [], []>} : vector<16x128xbf16>, vector<128x128xbf16>, vector<16x128xf32> -> vector<16x128xf32>
    %83 = arith.index_cast %c2_i32 : i32 to index
    %c0_45 = arith.constant 0 : index
    %c0_46 = arith.constant 0 : index
    %84 = vector.load %arg6[%83, %c0_45, %c0_46] : memref<3x1x128xf32, #tpu.memory_space<vmem>>, vector<1x1x128xf32>
    %85 = vector.shape_cast %84 : vector<1x1x128xf32> to vector<1x128xf32>
    %86 = vector.broadcast %85 : vector<1x128xf32> to vector<16x128xf32>
    %87 = arith.addf %82, %86 : vector<16x128xf32>
    %88 = arith.truncf %87 : vector<16x128xf32> to vector<16x128xbf16>
    %89 = arith.index_cast %c2_i32 : i32 to index
    %c0_47 = arith.constant 0 : index
    %c0_48 = arith.constant 0 : index
    %90 = vector.load %arg7[%89, %c0_47, %c0_48] : memref<3x128x128xbf16, #tpu.memory_space<vmem>>, vector<1x128x128xbf16>
    %91 = vector.shape_cast %90 : vector<1x128x128xbf16> to vector<128x128xbf16>
    %cst_49 = arith.constant dense<0.000000e+00> : vector<16x128xf32>
    %92 = tpu.matmul %88, %91, %cst_49 {dimension_numbers = #tpu.dot_dimension_numbers<[1], [0], [0], [1], [0, 0, 1, 1], [], []>} : vector<16x128xbf16>, vector<128x128xbf16>, vector<16x128xf32> -> vector<16x128xf32>
    %93 = arith.addf %62, %92 : vector<16x128xf32>
    %c3_i32 = arith.constant 3 : i32
    %c0_50 = arith.constant 0 : index
    %c0_51 = arith.constant 0 : index
    %94 = vector.load %arg8[%c0_50, %c0_51] : memref<1x128xf32, #tpu.memory_space<vmem>>, vector<1x128xf32>
    %95 = vector.broadcast %94 : vector<1x128xf32> to vector<16x128xf32>
    %96 = arith.addf %93, %95 : vector<16x128xf32>
    %c0_52 = arith.constant 0 : index
    %c0_53 = arith.constant 0 : index
    %c0_54 = arith.constant 0 : index
    %97 = vector.load %arg9[%c0_52, %c0_53, %c0_54] : memref<1x16x128xf32, #tpu.memory_space<vmem>>, vector<1x16x128xf32>
    %98 = vector.shape_cast %97 : vector<1x16x128xf32> to vector<16x128xf32>
    %99 = vector.shape_cast %96 : vector<16x128xf32> to vector<1x16x128xf32>
    tpu.vector_store %arg9[%c0_52, %c0_53, %c0_54], %99 {strides = array<i32>} : memref<1x16x128xf32, #tpu.memory_space<vmem>>, vector<1x16x128xf32>,
    %100 = arith.truncf %96 : vector<16x128xf32> to vector<16x128xbf16>
    %c0_55 = arith.constant 0 : index
    %c0_56 = arith.constant 0 : index
    %c0_57 = arith.constant 0 : index
    %101 = vector.load %arg10[%c0_55, %c0_56, %c0_57] : memref<1x16x128xbf16, #tpu.memory_space<vmem>>, vector<1x16x128xbf16>
    %102 = vector.shape_cast %101 : vector<1x16x128xbf16> to vector<16x128xbf16>
    %103 = vector.shape_cast %100 : vector<16x128xbf16> to vector<1x16x128xbf16>
    tpu.vector_store %arg10[%c0_55, %c0_56, %c0_57], %103 {strides = array<i32>} : memref<1x16x128xbf16, #tpu.memory_space<vmem>>, vector<1x16x128xbf16>,
    return
  }
  func.func @transform_0(%arg0: i32, %arg1: i32) -> (i32, i32, i32, i32) {
    %c0_i32 = arith.constant 0 : i32
    %c0_i32_0 = arith.constant 0 : i32
    %c0_i32_1 = arith.constant 0 : i32
    return %arg0, %c0_i32, %arg1, %c0_i32_0 : i32, i32, i32, i32
  }
  func.func @transform_1(%arg0: i32, %arg1: i32) -> (i32, i32, i32) {
    %c0_i32 = arith.constant 0 : i32
    %c0_i32_0 = arith.constant 0 : i32
    %c0_i32_1 = arith.constant 0 : i32
    %c0_i32_2 = arith.constant 0 : i32
    return %c0_i32, %c0_i32_0, %c0_i32_1 : i32, i32, i32
  }
  func.func @transform_2(%arg0: i32, %arg1: i32) -> (i32, i32, i32) {
    %c0_i32 = arith.constant 0 : i32
    %c0_i32_0 = arith.constant 0 : i32
    %c0_i32_1 = arith.constant 0 : i32
    %c0_i32_2 = arith.constant 0 : i32
    return %c0_i32, %c0_i32_0, %c0_i32_1 : i32, i32, i32
  }
  func.func @transform_3(%arg0: i32, %arg1: i32) -> (i32, i32, i32) {
    %c0_i32 = arith.constant 0 : i32
    %c0_i32_0 = arith.constant 0 : i32
    %c0_i32_1 = arith.constant 0 : i32
    %c0_i32_2 = arith.constant 0 : i32
    return %c0_i32, %c0_i32_0, %c0_i32_1 : i32, i32, i32
  }
  func.func @transform_4(%arg0: i32, %arg1: i32) -> (i32, i32, i32) {
    %c0_i32 = arith.constant 0 : i32
    %c0_i32_0 = arith.constant 0 : i32
    %c0_i32_1 = arith.constant 0 : i32
    %c0_i32_2 = arith.constant 0 : i32
    return %c0_i32, %c0_i32_0, %c0_i32_1 : i32, i32, i32
  }
  func.func @transform_5(%arg0: i32, %arg1: i32) -> (i32, i32, i32) {
    %c0_i32 = arith.constant 0 : i32
    %c0_i32_0 = arith.constant 0 : i32
    %c0_i32_1 = arith.constant 0 : i32
    %c0_i32_2 = arith.constant 0 : i32
    return %c0_i32, %c0_i32_0, %c0_i32_1 : i32, i32, i32
  }
  func.func @transform_6(%arg0: i32, %arg1: i32) -> (i32, i32) {
    %c0_i32 = arith.constant 0 : i32
    %c0_i32_0 = arith.constant 0 : i32
    %c0_i32_1 = arith.constant 0 : i32
    return %c0_i32, %c0_i32_0 : i32, i32
  }
  func.func @transform_7(%arg0: i32, %arg1: i32) -> (i32, i32, i32) {
    %c0_i32 = arith.constant 0 : i32
    %c0_i32_0 = arith.constant 0 : i32
    return %arg0, %arg1, %c0_i32 : i32, i32, i32
  }
  func.func @transform_8(%arg0: i32, %arg1: i32) -> (i32, i32, i32) {
    %c0_i32 = arith.constant 0 : i32
    %c0_i32_0 = arith.constant 0 : i32
    return %arg0, %arg1, %c0_i32 : i32, i32, i32
  }
}

module attributes {stable_mosaic.version = 11 : i64} {
  func.func @attn_kernel(%arg0: i32, %arg1: i32, %arg2: memref<1x16x128xbf16, #tpu.memory_space<vmem>>, %arg3: memref<1x128x96xbf16, #tpu.memory_space<vmem>>, %arg4: memref<1x1x96xf32, #tpu.memory_space<vmem>>, %arg5: memref<1x32x128xbf16, #tpu.memory_space<vmem>>, %arg6: memref<1x128xf32, #tpu.memory_space<vmem>>, %arg7: memref<2x128xf32, #tpu.memory_space<vmem>>, %arg8: memref<1x16x128xbf16, #tpu.memory_space<vmem>>, %arg9: memref<16x128xbf16, #tpu.memory_space<vmem>>, %arg10: memref<16x128xf32, #tpu.memory_space<vmem>>) attributes {dimension_semantics = [#tpu.dimension_semantics<parallel>, #tpu.dimension_semantics<arbitrary>], iteration_bounds = array<i64: 2, 4>, scalar_prefetch = 0 : i64, scratch_operands = 2 : i64, tpu.core_type = #tpu.core_type<tc>, window_params = [{transform_indices = @transform_0, window_bounds = array<i64: 1, 16, 128>}, {transform_indices = @transform_1, window_bounds = array<i64: 1, 128, 96>}, {transform_indices = @transform_2, window_bounds = array<i64: 1, 1, 96>}, {transform_indices = @transform_3, window_bounds = array<i64: 1, 32, 128>}, {pipeline_mode = #tpu.pipeline_mode<synchronous>, transform_indices = @transform_4, window_bounds = array<i64: 1, 128>}, {pipeline_mode = #tpu.pipeline_mode<synchronous>, transform_indices = @transform_5, window_bounds = array<i64: 2, 128>}, {transform_indices = @transform_6, window_bounds = array<i64: 1, 16, 128>}]} {
    %c0_i32 = arith.constant 0 : i32
    %0 = arith.cmpi eq, %arg1, %c0_i32 : i32
    %1 = arith.extui %0 : i1 to i32
    %c0_i32_0 = arith.constant 0 : i32
    %2 = arith.cmpi ne, %1, %c0_i32_0 : i32
    scf.if %2 {
      %c0_22 = arith.constant 0 : index
      %c0_23 = arith.constant 0 : index
      %c0_24 = arith.constant 0 : index
      %42 = vector.load %arg2[%c0_22, %c0_23, %c0_24] : memref<1x16x128xbf16, #tpu.memory_space<vmem>>, vector<1x16x128xbf16>
      %43 = vector.shape_cast %42 : vector<1x16x128xbf16> to vector<16x128xbf16>
      %44 = arith.extf %43 : vector<16x128xbf16> to vector<16x128xf32>
      %cst_25 = arith.constant dense<0.000000e+00> : vector<16xf32>
      %45 = vector.multi_reduction <add>, %44, %cst_25 [1] : vector<16x128xf32> to vector<16xf32>
      %46 = vector.shape_cast %45 : vector<16xf32> to vector<16x1xf32>
      %cst_26 = arith.constant 1.280000e+02 : f32
      %47 = vector.broadcast %cst_26 : f32 to vector<16x1xf32>
      %48 = arith.divf %46, %47 : vector<16x1xf32>
      %49 = vector.broadcast %48 : vector<16x1xf32> to vector<16x128xf32>
      %50 = arith.subf %44, %49 : vector<16x128xf32>
      %51 = arith.mulf %50, %50 : vector<16x128xf32>
      %cst_27 = arith.constant dense<0.000000e+00> : vector<16xf32>
      %52 = vector.multi_reduction <add>, %51, %cst_27 [1] : vector<16x128xf32> to vector<16xf32>
      %53 = vector.shape_cast %52 : vector<16xf32> to vector<16x1xf32>
      %cst_28 = arith.constant 1.280000e+02 : f32
      %54 = vector.broadcast %cst_28 : f32 to vector<16x1xf32>
      %55 = arith.divf %53, %54 : vector<16x1xf32>
      %cst_29 = arith.constant 9.99999974E-6 : f32
      %56 = vector.broadcast %cst_29 : f32 to vector<16x1xf32>
      %57 = arith.addf %55, %56 : vector<16x1xf32>
      %58 = math.rsqrt %57 : vector<16x1xf32>
      %59 = vector.broadcast %58 : vector<16x1xf32> to vector<16x128xf32>
      %60 = arith.mulf %50, %59 : vector<16x128xf32>
      %c0_30 = arith.constant 0 : index
      %c0_31 = arith.constant 0 : index
      %61 = vector.load %arg7[%c0_30, %c0_31] : memref<2x128xf32, #tpu.memory_space<vmem>>, vector<1x128xf32>
      %62 = vector.broadcast %61 : vector<1x128xf32> to vector<16x128xf32>
      %63 = arith.mulf %60, %62 : vector<16x128xf32>
      %c1 = arith.constant 1 : index
      %c0_32 = arith.constant 0 : index
      %64 = vector.load %arg7[%c1, %c0_32] : memref<2x128xf32, #tpu.memory_space<vmem>>, vector<1x128xf32>
      %65 = vector.broadcast %64 : vector<1x128xf32> to vector<16x128xf32>
      %66 = arith.addf %63, %65 : vector<16x128xf32>
      %67 = arith.truncf %66 : vector<16x128xf32> to vector<16x128xbf16>
      %c0_33 = arith.constant 0 : index
      %c0_34 = arith.constant 0 : index
      %68 = vector.load %arg9[%c0_33, %c0_34] : memref<16x128xbf16, #tpu.memory_space<vmem>>, vector<16x128xbf16>
      tpu.vector_store %arg9[%c0_33, %c0_34], %67 {strides = array<i32>} : memref<16x128xbf16, #tpu.memory_space<vmem>>, vector<16x128xbf16>,
      %cst_35 = arith.constant 0.000000e+00 : f32
      %69 = vector.broadcast %cst_35 : f32 to vector<16x128xf32>
      %c0_36 = arith.constant 0 : index
      %c0_37 = arith.constant 0 : index
      %70 = vector.load %arg10[%c0_36, %c0_37] : memref<16x128xf32, #tpu.memory_space<vmem>>, vector<16x128xf32>
      tpu.vector_store %arg10[%c0_36, %c0_37], %69 {strides = array<i32>} : memref<16x128xf32, #tpu.memory_space<vmem>>, vector<16x128xf32>,
    } else {
    }
    %c0 = arith.constant 0 : index
    %c0_1 = arith.constant 0 : index
    %3 = vector.load %arg9[%c0, %c0_1] : memref<16x128xbf16, #tpu.memory_space<vmem>>, vector<16x128xbf16>
    %c0_2 = arith.constant 0 : index
    %c0_3 = arith.constant 0 : index
    %c0_4 = arith.constant 0 : index
    %4 = vector.load %arg3[%c0_2, %c0_3, %c0_4] : memref<1x128x96xbf16, #tpu.memory_space<vmem>>, vector<1x128x96xbf16>
    %5 = vector.shape_cast %4 : vector<1x128x96xbf16> to vector<128x96xbf16>
    %cst = arith.constant dense<0.000000e+00> : vector<16x96xf32>
    %6 = tpu.matmul %3, %5, %cst {dimension_numbers = #tpu.dot_dimension_numbers<[1], [0], [0], [1], [0, 0, 1, 1], [], []>} : vector<16x128xbf16>, vector<128x96xbf16>, vector<16x96xf32> -> vector<16x96xf32>
    %c0_5 = arith.constant 0 : index
    %c0_6 = arith.constant 0 : index
    %c0_7 = arith.constant 0 : index
    %7 = vector.load %arg4[%c0_5, %c0_6, %c0_7] : memref<1x1x96xf32, #tpu.memory_space<vmem>>, vector<1x1x96xf32>
    %8 = vector.shape_cast %7 : vector<1x1x96xf32> to vector<1x96xf32>
    %9 = vector.broadcast %8 : vector<1x96xf32> to vector<16x96xf32>
    %10 = arith.addf %6, %9 : vector<16x96xf32>
    %11 = vector.extract_strided_slice %10 {offsets = [0, 0], sizes = [16, 32], strides = [1, 1]} : vector<16x96xf32> to vector<16x32xf32>
    %cst_8 = arith.constant 0.176776692 : f32
    %12 = vector.broadcast %cst_8 : f32 to vector<16x32xf32>
    %13 = arith.mulf %11, %12 : vector<16x32xf32>
    %14 = arith.truncf %13 : vector<16x32xf32> to vector<16x32xbf16>
    %15 = vector.extract_strided_slice %10 {offsets = [0, 32], sizes = [16, 32], strides = [1, 1]} : vector<16x96xf32> to vector<16x32xf32>
    %16 = arith.truncf %15 : vector<16x32xf32> to vector<16x32xbf16>
    %17 = vector.extract_strided_slice %10 {offsets = [0, 64], sizes = [16, 32], strides = [1, 1]} : vector<16x96xf32> to vector<16x32xf32>
    %18 = arith.truncf %17 : vector<16x32xf32> to vector<16x32xbf16>
    %cst_9 = arith.constant dense<0.000000e+00> : vector<16x16xf32>
    %19 = tpu.matmul %14, %16, %cst_9 {dimension_numbers = #tpu.dot_dimension_numbers<[1], [1], [0], [0], [0, 0, 1, 0], [], []>} : vector<16x32xbf16>, vector<16x32xbf16>, vector<16x16xf32> -> vector<16x16xf32>
    %cst_10 = arith.constant dense<0xFF800000> : vector<16xf32>
    %20 = vector.multi_reduction <maximumf>, %19, %cst_10 [1] : vector<16x16xf32> to vector<16xf32>
    %21 = vector.shape_cast %20 : vector<16xf32> to vector<16x1xf32>
    %22 = vector.broadcast %21 : vector<16x1xf32> to vector<16x16xf32>
    %23 = arith.subf %19, %22 : vector<16x16xf32>
    %24 = math.exp %23 : vector<16x16xf32>
    %cst_11 = arith.constant dense<0.000000e+00> : vector<16xf32>
    %25 = vector.multi_reduction <add>, %24, %cst_11 [1] : vector<16x16xf32> to vector<16xf32>
    %26 = vector.shape_cast %25 : vector<16xf32> to vector<16x1xf32>
    %27 = tpu.reciprocal %26 {approx = true} : vector<16x1xf32> -> vector<16x1xf32>
    %28 = vector.broadcast %27 : vector<16x1xf32> to vector<16x16xf32>
    %29 = arith.mulf %24, %28 : vector<16x16xf32>
    %30 = arith.truncf %29 : vector<16x16xf32> to vector<16x16xbf16>
    %cst_12 = arith.constant dense<0.000000e+00> : vector<16x32xf32>
    %31 = tpu.matmul %30, %18, %cst_12 {dimension_numbers = #tpu.dot_dimension_numbers<[1], [0], [0], [1], [0, 0, 1, 1], [], []>} : vector<16x16xbf16>, vector<16x32xbf16>, vector<16x32xf32> -> vector<16x32xf32>
    %c0_13 = arith.constant 0 : index
    %c0_14 = arith.constant 0 : index
    %32 = vector.load %arg10[%c0_13, %c0_14] : memref<16x128xf32, #tpu.memory_space<vmem>>, vector<16x128xf32>
    %33 = arith.truncf %31 : vector<16x32xf32> to vector<16x32xbf16>
    %c0_15 = arith.constant 0 : index
    %c0_16 = arith.constant 0 : index
    %c0_17 = arith.constant 0 : index
    %34 = vector.load %arg5[%c0_15, %c0_16, %c0_17] : memref<1x32x128xbf16, #tpu.memory_space<vmem>>, vector<1x32x128xbf16>
    %35 = vector.shape_cast %34 : vector<1x32x128xbf16> to vector<32x128xbf16>
    %cst_18 = arith.constant dense<0.000000e+00> : vector<16x128xf32>
    %36 = tpu.matmul %33, %35, %cst_18 {dimension_numbers = #tpu.dot_dimension_numbers<[1], [0], [0], [1], [0, 0, 1, 1], [], []>} : vector<16x32xbf16>, vector<32x128xbf16>, vector<16x128xf32> -> vector<16x128xf32>
    %37 = arith.addf %32, %36 : vector<16x128xf32>
    %c0_19 = arith.constant 0 : index
    %c0_20 = arith.constant 0 : index
    %38 = vector.load %arg10[%c0_19, %c0_20] : memref<16x128xf32, #tpu.memory_space<vmem>>, vector<16x128xf32>
    tpu.vector_store %arg10[%c0_19, %c0_20], %37 {strides = array<i32>} : memref<16x128xf32, #tpu.memory_space<vmem>>, vector<16x128xf32>,
    %c3_i32 = arith.constant 3 : i32
    %39 = arith.cmpi eq, %arg1, %c3_i32 : i32
    %40 = arith.extui %39 : i1 to i32
    %c0_i32_21 = arith.constant 0 : i32
    %41 = arith.cmpi ne, %40, %c0_i32_21 : i32
    scf.if %41 {
      %c0_22 = arith.constant 0 : index
      %c0_23 = arith.constant 0 : index
      %c0_24 = arith.constant 0 : index
      %42 = vector.load %arg2[%c0_22, %c0_23, %c0_24] : memref<1x16x128xbf16, #tpu.memory_space<vmem>>, vector<1x16x128xbf16>
      %43 = vector.shape_cast %42 : vector<1x16x128xbf16> to vector<16x128xbf16>
      %44 = arith.extf %43 : vector<16x128xbf16> to vector<16x128xf32>
      %c0_25 = arith.constant 0 : index
      %c0_26 = arith.constant 0 : index
      %45 = vector.load %arg10[%c0_25, %c0_26] : memref<16x128xf32, #tpu.memory_space<vmem>>, vector<16x128xf32>
      %46 = arith.addf %44, %45 : vector<16x128xf32>
      %c0_27 = arith.constant 0 : index
      %c0_28 = arith.constant 0 : index
      %47 = vector.load %arg6[%c0_27, %c0_28] : memref<1x128xf32, #tpu.memory_space<vmem>>, vector<1x128xf32>
      %48 = vector.broadcast %47 : vector<1x128xf32> to vector<16x128xf32>
      %49 = arith.addf %46, %48 : vector<16x128xf32>
      %50 = arith.truncf %49 : vector<16x128xf32> to vector<16x128xbf16>
      %c0_29 = arith.constant 0 : index
      %c0_30 = arith.constant 0 : index
      %c0_31 = arith.constant 0 : index
      %51 = vector.load %arg8[%c0_29, %c0_30, %c0_31] : memref<1x16x128xbf16, #tpu.memory_space<vmem>>, vector<1x16x128xbf16>
      %52 = vector.shape_cast %51 : vector<1x16x128xbf16> to vector<16x128xbf16>
      %53 = vector.shape_cast %50 : vector<16x128xbf16> to vector<1x16x128xbf16>
      tpu.vector_store %arg8[%c0_29, %c0_30, %c0_31], %53 {strides = array<i32>} : memref<1x16x128xbf16, #tpu.memory_space<vmem>>, vector<1x16x128xbf16>,
    } else {
    }
    return
  }
  func.func @transform_0(%arg0: i32, %arg1: i32) -> (i32, i32, i32) {
    %c0_i32 = arith.constant 0 : i32
    %c0_i32_0 = arith.constant 0 : i32
    %c0_i32_1 = arith.constant 0 : i32
    return %arg0, %c0_i32, %c0_i32_0 : i32, i32, i32
  }
  func.func @transform_1(%arg0: i32, %arg1: i32) -> (i32, i32, i32) {
    %c0_i32 = arith.constant 0 : i32
    %c0_i32_0 = arith.constant 0 : i32
    %c0_i32_1 = arith.constant 0 : i32
    return %arg1, %c0_i32, %c0_i32_0 : i32, i32, i32
  }
  func.func @transform_2(%arg0: i32, %arg1: i32) -> (i32, i32, i32) {
    %c0_i32 = arith.constant 0 : i32
    %c0_i32_0 = arith.constant 0 : i32
    %c0_i32_1 = arith.constant 0 : i32
    return %arg1, %c0_i32, %c0_i32_0 : i32, i32, i32
  }
  func.func @transform_3(%arg0: i32, %arg1: i32) -> (i32, i32, i32) {
    %c0_i32 = arith.constant 0 : i32
    %c0_i32_0 = arith.constant 0 : i32
    %c0_i32_1 = arith.constant 0 : i32
    return %arg1, %c0_i32, %c0_i32_0 : i32, i32, i32
  }
  func.func @transform_4(%arg0: i32, %arg1: i32) -> (i32, i32) {
    %c0_i32 = arith.constant 0 : i32
    %c0_i32_0 = arith.constant 0 : i32
    %c0_i32_1 = arith.constant 0 : i32
    return %c0_i32, %c0_i32_0 : i32, i32
  }
  func.func @transform_5(%arg0: i32, %arg1: i32) -> (i32, i32) {
    %c0_i32 = arith.constant 0 : i32
    %c0_i32_0 = arith.constant 0 : i32
    %c0_i32_1 = arith.constant 0 : i32
    return %c0_i32, %c0_i32_0 : i32, i32
  }
  func.func @transform_6(%arg0: i32, %arg1: i32) -> (i32, i32, i32) {
    %c0_i32 = arith.constant 0 : i32
    %c0_i32_0 = arith.constant 0 : i32
    %c0_i32_1 = arith.constant 0 : i32
    return %arg0, %c0_i32, %c0_i32_0 : i32, i32, i32
  }
}

module attributes {stable_mosaic.version = 11 : i64} {
  func.func @mlp_kernel(%arg0: i32, %arg1: i32, %arg2: memref<1x16x128xbf16, #tpu.memory_space<vmem>>, %arg3: memref<2x128xf32, #tpu.memory_space<vmem>>, %arg4: memref<128x512xbf16, #tpu.memory_space<vmem>>, %arg5: memref<1x512xf32, #tpu.memory_space<vmem>>, %arg6: memref<512x128xbf16, #tpu.memory_space<vmem>>, %arg7: memref<1x128xf32, #tpu.memory_space<vmem>>, %arg8: memref<1x16x128xbf16, #tpu.memory_space<vmem>>) attributes {dimension_semantics = [#tpu.dimension_semantics<parallel>, #tpu.dimension_semantics<parallel>], iteration_bounds = array<i64: 2, 1>, scalar_prefetch = 0 : i64, scratch_operands = 0 : i64, tpu.core_type = #tpu.core_type<tc>, window_params = [{transform_indices = @transform_0, window_bounds = array<i64: 1, 16, 128>}, {pipeline_mode = #tpu.pipeline_mode<synchronous>, transform_indices = @transform_1, window_bounds = array<i64: 2, 128>}, {pipeline_mode = #tpu.pipeline_mode<synchronous>, transform_indices = @transform_2, window_bounds = array<i64: 128, 512>}, {pipeline_mode = #tpu.pipeline_mode<synchronous>, transform_indices = @transform_3, window_bounds = array<i64: 1, 512>}, {pipeline_mode = #tpu.pipeline_mode<synchronous>, transform_indices = @transform_4, window_bounds = array<i64: 512, 128>}, {pipeline_mode = #tpu.pipeline_mode<synchronous>, transform_indices = @transform_5, window_bounds = array<i64: 1, 128>}, {transform_indices = @transform_6, window_bounds = array<i64: 1, 16, 128>}]} {
    %c0 = arith.constant 0 : index
    %c0_0 = arith.constant 0 : index
    %c0_1 = arith.constant 0 : index
    %0 = vector.load %arg2[%c0, %c0_0, %c0_1] : memref<1x16x128xbf16, #tpu.memory_space<vmem>>, vector<1x16x128xbf16>
    %1 = vector.shape_cast %0 : vector<1x16x128xbf16> to vector<16x128xbf16>
    %2 = arith.extf %1 : vector<16x128xbf16> to vector<16x128xf32>
    %cst = arith.constant dense<0.000000e+00> : vector<16xf32>
    %3 = vector.multi_reduction <add>, %2, %cst [1] : vector<16x128xf32> to vector<16xf32>
    %4 = vector.shape_cast %3 : vector<16xf32> to vector<16x1xf32>
    %cst_2 = arith.constant 1.280000e+02 : f32
    %5 = vector.broadcast %cst_2 : f32 to vector<16x1xf32>
    %6 = arith.divf %4, %5 : vector<16x1xf32>
    %7 = vector.broadcast %6 : vector<16x1xf32> to vector<16x128xf32>
    %8 = arith.subf %2, %7 : vector<16x128xf32>
    %9 = arith.mulf %8, %8 : vector<16x128xf32>
    %cst_3 = arith.constant dense<0.000000e+00> : vector<16xf32>
    %10 = vector.multi_reduction <add>, %9, %cst_3 [1] : vector<16x128xf32> to vector<16xf32>
    %11 = vector.shape_cast %10 : vector<16xf32> to vector<16x1xf32>
    %cst_4 = arith.constant 1.280000e+02 : f32
    %12 = vector.broadcast %cst_4 : f32 to vector<16x1xf32>
    %13 = arith.divf %11, %12 : vector<16x1xf32>
    %cst_5 = arith.constant 9.99999974E-6 : f32
    %14 = vector.broadcast %cst_5 : f32 to vector<16x1xf32>
    %15 = arith.addf %13, %14 : vector<16x1xf32>
    %16 = math.rsqrt %15 : vector<16x1xf32>
    %17 = vector.broadcast %16 : vector<16x1xf32> to vector<16x128xf32>
    %18 = arith.mulf %8, %17 : vector<16x128xf32>
    %c0_6 = arith.constant 0 : index
    %c0_7 = arith.constant 0 : index
    %19 = vector.load %arg3[%c0_6, %c0_7] : memref<2x128xf32, #tpu.memory_space<vmem>>, vector<1x128xf32>
    %20 = vector.broadcast %19 : vector<1x128xf32> to vector<16x128xf32>
    %21 = arith.mulf %18, %20 : vector<16x128xf32>
    %c1 = arith.constant 1 : index
    %c0_8 = arith.constant 0 : index
    %22 = vector.load %arg3[%c1, %c0_8] : memref<2x128xf32, #tpu.memory_space<vmem>>, vector<1x128xf32>
    %23 = vector.broadcast %22 : vector<1x128xf32> to vector<16x128xf32>
    %24 = arith.addf %21, %23 : vector<16x128xf32>
    %25 = arith.truncf %24 : vector<16x128xf32> to vector<16x128xbf16>
    %c0_9 = arith.constant 0 : index
    %c0_10 = arith.constant 0 : index
    %26 = vector.load %arg4[%c0_9, %c0_10] : memref<128x512xbf16, #tpu.memory_space<vmem>>, vector<128x512xbf16>
    %cst_11 = arith.constant dense<0.000000e+00> : vector<16x512xf32>
    %27 = tpu.matmul %25, %26, %cst_11 {dimension_numbers = #tpu.dot_dimension_numbers<[1], [0], [0], [1], [0, 0, 1, 1], [], []>} : vector<16x128xbf16>, vector<128x512xbf16>, vector<16x512xf32> -> vector<16x512xf32>
    %c0_12 = arith.constant 0 : index
    %c0_13 = arith.constant 0 : index
    %28 = vector.load %arg5[%c0_12, %c0_13] : memref<1x512xf32, #tpu.memory_space<vmem>>, vector<1x512xf32>
    %29 = vector.broadcast %28 : vector<1x512xf32> to vector<16x512xf32>
    %30 = arith.addf %27, %29 : vector<16x512xf32>
    %cst_14 = arith.constant 1.702000e+00 : f32
    %31 = vector.broadcast %cst_14 : f32 to vector<16x512xf32>
    %32 = arith.mulf %31, %30 : vector<16x512xf32>
    %33 = arith.truncf %32 : vector<16x512xf32> to vector<16x512xbf16>
    %34 = arith.negf %33 : vector<16x512xbf16>
    %35 = math.exp %34 : vector<16x512xbf16>
    %cst_15 = arith.constant 1.000000e+00 : bf16
    %36 = vector.broadcast %cst_15 : bf16 to vector<16x512xbf16>
    %37 = arith.addf %36, %35 : vector<16x512xbf16>
    %38 = arith.divf %36, %37 : vector<16x512xbf16>
    %39 = arith.extf %38 : vector<16x512xbf16> to vector<16x512xf32>
    %40 = arith.mulf %30, %39 : vector<16x512xf32>
    %41 = arith.truncf %40 : vector<16x512xf32> to vector<16x512xbf16>
    %c0_16 = arith.constant 0 : index
    %c0_17 = arith.constant 0 : index
    %42 = vector.load %arg6[%c0_16, %c0_17] : memref<512x128xbf16, #tpu.memory_space<vmem>>, vector<512x128xbf16>
    %cst_18 = arith.constant dense<0.000000e+00> : vector<16x128xf32>
    %43 = tpu.matmul %41, %42, %cst_18 {dimension_numbers = #tpu.dot_dimension_numbers<[1], [0], [0], [1], [0, 0, 1, 1], [], []>} : vector<16x512xbf16>, vector<512x128xbf16>, vector<16x128xf32> -> vector<16x128xf32>
    %c0_19 = arith.constant 0 : index
    %c0_20 = arith.constant 0 : index
    %44 = vector.load %arg7[%c0_19, %c0_20] : memref<1x128xf32, #tpu.memory_space<vmem>>, vector<1x128xf32>
    %45 = vector.broadcast %44 : vector<1x128xf32> to vector<16x128xf32>
    %46 = arith.addf %43, %45 : vector<16x128xf32>
    %47 = arith.addf %2, %46 : vector<16x128xf32>
    %48 = arith.truncf %47 : vector<16x128xf32> to vector<16x128xbf16>
    %c0_21 = arith.constant 0 : index
    %c0_22 = arith.constant 0 : index
    %c0_23 = arith.constant 0 : index
    %49 = vector.load %arg8[%c0_21, %c0_22, %c0_23] : memref<1x16x128xbf16, #tpu.memory_space<vmem>>, vector<1x16x128xbf16>
    %50 = vector.shape_cast %49 : vector<1x16x128xbf16> to vector<16x128xbf16>
    %51 = vector.shape_cast %48 : vector<16x128xbf16> to vector<1x16x128xbf16>
    tpu.vector_store %arg8[%c0_21, %c0_22, %c0_23], %51 {strides = array<i32>} : memref<1x16x128xbf16, #tpu.memory_space<vmem>>, vector<1x16x128xbf16>,
    return
  }
  func.func @transform_0(%arg0: i32, %arg1: i32) -> (i32, i32, i32) {
    %c0_i32 = arith.constant 0 : i32
    %c0_i32_0 = arith.constant 0 : i32
    return %arg0, %arg1, %c0_i32 : i32, i32, i32
  }
  func.func @transform_1(%arg0: i32, %arg1: i32) -> (i32, i32) {
    %c0_i32 = arith.constant 0 : i32
    %c0_i32_0 = arith.constant 0 : i32
    %c0_i32_1 = arith.constant 0 : i32
    return %c0_i32, %c0_i32_0 : i32, i32
  }
  func.func @transform_2(%arg0: i32, %arg1: i32) -> (i32, i32) {
    %c0_i32 = arith.constant 0 : i32
    %c0_i32_0 = arith.constant 0 : i32
    %c0_i32_1 = arith.constant 0 : i32
    return %c0_i32, %c0_i32_0 : i32, i32
  }
  func.func @transform_3(%arg0: i32, %arg1: i32) -> (i32, i32) {
    %c0_i32 = arith.constant 0 : i32
    %c0_i32_0 = arith.constant 0 : i32
    %c0_i32_1 = arith.constant 0 : i32
    return %c0_i32, %c0_i32_0 : i32, i32
  }
  func.func @transform_4(%arg0: i32, %arg1: i32) -> (i32, i32) {
    %c0_i32 = arith.constant 0 : i32
    %c0_i32_0 = arith.constant 0 : i32
    %c0_i32_1 = arith.constant 0 : i32
    return %c0_i32, %c0_i32_0 : i32, i32
  }
  func.func @transform_5(%arg0: i32, %arg1: i32) -> (i32, i32) {
    %c0_i32 = arith.constant 0 : i32
    %c0_i32_0 = arith.constant 0 : i32
    %c0_i32_1 = arith.constant 0 : i32
    return %c0_i32, %c0_i32_0 : i32, i32
  }
  func.func @transform_6(%arg0: i32, %arg1: i32) -> (i32, i32, i32) {
    %c0_i32 = arith.constant 0 : i32
    %c0_i32_0 = arith.constant 0 : i32
    return %arg0, %arg1, %c0_i32 : i32, i32, i32
  }
}

module attributes {stable_mosaic.version = 11 : i64} {
  func.func @attn_kernel(%arg0: i32, %arg1: i32, %arg2: memref<1x16x128xbf16, #tpu.memory_space<vmem>>, %arg3: memref<1x128x96xbf16, #tpu.memory_space<vmem>>, %arg4: memref<1x1x96xf32, #tpu.memory_space<vmem>>, %arg5: memref<1x32x128xbf16, #tpu.memory_space<vmem>>, %arg6: memref<1x128xf32, #tpu.memory_space<vmem>>, %arg7: memref<2x128xf32, #tpu.memory_space<vmem>>, %arg8: memref<1x16x128xbf16, #tpu.memory_space<vmem>>, %arg9: memref<16x128xbf16, #tpu.memory_space<vmem>>, %arg10: memref<16x128xf32, #tpu.memory_space<vmem>>) attributes {dimension_semantics = [#tpu.dimension_semantics<parallel>, #tpu.dimension_semantics<arbitrary>], iteration_bounds = array<i64: 2, 4>, scalar_prefetch = 0 : i64, scratch_operands = 2 : i64, tpu.core_type = #tpu.core_type<tc>, window_params = [{transform_indices = @transform_0, window_bounds = array<i64: 1, 16, 128>}, {transform_indices = @transform_1, window_bounds = array<i64: 1, 128, 96>}, {transform_indices = @transform_2, window_bounds = array<i64: 1, 1, 96>}, {transform_indices = @transform_3, window_bounds = array<i64: 1, 32, 128>}, {pipeline_mode = #tpu.pipeline_mode<synchronous>, transform_indices = @transform_4, window_bounds = array<i64: 1, 128>}, {pipeline_mode = #tpu.pipeline_mode<synchronous>, transform_indices = @transform_5, window_bounds = array<i64: 2, 128>}, {transform_indices = @transform_6, window_bounds = array<i64: 1, 16, 128>}]} {
    %c0_i32 = arith.constant 0 : i32
    %0 = arith.cmpi eq, %arg1, %c0_i32 : i32
    %1 = arith.extui %0 : i1 to i32
    %c0_i32_0 = arith.constant 0 : i32
    %2 = arith.cmpi ne, %1, %c0_i32_0 : i32
    scf.if %2 {
      %c0_22 = arith.constant 0 : index
      %c0_23 = arith.constant 0 : index
      %c0_24 = arith.constant 0 : index
      %42 = vector.load %arg2[%c0_22, %c0_23, %c0_24] : memref<1x16x128xbf16, #tpu.memory_space<vmem>>, vector<1x16x128xbf16>
      %43 = vector.shape_cast %42 : vector<1x16x128xbf16> to vector<16x128xbf16>
      %44 = arith.extf %43 : vector<16x128xbf16> to vector<16x128xf32>
      %cst_25 = arith.constant dense<0.000000e+00> : vector<16xf32>
      %45 = vector.multi_reduction <add>, %44, %cst_25 [1] : vector<16x128xf32> to vector<16xf32>
      %46 = vector.shape_cast %45 : vector<16xf32> to vector<16x1xf32>
      %cst_26 = arith.constant 1.280000e+02 : f32
      %47 = vector.broadcast %cst_26 : f32 to vector<16x1xf32>
      %48 = arith.divf %46, %47 : vector<16x1xf32>
      %49 = vector.broadcast %48 : vector<16x1xf32> to vector<16x128xf32>
      %50 = arith.subf %44, %49 : vector<16x128xf32>
      %51 = arith.mulf %50, %50 : vector<16x128xf32>
      %cst_27 = arith.constant dense<0.000000e+00> : vector<16xf32>
      %52 = vector.multi_reduction <add>, %51, %cst_27 [1] : vector<16x128xf32> to vector<16xf32>
      %53 = vector.shape_cast %52 : vector<16xf32> to vector<16x1xf32>
      %cst_28 = arith.constant 1.280000e+02 : f32
      %54 = vector.broadcast %cst_28 : f32 to vector<16x1xf32>
      %55 = arith.divf %53, %54 : vector<16x1xf32>
      %cst_29 = arith.constant 9.99999974E-6 : f32
      %56 = vector.broadcast %cst_29 : f32 to vector<16x1xf32>
      %57 = arith.addf %55, %56 : vector<16x1xf32>
      %58 = math.rsqrt %57 : vector<16x1xf32>
      %59 = vector.broadcast %58 : vector<16x1xf32> to vector<16x128xf32>
      %60 = arith.mulf %50, %59 : vector<16x128xf32>
      %c0_30 = arith.constant 0 : index
      %c0_31 = arith.constant 0 : index
      %61 = vector.load %arg7[%c0_30, %c0_31] : memref<2x128xf32, #tpu.memory_space<vmem>>, vector<1x128xf32>
      %62 = vector.broadcast %61 : vector<1x128xf32> to vector<16x128xf32>
      %63 = arith.mulf %60, %62 : vector<16x128xf32>
      %c1 = arith.constant 1 : index
      %c0_32 = arith.constant 0 : index
      %64 = vector.load %arg7[%c1, %c0_32] : memref<2x128xf32, #tpu.memory_space<vmem>>, vector<1x128xf32>
      %65 = vector.broadcast %64 : vector<1x128xf32> to vector<16x128xf32>
      %66 = arith.addf %63, %65 : vector<16x128xf32>
      %67 = arith.truncf %66 : vector<16x128xf32> to vector<16x128xbf16>
      %c0_33 = arith.constant 0 : index
      %c0_34 = arith.constant 0 : index
      %68 = vector.load %arg9[%c0_33, %c0_34] : memref<16x128xbf16, #tpu.memory_space<vmem>>, vector<16x128xbf16>
      tpu.vector_store %arg9[%c0_33, %c0_34], %67 {strides = array<i32>} : memref<16x128xbf16, #tpu.memory_space<vmem>>, vector<16x128xbf16>,
      %cst_35 = arith.constant 0.000000e+00 : f32
      %69 = vector.broadcast %cst_35 : f32 to vector<16x128xf32>
      %c0_36 = arith.constant 0 : index
      %c0_37 = arith.constant 0 : index
      %70 = vector.load %arg10[%c0_36, %c0_37] : memref<16x128xf32, #tpu.memory_space<vmem>>, vector<16x128xf32>
      tpu.vector_store %arg10[%c0_36, %c0_37], %69 {strides = array<i32>} : memref<16x128xf32, #tpu.memory_space<vmem>>, vector<16x128xf32>,
    } else {
    }
    %c0 = arith.constant 0 : index
    %c0_1 = arith.constant 0 : index
    %3 = vector.load %arg9[%c0, %c0_1] : memref<16x128xbf16, #tpu.memory_space<vmem>>, vector<16x128xbf16>
    %c0_2 = arith.constant 0 : index
    %c0_3 = arith.constant 0 : index
    %c0_4 = arith.constant 0 : index
    %4 = vector.load %arg3[%c0_2, %c0_3, %c0_4] : memref<1x128x96xbf16, #tpu.memory_space<vmem>>, vector<1x128x96xbf16>
    %5 = vector.shape_cast %4 : vector<1x128x96xbf16> to vector<128x96xbf16>
    %cst = arith.constant dense<0.000000e+00> : vector<16x96xf32>
    %6 = tpu.matmul %3, %5, %cst {dimension_numbers = #tpu.dot_dimension_numbers<[1], [0], [0], [1], [0, 0, 1, 1], [], []>} : vector<16x128xbf16>, vector<128x96xbf16>, vector<16x96xf32> -> vector<16x96xf32>
    %c0_5 = arith.constant 0 : index
    %c0_6 = arith.constant 0 : index
    %c0_7 = arith.constant 0 : index
    %7 = vector.load %arg4[%c0_5, %c0_6, %c0_7] : memref<1x1x96xf32, #tpu.memory_space<vmem>>, vector<1x1x96xf32>
    %8 = vector.shape_cast %7 : vector<1x1x96xf32> to vector<1x96xf32>
    %9 = vector.broadcast %8 : vector<1x96xf32> to vector<16x96xf32>
    %10 = arith.addf %6, %9 : vector<16x96xf32>
    %11 = vector.extract_strided_slice %10 {offsets = [0, 0], sizes = [16, 32], strides = [1, 1]} : vector<16x96xf32> to vector<16x32xf32>
    %cst_8 = arith.constant 0.176776692 : f32
    %12 = vector.broadcast %cst_8 : f32 to vector<16x32xf32>
    %13 = arith.mulf %11, %12 : vector<16x32xf32>
    %14 = arith.truncf %13 : vector<16x32xf32> to vector<16x32xbf16>
    %15 = vector.extract_strided_slice %10 {offsets = [0, 32], sizes = [16, 32], strides = [1, 1]} : vector<16x96xf32> to vector<16x32xf32>
    %16 = arith.truncf %15 : vector<16x32xf32> to vector<16x32xbf16>
    %17 = vector.extract_strided_slice %10 {offsets = [0, 64], sizes = [16, 32], strides = [1, 1]} : vector<16x96xf32> to vector<16x32xf32>
    %18 = arith.truncf %17 : vector<16x32xf32> to vector<16x32xbf16>
    %cst_9 = arith.constant dense<0.000000e+00> : vector<16x16xf32>
    %19 = tpu.matmul %14, %16, %cst_9 {dimension_numbers = #tpu.dot_dimension_numbers<[1], [1], [0], [0], [0, 0, 1, 0], [], []>} : vector<16x32xbf16>, vector<16x32xbf16>, vector<16x16xf32> -> vector<16x16xf32>
    %cst_10 = arith.constant dense<0xFF800000> : vector<16xf32>
    %20 = vector.multi_reduction <maximumf>, %19, %cst_10 [1] : vector<16x16xf32> to vector<16xf32>
    %21 = vector.shape_cast %20 : vector<16xf32> to vector<16x1xf32>
    %22 = vector.broadcast %21 : vector<16x1xf32> to vector<16x16xf32>
    %23 = arith.subf %19, %22 : vector<16x16xf32>
    %24 = math.exp %23 : vector<16x16xf32>
    %cst_11 = arith.constant dense<0.000000e+00> : vector<16xf32>
    %25 = vector.multi_reduction <add>, %24, %cst_11 [1] : vector<16x16xf32> to vector<16xf32>
    %26 = vector.shape_cast %25 : vector<16xf32> to vector<16x1xf32>
    %27 = tpu.reciprocal %26 {approx = true} : vector<16x1xf32> -> vector<16x1xf32>
    %28 = vector.broadcast %27 : vector<16x1xf32> to vector<16x16xf32>
    %29 = arith.mulf %24, %28 : vector<16x16xf32>
    %30 = arith.truncf %29 : vector<16x16xf32> to vector<16x16xbf16>
    %cst_12 = arith.constant dense<0.000000e+00> : vector<16x32xf32>
    %31 = tpu.matmul %30, %18, %cst_12 {dimension_numbers = #tpu.dot_dimension_numbers<[1], [0], [0], [1], [0, 0, 1, 1], [], []>} : vector<16x16xbf16>, vector<16x32xbf16>, vector<16x32xf32> -> vector<16x32xf32>
    %c0_13 = arith.constant 0 : index
    %c0_14 = arith.constant 0 : index
    %32 = vector.load %arg10[%c0_13, %c0_14] : memref<16x128xf32, #tpu.memory_space<vmem>>, vector<16x128xf32>
    %33 = arith.truncf %31 : vector<16x32xf32> to vector<16x32xbf16>
    %c0_15 = arith.constant 0 : index
    %c0_16 = arith.constant 0 : index
    %c0_17 = arith.constant 0 : index
    %34 = vector.load %arg5[%c0_15, %c0_16, %c0_17] : memref<1x32x128xbf16, #tpu.memory_space<vmem>>, vector<1x32x128xbf16>
    %35 = vector.shape_cast %34 : vector<1x32x128xbf16> to vector<32x128xbf16>
    %cst_18 = arith.constant dense<0.000000e+00> : vector<16x128xf32>
    %36 = tpu.matmul %33, %35, %cst_18 {dimension_numbers = #tpu.dot_dimension_numbers<[1], [0], [0], [1], [0, 0, 1, 1], [], []>} : vector<16x32xbf16>, vector<32x128xbf16>, vector<16x128xf32> -> vector<16x128xf32>
    %37 = arith.addf %32, %36 : vector<16x128xf32>
    %c0_19 = arith.constant 0 : index
    %c0_20 = arith.constant 0 : index
    %38 = vector.load %arg10[%c0_19, %c0_20] : memref<16x128xf32, #tpu.memory_space<vmem>>, vector<16x128xf32>
    tpu.vector_store %arg10[%c0_19, %c0_20], %37 {strides = array<i32>} : memref<16x128xf32, #tpu.memory_space<vmem>>, vector<16x128xf32>,
    %c3_i32 = arith.constant 3 : i32
    %39 = arith.cmpi eq, %arg1, %c3_i32 : i32
    %40 = arith.extui %39 : i1 to i32
    %c0_i32_21 = arith.constant 0 : i32
    %41 = arith.cmpi ne, %40, %c0_i32_21 : i32
    scf.if %41 {
      %c0_22 = arith.constant 0 : index
      %c0_23 = arith.constant 0 : index
      %c0_24 = arith.constant 0 : index
      %42 = vector.load %arg2[%c0_22, %c0_23, %c0_24] : memref<1x16x128xbf16, #tpu.memory_space<vmem>>, vector<1x16x128xbf16>
      %43 = vector.shape_cast %42 : vector<1x16x128xbf16> to vector<16x128xbf16>
      %44 = arith.extf %43 : vector<16x128xbf16> to vector<16x128xf32>
      %c0_25 = arith.constant 0 : index
      %c0_26 = arith.constant 0 : index
      %45 = vector.load %arg10[%c0_25, %c0_26] : memref<16x128xf32, #tpu.memory_space<vmem>>, vector<16x128xf32>
      %46 = arith.addf %44, %45 : vector<16x128xf32>
      %c0_27 = arith.constant 0 : index
      %c0_28 = arith.constant 0 : index
      %47 = vector.load %arg6[%c0_27, %c0_28] : memref<1x128xf32, #tpu.memory_space<vmem>>, vector<1x128xf32>
      %48 = vector.broadcast %47 : vector<1x128xf32> to vector<16x128xf32>
      %49 = arith.addf %46, %48 : vector<16x128xf32>
      %50 = arith.truncf %49 : vector<16x128xf32> to vector<16x128xbf16>
      %c0_29 = arith.constant 0 : index
      %c0_30 = arith.constant 0 : index
      %c0_31 = arith.constant 0 : index
      %51 = vector.load %arg8[%c0_29, %c0_30, %c0_31] : memref<1x16x128xbf16, #tpu.memory_space<vmem>>, vector<1x16x128xbf16>
      %52 = vector.shape_cast %51 : vector<1x16x128xbf16> to vector<16x128xbf16>
      %53 = vector.shape_cast %50 : vector<16x128xbf16> to vector<1x16x128xbf16>
      tpu.vector_store %arg8[%c0_29, %c0_30, %c0_31], %53 {strides = array<i32>} : memref<1x16x128xbf16, #tpu.memory_space<vmem>>, vector<1x16x128xbf16>,
    } else {
    }
    return
  }
  func.func @transform_0(%arg0: i32, %arg1: i32) -> (i32, i32, i32) {
    %c0_i32 = arith.constant 0 : i32
    %c0_i32_0 = arith.constant 0 : i32
    %c0_i32_1 = arith.constant 0 : i32
    return %arg0, %c0_i32, %c0_i32_0 : i32, i32, i32
  }
  func.func @transform_1(%arg0: i32, %arg1: i32) -> (i32, i32, i32) {
    %c0_i32 = arith.constant 0 : i32
    %c0_i32_0 = arith.constant 0 : i32
    %c0_i32_1 = arith.constant 0 : i32
    return %arg1, %c0_i32, %c0_i32_0 : i32, i32, i32
  }
  func.func @transform_2(%arg0: i32, %arg1: i32) -> (i32, i32, i32) {
    %c0_i32 = arith.constant 0 : i32
    %c0_i32_0 = arith.constant 0 : i32
    %c0_i32_1 = arith.constant 0 : i32
    return %arg1, %c0_i32, %c0_i32_0 : i32, i32, i32
  }
  func.func @transform_3(%arg0: i32, %arg1: i32) -> (i32, i32, i32) {
    %c0_i32 = arith.constant 0 : i32
    %c0_i32_0 = arith.constant 0 : i32
    %c0_i32_1 = arith.constant 0 : i32
    return %arg1, %c0_i32, %c0_i32_0 : i32, i32, i32
  }
  func.func @transform_4(%arg0: i32, %arg1: i32) -> (i32, i32) {
    %c0_i32 = arith.constant 0 : i32
    %c0_i32_0 = arith.constant 0 : i32
    %c0_i32_1 = arith.constant 0 : i32
    return %c0_i32, %c0_i32_0 : i32, i32
  }
  func.func @transform_5(%arg0: i32, %arg1: i32) -> (i32, i32) {
    %c0_i32 = arith.constant 0 : i32
    %c0_i32_0 = arith.constant 0 : i32
    %c0_i32_1 = arith.constant 0 : i32
    return %c0_i32, %c0_i32_0 : i32, i32
  }
  func.func @transform_6(%arg0: i32, %arg1: i32) -> (i32, i32, i32) {
    %c0_i32 = arith.constant 0 : i32
    %c0_i32_0 = arith.constant 0 : i32
    %c0_i32_1 = arith.constant 0 : i32
    return %arg0, %c0_i32, %c0_i32_0 : i32, i32, i32
  }
}

module attributes {stable_mosaic.version = 11 : i64} {
  func.func @proj_kernel(%arg0: i32, %arg1: memref<1x128x16xbf16, #tpu.memory_space<vmem>>, %arg2: memref<8x128xbf16, #tpu.memory_space<vmem>>, %arg3: memref<8x1xf32, #tpu.memory_space<vmem>>, %arg4: memref<1x8x16xf32, #tpu.memory_space<vmem>>) attributes {dimension_semantics = [#tpu.dimension_semantics<parallel>], iteration_bounds = array<i64: 2>, scalar_prefetch = 0 : i64, scratch_operands = 0 : i64, tpu.core_type = #tpu.core_type<tc>, window_params = [{transform_indices = @transform_0, window_bounds = array<i64: 1, 128, 16>}, {pipeline_mode = #tpu.pipeline_mode<synchronous>, transform_indices = @transform_1, window_bounds = array<i64: 8, 128>}, {pipeline_mode = #tpu.pipeline_mode<synchronous>, transform_indices = @transform_2, window_bounds = array<i64: 8, 1>}, {transform_indices = @transform_3, window_bounds = array<i64: 1, 8, 16>}]} {
    %c0 = arith.constant 0 : index
    %c0_0 = arith.constant 0 : index
    %c0_1 = arith.constant 0 : index
    %0 = vector.load %arg1[%c0, %c0_0, %c0_1] : memref<1x128x16xbf16, #tpu.memory_space<vmem>>, vector<1x128x16xbf16>
    %1 = vector.shape_cast %0 : vector<1x128x16xbf16> to vector<128x16xbf16>
    %c0_2 = arith.constant 0 : index
    %c0_3 = arith.constant 0 : index
    %2 = vector.load %arg2[%c0_2, %c0_3] : memref<8x128xbf16, #tpu.memory_space<vmem>>, vector<8x128xbf16>
    %cst = arith.constant dense<0.000000e+00> : vector<8x16xf32>
    %3 = tpu.matmul %2, %1, %cst {dimension_numbers = #tpu.dot_dimension_numbers<[1], [0], [0], [1], [0, 0, 1, 1], [], []>} : vector<8x128xbf16>, vector<128x16xbf16>, vector<8x16xf32> -> vector<8x16xf32>
    %c0_4 = arith.constant 0 : index
    %c0_5 = arith.constant 0 : index
    %4 = vector.load %arg3[%c0_4, %c0_5] : memref<8x1xf32, #tpu.memory_space<vmem>>, vector<8x1xf32>
    %5 = vector.broadcast %4 : vector<8x1xf32> to vector<8x16xf32>
    %6 = arith.addf %3, %5 : vector<8x16xf32>
    %c0_6 = arith.constant 0 : index
    %c0_7 = arith.constant 0 : index
    %c0_8 = arith.constant 0 : index
    %7 = vector.load %arg4[%c0_6, %c0_7, %c0_8] : memref<1x8x16xf32, #tpu.memory_space<vmem>>, vector<1x8x16xf32>
    %8 = vector.shape_cast %7 : vector<1x8x16xf32> to vector<8x16xf32>
    %9 = vector.shape_cast %6 : vector<8x16xf32> to vector<1x8x16xf32>
    tpu.vector_store %arg4[%c0_6, %c0_7, %c0_8], %9 {strides = array<i32>} : memref<1x8x16xf32, #tpu.memory_space<vmem>>, vector<1x8x16xf32>,
    return
  }
  func.func @transform_0(%arg0: i32) -> (i32, i32, i32) {
    %c0_i32 = arith.constant 0 : i32
    %c0_i32_0 = arith.constant 0 : i32
    %c0_i32_1 = arith.constant 0 : i32
    return %arg0, %c0_i32, %c0_i32_0 : i32, i32, i32
  }
  func.func @transform_1(%arg0: i32) -> (i32, i32) {
    %c0_i32 = arith.constant 0 : i32
    %c0_i32_0 = arith.constant 0 : i32
    %c0_i32_1 = arith.constant 0 : i32
    return %c0_i32, %c0_i32_0 : i32, i32
  }
  func.func @transform_2(%arg0: i32) -> (i32, i32) {
    %c0_i32 = arith.constant 0 : i32
    %c0_i32_0 = arith.constant 0 : i32
    %c0_i32_1 = arith.constant 0 : i32
    return %c0_i32, %c0_i32_0 : i32, i32
  }
  func.func @transform_3(%arg0: i32) -> (i32, i32, i32) {
    %c0_i32 = arith.constant 0 : i32
    %c0_i32_0 = arith.constant 0 : i32
    %c0_i32_1 = arith.constant 0 : i32
    return %arg0, %c0_i32, %c0_i32_0 : i32, i32, i32
  }
}

</mosaic_0001>

<llo_original>
// kernel: feature_decoder_forward.7
$region0: #{feature_decoder_forward.7}
  #allocation0 [shape = 'u32[]', space=smem, size = 0x4, offset = 0x4, fixed_abs, tag = 'smem constant byte address 0x4 - core index']
  #allocation1 [shape = 'u32[72,128]{1,0:T(1,128)}', space=vmem, size = 0x9000, scoped, tag = 'internal scratch']
  #allocation2 [shape = 'bf16[16,128]{1,0:T(8,128)(2,1)}', space=vmem, size = 0x1000, scoped, tag = 'scratch operand']
  #allocation3 [shape = 'f32[16,128]{1,0:T(8,128)}', space=vmem, size = 0x2000, scoped, tag = 'scratch operand']
  %s0 = inlined_call_operand.vmem [shape: bf16[2,16,128], index: 0, kind: input, shape index: {}]
  %s1 = inlined_call_operand.vmem [shape: bf16[4,128,96], index: 1, kind: input, shape index: {}]
  %s2 = inlined_call_operand.vmem [shape: f32[4,1,96], index: 2, kind: input, shape index: {}]
  %s3 = inlined_call_operand.hbm [shape: bf16[4,32,128], index: 3, kind: input, shape index: {}]
  %s4 = inlined_call_operand.vmem [shape: f32[1,128], index: 4, kind: input, shape index: {}]
  %s5 = inlined_call_operand.vmem [shape: f32[2,128], index: 5, kind: input, shape index: {}]
  %s6 = inlined_call_operand.vmem [shape: bf16[2,16,128], index: 6, kind: output, shape index: {}]
  %s7 = sld [smem:[#allocation0]]
  $region69: #{feature_decoder_forward.7} parent=0
    _
  %s9 = ssub.s32 1, %s7
  %s10 = scalar_select 0, %s9, %s7
  $region1: #{feature_decoder_forward.7} parent=0
    #allocation4 [shape = 'u8[16384]{0}', space=vmem, size = 0x4000, scoped, tag = 'input window, operand 3']
    #allocation5 [shape = 's32[2]{0}', space=sflag, size = 0x8, scoped, tag = 'scoped memory for feature_decoder_forward.7']
    %11 = vsyncpa [#allocation5], 0
    %s12 = scalar_lea.sflag [#allocation5], 1
    %13 = vsyncpa %s12, 0
    loop: start=0, step=1, limit=10
    $region2: #{feature_decoder_forward.7} parent=1 // loop_pre_header
      _
    $region3: #{feature_decoder_forward.7} parent=1 // loop_header
      %s15 = sphi 0, %s19
      %p16 = scmp.ge.s32.totalorder %s15, 10
      %s22 = sphi 0, %s34
      %s23 = sphi 0, %s30
      %s24 = sphi 0, %s22
      %s25 = sphi 0, %s23
      %s26 = sphi 0, %s24
      %s27 = sphi 0, %s25
      %s37 = sphi 0, %s39
      %s40 = sphi 0, %s37
      %s41 = sphi 0, %s40
      %s57 = sphi 0, %s41
      %s63 = sphi 0, %s65
      %s66 = sphi 0, %s63
      %s67 = sphi 0, %s66
      %s83 = sphi 0, %s67
      %s89 = sphi 0, %s91
      %s92 = sphi 0, %s89
      %s93 = sphi 0, %s92
      %s109 = sphi 0, %s93
      %s115 = sphi 0, %s117
      %s118 = sphi 0, %s115
      %s119 = sphi 0, %s118
      %s135 = sphi 0, %s119
      %s139 = sphi 0, %s139
      %s141 = sphi 0, %s139
      %s142 = sphi 0, %s141
      %s156 = sphi 0, %s142
      %s160 = sphi 0, %s160
      %s162 = sphi 0, %s160
      %s163 = sphi 0, %s162
      %s177 = sphi 0, %s163
      %s183 = sphi 0, %s185
      %s186 = sphi 0, %s183
      %s187 = sphi 0, %s186
      %s203 = sphi 0, %s187
    $region4: #{feature_decoder_forward.7} parent=1 // loop_header_branch
      %18 = sbr.rel (%p16) target = $region8
    $region5: #{feature_decoder_forward.7} parent=1 // loop_body
      %s20 = ssub.s32 %s15, 1
      %s21 = ssub.s32 %s15, 2
      %s28 = sadd.s32 1, %s23
      %p29 = scmp.ge.s32.totalorder %s28, 4
      %s30 = scalar_select %p29, 0, %s28
      %s31 = sadd.s32 1, %s22
      %s32 = scalar_select %p29, %s31, %s22
      %p33 = scmp.ge.s32.totalorder %s32, 2
      %s34 = scalar_select %p33, 0, %s32
      %s35 = ssub.s32 %s22, %s34
      %p36 = scmp.eq.s32.totalorder %s35, 0
      %s38 = sadd.s32 %s37, 1
      %s39 = scalar_select %p36, %s37, %s38
      %p42 = pneg %p36
      %p43 = scmp.eq.s32.totalorder %s15, 7
      %p44 = por %p42, %p43
      %p45 = scmp.ne.s32.totalorder %s37, %s40
      %p46 = scmp.eq.s32.totalorder %s15, 0
      %p47 = por %p45, %p46
      %p48 = scmp.ne.s32.totalorder %s37, %s40
      %p49 = scmp.eq.s32.totalorder %s20, 7
      %p50 = por %p48, %p49
      %p51 = scmp.ne.s32.totalorder %s40, %s41
      %p52 = scmp.eq.s32.totalorder %s20, 0
      %p53 = por %p51, %p52
      %p54 = scmp.ne.s32.totalorder %s40, %s41
      %p55 = scmp.eq.s32.totalorder %s21, 7
      %p56 = por %p54, %p55
      %p58 = scmp.ne.s32.totalorder %s41, %s57
      %p59 = scmp.eq.s32.totalorder %s21, 0
      %p60 = por %p58, %p59
      %s61 = ssub.s32 %s23, %s30
      %p62 = scmp.eq.s32.totalorder %s61, 0
      %s64 = sadd.s32 %s63, 1
      %s65 = scalar_select %p62, %s63, %s64
      %p68 = pneg %p62
      %p69 = scmp.eq.s32.totalorder %s15, 7
      %p70 = por %p68, %p69
      %p71 = scmp.ne.s32.totalorder %s63, %s66
      %p72 = scmp.eq.s32.totalorder %s15, 0
      %p73 = por %p71, %p72
      %p74 = scmp.ne.s32.totalorder %s63, %s66
      %p75 = scmp.eq.s32.totalorder %s20, 7
      %p76 = por %p74, %p75
      %p77 = scmp.ne.s32.totalorder %s66, %s67
      %p78 = scmp.eq.s32.totalorder %s20, 0
      %p79 = por %p77, %p78
      %p80 = scmp.ne.s32.totalorder %s66, %s67
      %p81 = scmp.eq.s32.totalorder %s21, 7
      %p82 = por %p80, %p81
      %p84 = scmp.ne.s32.totalorder %s67, %s83
      %p85 = scmp.eq.s32.totalorder %s21, 0
      %p86 = por %p84, %p85
      %s87 = ssub.s32 %s23, %s30
      %p88 = scmp.eq.s32.totalorder %s87, 0
      %s90 = sadd.s32 %s89, 1
      %s91 = scalar_select %p88, %s89, %s90
      %p94 = pneg %p88
      %p95 = scmp.eq.s32.totalorder %s15, 7
      %p96 = por %p94, %p95
      %p97 = scmp.ne.s32.totalorder %s89, %s92
      %p98 = scmp.eq.s32.totalorder %s15, 0
      %p99 = por %p97, %p98
      %p100 = scmp.ne.s32.totalorder %s89, %s92
      %p101 = scmp.eq.s32.totalorder %s20, 7
      %p102 = por %p100, %p101
      %p103 = scmp.ne.s32.totalorder %s92, %s93
      %p104 = scmp.eq.s32.totalorder %s20, 0
      %p105 = por %p103, %p104
      %p106 = scmp.ne.s32.totalorder %s92, %s93
      %p107 = scmp.eq.s32.totalorder %s21, 7
      %p108 = por %p106, %p107
      %p110 = scmp.ne.s32.totalorder %s93, %s109
      %p111 = scmp.eq.s32.totalorder %s21, 0
      %p112 = por %p110, %p111
      %s113 = ssub.s32 %s23, %s30
      %p114 = scmp.eq.s32.totalorder %s113, 0
      %s116 = sadd.s32 %s115, 1
      %s117 = scalar_select %p114, %s115, %s116
      %p120 = pneg %p114
      %p121 = scmp.eq.s32.totalorder %s15, 7
      %p122 = por %p120, %p121
      %p123 = scmp.ne.s32.totalorder %s115, %s118
      %p124 = scmp.eq.s32.totalorder %s15, 0
      %p125 = por %p123, %p124
      %p126 = scmp.ne.s32.totalorder %s115, %s118
      %p127 = scmp.eq.s32.totalorder %s20, 7
      %p128 = por %p126, %p127
      %p129 = scmp.ne.s32.totalorder %s118, %s119
      %p130 = scmp.eq.s32.totalorder %s20, 0
      %p131 = por %p129, %p130
      %p132 = scmp.ne.s32.totalorder %s118, %s119
      %p133 = scmp.eq.s32.totalorder %s21, 7
      %p134 = por %p132, %p133
      %p136 = scmp.ne.s32.totalorder %s119, %s135
      %p137 = scmp.eq.s32.totalorder %s21, 0
      %p138 = por %p136, %p137
      %s140 = sadd.s32 %s139, 1
      %p143 = scmp.eq.s32.totalorder %s15, 7
      %p144 = scmp.ne.s32.totalorder %s139, %s141
      %p145 = scmp.eq.s32.totalorder %s15, 0
      %p146 = por %p144, %p145
      %p147 = scmp.ne.s32.totalorder %s139, %s141
      %p148 = scmp.eq.s32.totalorder %s20, 7
      %p149 = por %p147, %p148
      %p150 = scmp.ne.s32.totalorder %s141, %s142
      %p151 = scmp.eq.s32.totalorder %s20, 0
      %p152 = por %p150, %p151
      %p153 = scmp.ne.s32.totalorder %s141, %s142
      %p154 = scmp.eq.s32.totalorder %s21, 7
      %p155 = por %p153, %p154
      %p157 = scmp.ne.s32.totalorder %s142, %s156
      %p158 = scmp.eq.s32.totalorder %s21, 0
      %p159 = por %p157, %p158
      %s161 = sadd.s32 %s160, 1
      %p164 = scmp.eq.s32.totalorder %s15, 7
      %p165 = scmp.ne.s32.totalorder %s160, %s162
      %p166 = scmp.eq.s32.totalorder %s15, 0
      %p167 = por %p165, %p166
      %p168 = scmp.ne.s32.totalorder %s160, %s162
      %p169 = scmp.eq.s32.totalorder %s20, 7
      %p170 = por %p168, %p169
      %p171 = scmp.ne.s32.totalorder %s162, %s163
      %p172 = scmp.eq.s32.totalorder %s20, 0
      %p173 = por %p171, %p172
      %p174 = scmp.ne.s32.totalorder %s162, %s163
      %p175 = scmp.eq.s32.totalorder %s21, 7
      %p176 = por %p174, %p175
      %p178 = scmp.ne.s32.totalorder %s163, %s177
      %p179 = scmp.eq.s32.totalorder %s21, 0
      %p180 = por %p178, %p179
      %s181 = ssub.s32 %s22, %s34
      %p182 = scmp.eq.s32.totalorder %s181, 0
      %s184 = sadd.s32 %s183, 1
      %s185 = scalar_select %p182, %s183, %s184
      %p188 = pneg %p182
      %p189 = scmp.eq.s32.totalorder %s15, 7
      %p190 = por %p188, %p189
      %p191 = scmp.ne.s32.totalorder %s183, %s186
      %p192 = scmp.eq.s32.totalorder %s15, 0
      %p193 = por %p191, %p192
      %p194 = scmp.ne.s32.totalorder %s183, %s186
      %p195 = scmp.eq.s32.totalorder %s20, 7
      %p196 = por %p194, %p195
      %p197 = scmp.ne.s32.totalorder %s186, %s187
      %p198 = scmp.eq.s32.totalorder %s20, 0
      %p199 = por %p197, %p198
      %p200 = scmp.ne.s32.totalorder %s186, %s187
      %p201 = scmp.eq.s32.totalorder %s21, 7
      %p202 = por %p200, %p201
      %p204 = scmp.ne.s32.totalorder %s187, %s203
      %p205 = scmp.eq.s32.totalorder %s21, 0
      %p206 = por %p204, %p205
      %p207 = scmp.le.s32.totalorder 1, %s15
      %p208 = scmp.lt.s32.totalorder %s15, 9
      %p209 = pnand %p207, %p208
      %p210 = pneg %p209
      // Predicated region
      $region9: #{feature_decoder_forward.7} parent=5 // pred_check
        _
      $region10: #{feature_decoder_forward.7} parent=5 // pred_check_branch
        %212 = sbr.rel (%p209) target = $region12
      $region11: #{feature_decoder_forward.7} parent=5 // pred_region
        %s213 = ssub.s32 %s15, 1
        // Predicated region
        $region13: #{feature_decoder_forward.7} parent=11 // pred_check
          %p214 = pneg %p152
        $region14: #{feature_decoder_forward.7} parent=11 // pred_check_branch
          %216 = sbr.rel (%p214) target = $region16
        $region15: #{feature_decoder_forward.7} parent=11 // pred_region
          _
        $region16: #{feature_decoder_forward.7} parent=11 // pred_fallthru
          _
        // Predicated region
        $region17: #{feature_decoder_forward.7} parent=11 // pred_check
          %p217 = pneg %p173
        $region18: #{feature_decoder_forward.7} parent=11 // pred_check_branch
          %219 = sbr.rel (%p217) target = $region20
        $region19: #{feature_decoder_forward.7} parent=11 // pred_region
          _
        $region20: #{feature_decoder_forward.7} parent=11 // pred_fallthru
          _
      $region12: #{feature_decoder_forward.7} parent=5 // pred_fallthru
        _
      %p220 = scmp.lt.s32.totalorder %s15, 8
      // Predicated region
      $region21: #{feature_decoder_forward.7} parent=5 // pred_check
        %p221 = pneg %p220
      $region22: #{feature_decoder_forward.7} parent=5 // pred_check_branch
        %223 = sbr.rel (%p221) target = $region24
      $region23: #{feature_decoder_forward.7} parent=5 // pred_region
        // Predicated region
        $region25: #{feature_decoder_forward.7} parent=23 // pred_check
          %p224 = pneg %p47
        $region26: #{feature_decoder_forward.7} parent=23 // pred_check_branch
          %226 = sbr.rel (%p224) target = $region28
        $region27: #{feature_decoder_forward.7} parent=23 // pred_region
          %p227 = scmp.lt.s32.totalorder %s22, 1
          %s228 = scalar_select %p227, %s22, 1
          %s229 = smul.addr %s228, 2
          %s230 = smul.addr %s229, 4
          %s231 = scalar_lea.vmem %s0, %s230
        $region28: #{feature_decoder_forward.7} parent=23 // pred_fallthru
          _
        // Predicated region
        $region29: #{feature_decoder_forward.7} parent=23 // pred_check
          %p232 = pneg %p73
        $region30: #{feature_decoder_forward.7} parent=23 // pred_check_branch
          %234 = sbr.rel (%p232) target = $region32
        $region31: #{feature_decoder_forward.7} parent=23 // pred_region
          %p235 = scmp.lt.s32.totalorder %s23, 3
          %s236 = scalar_select %p235, %s23, 3
          %s237 = smul.addr %s236, 16
          %s238 = smul.addr %s237, 4
          %s239 = scalar_lea.vmem %s1, %s238
        $region32: #{feature_decoder_forward.7} parent=23 // pred_fallthru
          _
        // Predicated region
        $region33: #{feature_decoder_forward.7} parent=23 // pred_check
          %p240 = pneg %p99
        $region34: #{feature_decoder_forward.7} parent=23 // pred_check_branch
          %242 = sbr.rel (%p240) target = $region36
        $region35: #{feature_decoder_forward.7} parent=23 // pred_region
          %p243 = scmp.lt.s32.totalorder %s23, 3
          %s244 = scalar_select %p243, %s23, 3
          %s245 = scalar_lea.vmem %s2, %s244
        $region36: #{feature_decoder_forward.7} parent=23 // pred_fallthru
          _
        // Predicated region
        $region37: #{feature_decoder_forward.7} parent=23 // pred_check
          %p246 = pneg %p125
        $region38: #{feature_decoder_forward.7} parent=23 // pred_check_branch
          %248 = sbr.rel (%p246) target = $region40
        $region39: #{feature_decoder_forward.7} parent=23 // pred_region
          %s249 = sand.u32 %s115, 1
          %s250 = scalar_lea.sflag [#allocation5], %s249
          %s251 = sand.u32 %s115, 1
          %s252 = smul.addr %s251, 16
          %s253 = scalar_lea.vmem [#allocation4], %s252
          %255 = vsyncadd %s250, 0
          %s256 = smul.addr %s23, 4
          %s257 = smul.addr %s256, 4
          %s258 = scalar_lea.hbm %s3, %s257
          %s259 = sshll.u32 %s258, 4
          %s260 = int_to_ptr.hbm [resolvable:$true] %s259
          %s261 = sshll.u32 %s253, 4
          %s262 = int_to_ptr.vmem [resolvable:$true] %s261
          %267 = dma.hbm_to_vmem [thread:$0]  %s260, 256, %s262, %s250, 64, 64, 4
        $region40: #{feature_decoder_forward.7} parent=23 // pred_fallthru
          _
      $region24: #{feature_decoder_forward.7} parent=5 // pred_fallthru
        _
      %p268 = scmp.le.s32.totalorder 1, %s15
      %p269 = scmp.lt.s32.totalorder %s15, 9
      %p270 = pnand %p268, %p269
      %p271 = pneg %p270
      // Predicated region
      $region41: #{feature_decoder_forward.7} parent=5 // pred_check
        _
      $region42: #{feature_decoder_forward.7} parent=5 // pred_check_branch
        %273 = sbr.rel (%p270) target = $region44
      $region43: #{feature_decoder_forward.7} parent=5 // pred_region
        %s274 = ssub.s32 %s15, 1
        %s275 = sand.u32 %s118, 1
        %s276 = scalar_lea.sflag [#allocation5], %s275
        %s277 = sand.u32 %s118, 1
        %s278 = smul.addr %s277, 16
        %s279 = scalar_lea.vmem [#allocation4], %s278
        // Predicated region
        $region45: #{feature_decoder_forward.7} parent=43 // pred_check
          %p280 = pneg %p131
        $region46: #{feature_decoder_forward.7} parent=43 // pred_check_branch
          %282 = sbr.rel (%p280) target = $region48
        $region47: #{feature_decoder_forward.7} parent=43 // pred_region
          %284 = dma.done %s276, 256
        $region48: #{feature_decoder_forward.7} parent=43 // pred_fallthru
          _
        %p285 = scmp.lt.s32.totalorder %s24, 1
        %s286 = scalar_select %p285, %s24, 1
        %s287 = smul.addr %s286, 2
        %s288 = smul.addr %s287, 4
        %s289 = scalar_lea.vmem %s0, %s288
        %p290 = pneg %p53
        %p291 = pneg %p50
        %p292 = scmp.lt.s32.totalorder %s25, 3
        %s293 = scalar_select %p292, %s25, 3
        %s294 = smul.addr %s293, 16
        %s295 = smul.addr %s294, 4
        %s296 = scalar_lea.vmem %s1, %s295
        %p297 = pneg %p79
        %p298 = pneg %p76
        %p299 = scmp.lt.s32.totalorder %s25, 3
        %s300 = scalar_select %p299, %s25, 3
        %s301 = scalar_lea.vmem %s2, %s300
        %p302 = pneg %p105
        %p303 = pneg %p102
        %s304 = sand.u32 %s118, 1
        %s305 = scalar_lea.sflag [#allocation5], %s304
        %s306 = sand.u32 %s118, 1
        %s307 = smul.addr %s306, 16
        %s308 = scalar_lea.vmem [#allocation4], %s307
        %p309 = pneg %p131
        %p310 = pneg %p128
        %p311 = pneg %p152
        %p312 = pneg %p149
        %p313 = pneg %p173
        %p314 = pneg %p170
        %p315 = pneg %p199
        %p316 = pneg %p196
        %p317 = scmp.lt.s32.totalorder %s24, 1
        %s318 = scalar_select %p317, %s24, 1
        %s319 = smul.addr %s318, 2
        %s320 = smul.addr %s319, 4
        %s321 = scalar_lea.vmem %s6, %s320
        %p322 = scmp.lt.s32.totalorder %s24, 1
        %s323 = scalar_select %p322, %s24, 1
        %s324 = smul.addr %s323, 2
        %s325 = smul.addr %s324, 4
        %s326 = scalar_lea.vmem %s0, %s325
        %p327 = scmp.lt.s32.totalorder %s25, 3
        %s328 = scalar_select %p327, %s25, 3
        %s329 = smul.addr %s328, 16
        %s330 = smul.addr %s329, 4
        %s331 = scalar_lea.vmem %s1, %s330
        %p332 = scmp.lt.s32.totalorder %s25, 3
        %s333 = scalar_select %p332, %s25, 3
        %s334 = scalar_lea.vmem %s2, %s333
        %p335 = scmp.lt.s32.totalorder %s24, 1
        %s336 = scalar_select %p335, %s24, 1
        %s337 = smul.addr %s336, 2
        %s338 = smul.addr %s337, 4
        %s339 = scalar_lea.vmem %s6, %s338
        %p341 = scmp.eq.s32.totalorder %s25, 0
        // Predicated region
        $region49: #{feature_decoder_forward.7} parent=43 // pred_check
          %p342 = pneg %p341
        $region50: #{feature_decoder_forward.7} parent=43 // pred_check_branch
          %344 = sbr.rel (%p342) target = $region52
        $region51: #{feature_decoder_forward.7} parent=43 // pred_region
          %v345 = vld [vmem:[%s326] sm:$0xf]
          %v346 = vld [vmem:[%s326 + $0x4] sm:$0xf]
          %v347 = vunpack.c.l.bf16 %v345
          %v348 = vunpack.c.l.bf16 %v346
          %349 = vadd.xlane.f32.xlu0 %v347
          %v350 = vpop.xlane.xlu0 %349
          %351 = vadd.xlane.f32.xlu0 %v348
          %v352 = vpop.xlane.xlu0 %351
          %v353 = vrcp.pop 128.0
          %v354 = vmul.f32 128.0, %v353
          %v355 = vsub.f32 1.0, %v354
          %v356 = vmul.f32 %v353, %v355
          %v357 = vadd.f32 %v353, %v356
          %vm358 = vweird.f32 %v353
          %v359 = vsel %vm358, %v353, %v357
          %v360 = vmul.f32 %v350, %v359
          %v361 = vmul.f32 %v352, %v359
          %v362 = vsub.f32 %v347, %v360
          %v363 = vsub.f32 %v348, %v361
          %v364 = vmul.f32 %v362, %v362
          %v365 = vmul.f32 %v363, %v363
          %366 = vadd.xlane.f32.xlu0 %v364
          %v367 = vpop.xlane.xlu0 %366
          %368 = vadd.xlane.f32.xlu0 %v365
          %v369 = vpop.xlane.xlu0 %368
          %v370 = vmul.f32 %v367, %v359
          %v371 = vmul.f32 %v369, %v359
          %v372 = vadd.f32 %v370, 1e-05
          %v373 = vadd.f32 %v371, 1e-05
          %v374 = vrsqrt.pop %v372
          %v375 = vmul.f32 %v374, %v372
          %v376 = vmul.f32 %v375, %v374
          %v377 = vmul.f32 0.5, %v376
          %v378 = vsub.f32 1.5, %v377
          %v379 = vmul.f32 %v374, %v378
          %vm380 = vweird.f32 %v372
          %vm381 = vweird.f32 %v374
          %vm382 = vmor %vm380, %vm381
          %v383 = vsel %vm382, %v374, %v379
          %v384 = vrsqrt.pop %v373
          %v385 = vmul.f32 %v384, %v373
          %v386 = vmul.f32 %v385, %v384
          %v387 = vmul.f32 0.5, %v386
          %v388 = vsub.f32 1.5, %v387
          %v389 = vmul.f32 %v384, %v388
          %vm390 = vweird.f32 %v373
          %vm391 = vweird.f32 %v384
          %vm392 = vmor %vm390, %vm391
          %v393 = vsel %vm392, %v384, %v389
          %v394 = vmul.f32 %v362, %v383
          %v395 = vmul.f32 %v363, %v393
          %v396 = vld [vmem:[%s5] sm:$0x1]
          %v397 = vperm.slane %v396, 0
          %v398 = vmul.f32 %v394, %v397
          %v399 = vmul.f32 %v395, %v397
          %v400 = vld [vmem:[%s5 + $0x1] sm:$0x1]
          %v401 = vperm.slane %v400, 0
          %v402 = vadd.f32 %v398, %v401
          %v403 = vadd.f32 %v399, %v401
          %v404 = vpack.c.bf16 %v402, %v402
          %v405 = vpack.c.bf16 %v403, %v403
          %406 = vst [vmem:[#allocation2] sm:$0xf] %v404
          %407 = vst [vmem:[#allocation2 + $0x4] sm:$0xf] %v405
          %408 = vst [vmem:[#allocation3] sm:$0xff] 0.0
          %409 = vst [vmem:[#allocation3 + $0x8] sm:$0xff] 0.0
        $region52: #{feature_decoder_forward.7} parent=43 // pred_fallthru
          _
        %v410 = vld [vmem:[#allocation2] sm:$0xf]
        %v411 = vld [vmem:[#allocation2 + $0x4] sm:$0xf]
        %v412 = vld [vmem:[%s331] sm:$0xf]
        %v413 = vld [vmem:[%s331 + $0x4] sm:$0xf]
        %v414 = vld [vmem:[%s331 + $0x8] sm:$0xf]
        %v415 = vld [vmem:[%s331 + $0xc] sm:$0xf]
        %v416 = vld [vmem:[%s331 + $0x10] sm:$0xf]
        %v417 = vld [vmem:[%s331 + $0x14] sm:$0xf]
        %v418 = vld [vmem:[%s331 + $0x18] sm:$0xf]
        %v419 = vld [vmem:[%s331 + $0x1c] sm:$0xf]
        %v420 = vld [vmem:[%s331 + $0x20] sm:$0xf]
        %v421 = vld [vmem:[%s331 + $0x24] sm:$0xf]
        %v422 = vld [vmem:[%s331 + $0x28] sm:$0xf]
        %v423 = vld [vmem:[%s331 + $0x2c] sm:$0xf]
        %v424 = vld [vmem:[%s331 + $0x30] sm:$0xf]
        %v425 = vld [vmem:[%s331 + $0x34] sm:$0xf]
        %v426 = vld [vmem:[%s331 + $0x38] sm:$0xf]
        %v427 = vld [vmem:[%s331 + $0x3c] sm:$0xf]
        %v428 = vld [vmem:[%s334] sm:$0x1]
        %v430 = vperm.slane %v428, 0
        %v434 = vunpack.c.l.b16 %v410
        %v435 = vunpack.c.l.b16 %v411
        %v436 = vpack.c.b16 %v435, %v434
        %v454 = vunpack.c.l.b16 %v412
        %v455 = vunpack.c.l.b16 %v413
        %v456 = vunpack.c.l.b16 %v414
        %v457 = vunpack.c.l.b16 %v415
        %v458 = vunpack.c.l.b16 %v416
        %v459 = vunpack.c.l.b16 %v417
        %v460 = vunpack.c.l.b16 %v418
        %v461 = vunpack.c.l.b16 %v419
        %v462 = vunpack.c.l.b16 %v420
        %v463 = vunpack.c.l.b16 %v421
        %v464 = vunpack.c.l.b16 %v422
        %v465 = vunpack.c.l.b16 %v423
        %v466 = vunpack.c.l.b16 %v424
        %v467 = vunpack.c.l.b16 %v425
        %v468 = vunpack.c.l.b16 %v426
        %v469 = vunpack.c.l.b16 %v427
        %v470 = vpack.c.b16 %v455, %v454
        %v471 = vpack.c.b16 %v457, %v456
        %v472 = vpack.c.b16 %v459, %v458
        %v473 = vpack.c.b16 %v461, %v460
        %v474 = vpack.c.b16 %v463, %v462
        %v475 = vpack.c.b16 %v465, %v464
        %v476 = vpack.c.b16 %v467, %v466
        %v477 = vpack.c.b16 %v469, %v468
        %486 = vmatpush.bf16.msra.mxu0 %v477
        %487 = vmatpush.bf16.msra.mxu0 %v476
        %488 = vmatpush.bf16.msra.mxu0 %v475
        %489 = vmatpush.bf16.msra.mxu0 %v474
        %490 = vmatpush.bf16.msra.mxu0 %v473
        %491 = vmatpush.bf16.msra.mxu0 %v472
        %492 = vmatpush.bf16.msra.mxu0 %v471
        %493 = vmatpush.bf16.msra.mxu0 %v470
        %494 = vmatmul.bf16.gmra.mxu0 %v436
        %v495 = vpop.f32.mrf.mxu0
        %v496 = vadd.f32 %v430, %v495
        %v497 = vpop.f32.mrf.mxu0
        %v498 = vadd.f32 %v430, %v497
        %499 = vdwg.mxu0
        %v500 = vmul.f32 %v496, 0.17677669
        %v501 = vmul.f32 %v498, 0.17677669
        %v502 = vpack.c.bf16 %v501, %v500
        %v503 = vpack.c.bf16 %v498, %v496
        %505 = vrot.lane.b32.xlu0 %v503, 96
        %v506 = vpop.permute.xlu0 %505
        %vm507 = vcmask 261120
        %v509 = vsel %vm507, %v502, 0
        %v512 = vsel %vm507, %v506, 0
        %514 = vmatpush.bf16.xpose.msra.mxu0 0
        %515 = vmatpush.bf16.xpose.msra.mxu0 0
        %516 = vmatpush.bf16.xpose.msra.mxu0 0
        %517 = vmatpush.bf16.xpose.msra.mxu0 0
        %518 = vmatpush.bf16.xpose.msra.mxu0 0
        %519 = vmatpush.bf16.xpose.msra.mxu0 0
        %520 = vmatpush.bf16.xpose.msra.mxu0 0
        %521 = vmatpush.bf16.xpose.msra.mxu0 %v512
        %522 = vmatmul.bf16.gmra.mxu0 %v509
        %v523 = vpop.f32.mrf.mxu0
        %v524 = vadd.f32 0.0, %v523
        %v525 = vpop.f32.mrf.mxu0
        %v526 = vadd.f32 0.0, %v525
        %527 = vdwg.mxu0
        %vm528 = vcmask 130048
        %v529 = vsel %vm528, %v524, -inf
        %530 = vmax.xlane.f32.xlu0 %v529
        %v531 = vpop.xlane.xlu0 %530
        %v532 = vsel %vm528, %v526, -inf
        %533 = vmax.xlane.f32.xlu0 %v532
        %v534 = vpop.xlane.xlu0 %533
        %v535 = vsub.f32 %v524, %v531
        %v536 = vsub.f32 %v526, %v534
        %v537 = vmul.f32 %v535, 1.442695
        %v538 = vpow.pop %v537
        %v539 = vmul.f32 %v536, 1.442695
        %v540 = vpow.pop %v539
        %v541 = vsel %vm528, %v538, 0.0
        %542 = vadd.xlane.f32.xlu0 %v541
        %v543 = vpop.xlane.xlu0 %542
        %v544 = vsel %vm528, %v540, 0.0
        %545 = vadd.xlane.f32.xlu0 %v544
        %v546 = vpop.xlane.xlu0 %545
        %v547 = vrcp.pop %v543
        %v548 = vrcp.pop %v546
        %v549 = vmul.f32 %v538, %v547
        %v550 = vmul.f32 %v540, %v548
        %v551 = vpack.c.bf16 %v550, %v549
        %552 = vrot.lane.b32.xlu0 %v503, 64
        %v553 = vpop.permute.xlu0 %552
        %v556 = vsel %vm528, %v551, 0
        %558 = vmatpush.bf16.msra.mxu0 0
        %559 = vmatpush.bf16.msra.mxu0 0
        %560 = vmatpush.bf16.msra.mxu0 0
        %561 = vmatpush.bf16.msra.mxu0 0
        %562 = vmatpush.bf16.msra.mxu0 0
        %563 = vmatpush.bf16.msra.mxu0 0
        %564 = vmatpush.bf16.msra.mxu0 0
        %565 = vmatpush.bf16.msra.mxu0 %v553
        %566 = vmatmul.bf16.gmra.mxu0 %v556
        %v567 = vpop.f32.mrf.mxu0
        %v568 = vadd.f32 0.0, %v567
        %v569 = vpop.f32.mrf.mxu0
        %v570 = vadd.f32 0.0, %v569
        %571 = vdwg.mxu0
        %v572 = vld [vmem:[#allocation3] sm:$0xff]
        %v573 = vld [vmem:[#allocation3 + $0x8] sm:$0xff]
        %v574 = vpack.c.bf16 %v570, %v568
        %v575 = vld [vmem:[%s279] sm:$0xf]
        %v576 = vld [vmem:[%s279 + $0x4] sm:$0xf]
        %v577 = vld [vmem:[%s279 + $0x8] sm:$0xf]
        %v578 = vld [vmem:[%s279 + $0xc] sm:$0xf]
        %v583 = vunpack.c.l.b16 %v575
        %v584 = vunpack.c.l.b16 %v576
        %v585 = vunpack.c.l.b16 %v577
        %v586 = vunpack.c.l.b16 %v578
        %v587 = vpack.c.b16 %v584, %v583
        %v588 = vpack.c.b16 %v586, %v585
        %v592 = vsel %vm507, %v574, 0
        %594 = vmatpush.bf16.msra.mxu0 0
        %595 = vmatpush.bf16.msra.mxu0 0
        %596 = vmatpush.bf16.msra.mxu0 0
        %597 = vmatpush.bf16.msra.mxu0 0
        %598 = vmatpush.bf16.msra.mxu0 0
        %599 = vmatpush.bf16.msra.mxu0 0
        %600 = vmatpush.bf16.msra.mxu0 %v588
        %601 = vmatpush.bf16.msra.mxu0 %v587
        %602 = vmatmul.bf16.gmra.mxu0 %v592
        %v603 = vpop.f32.mrf.mxu0
        %v604 = vadd.f32 0.0, %v603
        %v605 = vpop.f32.mrf.mxu0
        %v606 = vadd.f32 0.0, %v605
        %607 = vdwg.mxu0
        %v608 = vadd.f32 %v572, %v604
        %v609 = vadd.f32 %v573, %v606
        %610 = vst [vmem:[#allocation3] sm:$0xff] %v608
        %611 = vst [vmem:[#allocation3 + $0x8] sm:$0xff] %v609
        %p612 = scmp.eq.s32.totalorder %s25, 3
        // Predicated region
        $region53: #{feature_decoder_forward.7} parent=43 // pred_check
          %p613 = pneg %p612
        $region54: #{feature_decoder_forward.7} parent=43 // pred_check_branch
          %615 = sbr.rel (%p613) target = $region56
        $region55: #{feature_decoder_forward.7} parent=43 // pred_region
          %v616 = vld [vmem:[%s326] sm:$0xf]
          %v617 = vld [vmem:[%s326 + $0x4] sm:$0xf]
          %v618 = vunpack.c.l.bf16 %v616
          %v619 = vunpack.c.l.bf16 %v617
          %v620 = vld [vmem:[#allocation3] sm:$0xff]
          %v621 = vld [vmem:[#allocation3 + $0x8] sm:$0xff]
          %v622 = vadd.f32 %v618, %v620
          %v623 = vadd.f32 %v619, %v621
          %v624 = vld [vmem:[%s4] sm:$0x1]
          %v626 = vperm.slane %v624, 0
          %v628 = vadd.f32 %v622, %v626
          %v629 = vadd.f32 %v623, %v626
          %v630 = vpack.c.bf16 %v628, %v628
          %v631 = vpack.c.bf16 %v629, %v629
          %632 = vst [vmem:[%s339] sm:$0xf] %v630
          %633 = vst [vmem:[%s339 + $0x4] sm:$0xf] %v631
        $region56: #{feature_decoder_forward.7} parent=43 // pred_fallthru
          _
        %p634 = scmp.lt.s32.totalorder %s24, 1
        %s635 = scalar_select %p634, %s24, 1
        %s636 = smul.addr %s635, 2
        %s637 = smul.addr %s636, 4
        %s638 = scalar_lea.vmem %s6, %s637
        // Predicated region
        $region57: #{feature_decoder_forward.7} parent=43 // pred_check
          %p639 = pneg %p196
        $region58: #{feature_decoder_forward.7} parent=43 // pred_check_branch
          %641 = sbr.rel (%p639) target = $region60
        $region59: #{feature_decoder_forward.7} parent=43 // pred_region
          _
        $region60: #{feature_decoder_forward.7} parent=43 // pred_fallthru
          _
      $region44: #{feature_decoder_forward.7} parent=5 // pred_fallthru
        _
      %p642 = scmp.le.s32.totalorder 2, %s15
      // Predicated region
      $region61: #{feature_decoder_forward.7} parent=5 // pred_check
        %p643 = pneg %p642
      $region62: #{feature_decoder_forward.7} parent=5 // pred_check_branch
        %645 = sbr.rel (%p643) target = $region64
      $region63: #{feature_decoder_forward.7} parent=5 // pred_region
        %s646 = ssub.s32 %s15, 2
        // Predicated region
        $region65: #{feature_decoder_forward.7} parent=63 // pred_check
          %p647 = pneg %p202
        $region66: #{feature_decoder_forward.7} parent=63 // pred_check_branch
          %649 = sbr.rel (%p647) target = $region68
        $region67: #{feature_decoder_forward.7} parent=63 // pred_region
          %p650 = scmp.lt.s32.totalorder %s26, 1
          %s651 = scalar_select %p650, %s26, 1
          %s652 = smul.addr %s651, 2
          %s653 = smul.addr %s652, 4
          %s654 = scalar_lea.vmem %s6, %s653
        $region68: #{feature_decoder_forward.7} parent=63 // pred_fallthru
          _
      $region64: #{feature_decoder_forward.7} parent=5 // pred_fallthru
        _
    $region6: #{feature_decoder_forward.7} parent=1 // loop_footer
      %s19 = sadd.s32 1, %s15
    $region7: #{feature_decoder_forward.7} parent=1 // loop_footer_branch
      %14 = sbr.rel target = $region3
    $region8: #{feature_decoder_forward.7} parent=1 // loop_exit
      _
    %655 = vsyncpa [#allocation5], 1
    %s656 = scalar_lea.sflag [#allocation5], 1
    %657 = vsyncpa %s656, 1

// kernel: feature_decoder_forward.8
$region0: #{feature_decoder_forward.8}
  #allocation0 [shape = 'u32[]', space=smem, size = 0x4, offset = 0x4, fixed_abs, tag = 'smem constant byte address 0x4 - core index']
  #allocation1 [shape = 'u32[72,128]{1,0:T(1,128)}', space=vmem, size = 0x9000, scoped, tag = 'internal scratch']
  %s0 = inlined_call_operand.vmem [shape: bf16[2,16,128], index: 0, kind: input, shape index: {}]
  %s1 = inlined_call_operand.vmem [shape: f32[2,128], index: 1, kind: input, shape index: {}]
  %s2 = inlined_call_operand.vmem [shape: bf16[128,512], index: 2, kind: input, shape index: {}]
  %s3 = inlined_call_operand.vmem [shape: f32[1,512], index: 3, kind: input, shape index: {}]
  %s4 = inlined_call_operand.hbm [shape: bf16[512,128], index: 4, kind: input, shape index: {}]
  %s5 = inlined_call_operand.vmem [shape: f32[1,128], index: 5, kind: input, shape index: {}]
  %s6 = inlined_call_operand.vmem [shape: bf16[2,16,128], index: 6, kind: output, shape index: {}]
  %s7 = sld [smem:[#allocation0]]
  $region61: #{feature_decoder_forward.8} parent=0
    _
  %s9 = ssub.s32 1, %s7
  %s10 = scalar_select 0, %s9, %s7
  $region1: #{feature_decoder_forward.8} parent=0
    #allocation2 [shape = 'u8[131072]{0}', space=vmem, size = 0x20000, scoped, tag = 'input window, operand 4, single buffered']
    #allocation3 [shape = 's32[2]{0}', space=sflag, size = 0x8, scoped, tag = 'scoped memory for feature_decoder_forward.8']
    %11 = vsyncpa [#allocation3], 0
    loop: start=0, step=1, limit=4
    $region2: #{feature_decoder_forward.8} parent=1 // loop_pre_header
      _
    $region3: #{feature_decoder_forward.8} parent=1 // loop_header
      %s13 = sphi 0, %s17
      %p14 = scmp.ge.s32.totalorder %s13, 4
      %s20 = sphi 0, %s32
      %s21 = sphi 0, %s28
      %s22 = sphi 0, %s20
      %s23 = sphi 0, %s21
      %s24 = sphi 0, %s22
      %s25 = sphi 0, %s23
      %s37 = sphi 0, %s39
      %s40 = sphi 0, %s37
      %s41 = sphi 0, %s40
      %s57 = sphi 0, %s41
      %s61 = sphi 0, %s61
      %s63 = sphi 0, %s61
      %s64 = sphi 0, %s63
      %s78 = sphi 0, %s64
      %s82 = sphi 0, %s82
      %s84 = sphi 0, %s82
      %s85 = sphi 0, %s84
      %s99 = sphi 0, %s85
      %s103 = sphi 0, %s103
      %s105 = sphi 0, %s103
      %s106 = sphi 0, %s105
      %s120 = sphi 0, %s106
      %s124 = sphi 0, %s124
      %s126 = sphi 0, %s124
      %s127 = sphi 0, %s126
      %s141 = sphi 0, %s127
      %s145 = sphi 0, %s145
      %s147 = sphi 0, %s145
      %s148 = sphi 0, %s147
      %s162 = sphi 0, %s148
      %s170 = sphi 0, %s172
      %s173 = sphi 0, %s170
      %s174 = sphi 0, %s173
      %s190 = sphi 0, %s174
    $region4: #{feature_decoder_forward.8} parent=1 // loop_header_branch
      %16 = sbr.rel (%p14) target = $region8
    $region5: #{feature_decoder_forward.8} parent=1 // loop_body
      %s18 = ssub.s32 %s13, 1
      %s19 = ssub.s32 %s13, 2
      %s26 = sadd.s32 1, %s21
      %p27 = scmp.ge.s32.totalorder %s26, 1
      %s28 = scalar_select %p27, 0, %s26
      %s29 = sadd.s32 1, %s20
      %s30 = scalar_select %p27, %s29, %s20
      %p31 = scmp.ge.s32.totalorder %s30, 2
      %s32 = scalar_select %p31, 0, %s30
      %s33 = ssub.s32 %s20, %s32
      %s34 = ssub.s32 %s21, %s28
      %s35 = sor.u32 %s33, %s34
      %p36 = scmp.eq.s32.totalorder %s35, 0
      %s38 = sadd.s32 %s37, 1
      %s39 = scalar_select %p36, %s37, %s38
      %p42 = pneg %p36
      %p43 = scmp.eq.s32.totalorder %s13, 1
      %p44 = por %p42, %p43
      %p45 = scmp.ne.s32.totalorder %s37, %s40
      %p46 = scmp.eq.s32.totalorder %s13, 0
      %p47 = por %p45, %p46
      %p48 = scmp.ne.s32.totalorder %s37, %s40
      %p49 = scmp.eq.s32.totalorder %s18, 1
      %p50 = por %p48, %p49
      %p51 = scmp.ne.s32.totalorder %s40, %s41
      %p52 = scmp.eq.s32.totalorder %s18, 0
      %p53 = por %p51, %p52
      %p54 = scmp.ne.s32.totalorder %s40, %s41
      %p55 = scmp.eq.s32.totalorder %s19, 1
      %p56 = por %p54, %p55
      %p58 = scmp.ne.s32.totalorder %s41, %s57
      %p59 = scmp.eq.s32.totalorder %s19, 0
      %p60 = por %p58, %p59
      %s62 = sadd.s32 %s61, 1
      %p65 = scmp.eq.s32.totalorder %s13, 1
      %p66 = scmp.ne.s32.totalorder %s61, %s63
      %p67 = scmp.eq.s32.totalorder %s13, 0
      %p68 = por %p66, %p67
      %p69 = scmp.ne.s32.totalorder %s61, %s63
      %p70 = scmp.eq.s32.totalorder %s18, 1
      %p71 = por %p69, %p70
      %p72 = scmp.ne.s32.totalorder %s63, %s64
      %p73 = scmp.eq.s32.totalorder %s18, 0
      %p74 = por %p72, %p73
      %p75 = scmp.ne.s32.totalorder %s63, %s64
      %p76 = scmp.eq.s32.totalorder %s19, 1
      %p77 = por %p75, %p76
      %p79 = scmp.ne.s32.totalorder %s64, %s78
      %p80 = scmp.eq.s32.totalorder %s19, 0
      %p81 = por %p79, %p80
      %s83 = sadd.s32 %s82, 1
      %p86 = scmp.eq.s32.totalorder %s13, 1
      %p87 = scmp.ne.s32.totalorder %s82, %s84
      %p88 = scmp.eq.s32.totalorder %s13, 0
      %p89 = por %p87, %p88
      %p90 = scmp.ne.s32.totalorder %s82, %s84
      %p91 = scmp.eq.s32.totalorder %s18, 1
      %p92 = por %p90, %p91
      %p93 = scmp.ne.s32.totalorder %s84, %s85
      %p94 = scmp.eq.s32.totalorder %s18, 0
      %p95 = por %p93, %p94
      %p96 = scmp.ne.s32.totalorder %s84, %s85
      %p97 = scmp.eq.s32.totalorder %s19, 1
      %p98 = por %p96, %p97
      %p100 = scmp.ne.s32.totalorder %s85, %s99
      %p101 = scmp.eq.s32.totalorder %s19, 0
      %p102 = por %p100, %p101
      %s104 = sadd.s32 %s103, 1
      %p107 = scmp.eq.s32.totalorder %s13, 1
      %p108 = scmp.ne.s32.totalorder %s103, %s105
      %p109 = scmp.eq.s32.totalorder %s13, 0
      %p110 = por %p108, %p109
      %p111 = scmp.ne.s32.totalorder %s103, %s105
      %p112 = scmp.eq.s32.totalorder %s18, 1
      %p113 = por %p111, %p112
      %p114 = scmp.ne.s32.totalorder %s105, %s106
      %p115 = scmp.eq.s32.totalorder %s18, 0
      %p116 = por %p114, %p115
      %p117 = scmp.ne.s32.totalorder %s105, %s106
      %p118 = scmp.eq.s32.totalorder %s19, 1
      %p119 = por %p117, %p118
      %p121 = scmp.ne.s32.totalorder %s106, %s120
      %p122 = scmp.eq.s32.totalorder %s19, 0
      %p123 = por %p121, %p122
      %s125 = sadd.s32 %s124, 1
      %p128 = scmp.eq.s32.totalorder %s13, 1
      %p129 = scmp.ne.s32.totalorder %s124, %s126
      %p130 = scmp.eq.s32.totalorder %s13, 0
      %p131 = por %p129, %p130
      %p132 = scmp.ne.s32.totalorder %s124, %s126
      %p133 = scmp.eq.s32.totalorder %s18, 1
      %p134 = por %p132, %p133
      %p135 = scmp.ne.s32.totalorder %s126, %s127
      %p136 = scmp.eq.s32.totalorder %s18, 0
      %p137 = por %p135, %p136
      %p138 = scmp.ne.s32.totalorder %s126, %s127
      %p139 = scmp.eq.s32.totalorder %s19, 1
      %p140 = por %p138, %p139
      %p142 = scmp.ne.s32.totalorder %s127, %s141
      %p143 = scmp.eq.s32.totalorder %s19, 0
      %p144 = por %p142, %p143
      %s146 = sadd.s32 %s145, 1
      %p149 = scmp.eq.s32.totalorder %s13, 1
      %p150 = scmp.ne.s32.totalorder %s145, %s147
      %p151 = scmp.eq.s32.totalorder %s13, 0
      %p152 = por %p150, %p151
      %p153 = scmp.ne.s32.totalorder %s145, %s147
      %p154 = scmp.eq.s32.totalorder %s18, 1
      %p155 = por %p153, %p154
      %p156 = scmp.ne.s32.totalorder %s147, %s148
      %p157 = scmp.eq.s32.totalorder %s18, 0
      %p158 = por %p156, %p157
      %p159 = scmp.ne.s32.totalorder %s147, %s148
      %p160 = scmp.eq.s32.totalorder %s19, 1
      %p161 = por %p159, %p160
      %p163 = scmp.ne.s32.totalorder %s148, %s162
      %p164 = scmp.eq.s32.totalorder %s19, 0
      %p165 = por %p163, %p164
      %s166 = ssub.s32 %s20, %s32
      %s167 = ssub.s32 %s21, %s28
      %s168 = sor.u32 %s166, %s167
      %p169 = scmp.eq.s32.totalorder %s168, 0
      %s171 = sadd.s32 %s170, 1
      %s172 = scalar_select %p169, %s170, %s171
      %p175 = pneg %p169
      %p176 = scmp.eq.s32.totalorder %s13, 1
      %p177 = por %p175, %p176
      %p178 = scmp.ne.s32.totalorder %s170, %s173
      %p179 = scmp.eq.s32.totalorder %s13, 0
      %p180 = por %p178, %p179
      %p181 = scmp.ne.s32.totalorder %s170, %s173
      %p182 = scmp.eq.s32.totalorder %s18, 1
      %p183 = por %p181, %p182
      %p184 = scmp.ne.s32.totalorder %s173, %s174
      %p185 = scmp.eq.s32.totalorder %s18, 0
      %p186 = por %p184, %p185
      %p187 = scmp.ne.s32.totalorder %s173, %s174
      %p188 = scmp.eq.s32.totalorder %s19, 1
      %p189 = por %p187, %p188
      %p191 = scmp.ne.s32.totalorder %s174, %s190
      %p192 = scmp.eq.s32.totalorder %s19, 0
      %p193 = por %p191, %p192
      %p194 = scmp.le.s32.totalorder 1, %s13
      %p195 = scmp.lt.s32.totalorder %s13, 3
      %p196 = pnand %p194, %p195
      %p197 = pneg %p196
      // Predicated region
      $region9: #{feature_decoder_forward.8} parent=5 // pred_check
        _
      $region10: #{feature_decoder_forward.8} parent=5 // pred_check_branch
        %199 = sbr.rel (%p196) target = $region12
      $region11: #{feature_decoder_forward.8} parent=5 // pred_region
        %s200 = ssub.s32 %s13, 1
        // Predicated region
        $region13: #{feature_decoder_forward.8} parent=11 // pred_check
          %p201 = pneg %p74
        $region14: #{feature_decoder_forward.8} parent=11 // pred_check_branch
          %203 = sbr.rel (%p201) target = $region16
        $region15: #{feature_decoder_forward.8} parent=11 // pred_region
          _
        $region16: #{feature_decoder_forward.8} parent=11 // pred_fallthru
          _
        // Predicated region
        $region17: #{feature_decoder_forward.8} parent=11 // pred_check
          %p204 = pneg %p95
        $region18: #{feature_decoder_forward.8} parent=11 // pred_check_branch
          %206 = sbr.rel (%p204) target = $region20
        $region19: #{feature_decoder_forward.8} parent=11 // pred_region
          _
        $region20: #{feature_decoder_forward.8} parent=11 // pred_fallthru
          _
        // Predicated region
        $region21: #{feature_decoder_forward.8} parent=11 // pred_check
          %p207 = pneg %p116
        $region22: #{feature_decoder_forward.8} parent=11 // pred_check_branch
          %209 = sbr.rel (%p207) target = $region24
        $region23: #{feature_decoder_forward.8} parent=11 // pred_region
          _
        $region24: #{feature_decoder_forward.8} parent=11 // pred_fallthru
          _
        // Predicated region
        $region25: #{feature_decoder_forward.8} parent=11 // pred_check
          %p210 = pneg %p137
        $region26: #{feature_decoder_forward.8} parent=11 // pred_check_branch
          %212 = sbr.rel (%p210) target = $region28
        $region27: #{feature_decoder_forward.8} parent=11 // pred_region
          %214 = vsyncadd [#allocation3], 0
          %s215 = sshll.u32 %s4, 4
          %s216 = int_to_ptr.hbm [resolvable:$true] %s215
          %s217 = sshll.u32 [#allocation2], 4
          %s218 = int_to_ptr.vmem [resolvable:$true] %s217
          %223 = dma.hbm_to_vmem [thread:$0]  %s216, 4096, %s218, [#allocation3], 64, 64, 4
        $region28: #{feature_decoder_forward.8} parent=11 // pred_fallthru
          _
        // Predicated region
        $region29: #{feature_decoder_forward.8} parent=11 // pred_check
          %p224 = pneg %p158
        $region30: #{feature_decoder_forward.8} parent=11 // pred_check_branch
          %226 = sbr.rel (%p224) target = $region32
        $region31: #{feature_decoder_forward.8} parent=11 // pred_region
          _
        $region32: #{feature_decoder_forward.8} parent=11 // pred_fallthru
          _
      $region12: #{feature_decoder_forward.8} parent=5 // pred_fallthru
        _
      %p227 = scmp.lt.s32.totalorder %s13, 2
      // Predicated region
      $region33: #{feature_decoder_forward.8} parent=5 // pred_check
        %p228 = pneg %p227
      $region34: #{feature_decoder_forward.8} parent=5 // pred_check_branch
        %230 = sbr.rel (%p228) target = $region36
      $region35: #{feature_decoder_forward.8} parent=5 // pred_region
        // Predicated region
        $region37: #{feature_decoder_forward.8} parent=35 // pred_check
          %p231 = pneg %p47
        $region38: #{feature_decoder_forward.8} parent=35 // pred_check_branch
          %233 = sbr.rel (%p231) target = $region40
        $region39: #{feature_decoder_forward.8} parent=35 // pred_region
          %s234 = smul.u32 2, %s21
          %p235 = scmp.lt.s32.totalorder %s20, 1
          %s236 = scalar_select %p235, %s20, 1
          %p237 = scmp.lt.s32.totalorder %s234, 1
          %s238 = scalar_select %p237, %s234, 1
          %s239 = smul.addr %s236, 2
          %s240 = sadd.s32 %s238, %s239
          %s241 = smul.addr %s240, 4
          %s242 = scalar_lea.vmem %s0, %s241
          %s243 = smul.u32 2, %s21
        $region40: #{feature_decoder_forward.8} parent=35 // pred_fallthru
          _
      $region36: #{feature_decoder_forward.8} parent=5 // pred_fallthru
        _
      %p244 = scmp.le.s32.totalorder 1, %s13
      %p245 = scmp.lt.s32.totalorder %s13, 3
      %p246 = pnand %p244, %p245
      %p247 = pneg %p246
      // Predicated region
      $region41: #{feature_decoder_forward.8} parent=5 // pred_check
        _
      $region42: #{feature_decoder_forward.8} parent=5 // pred_check_branch
        %249 = sbr.rel (%p246) target = $region44
      $region43: #{feature_decoder_forward.8} parent=5 // pred_region
        %s250 = ssub.s32 %s13, 1
        // Predicated region
        $region45: #{feature_decoder_forward.8} parent=43 // pred_check
          %p251 = pneg %p137
        $region46: #{feature_decoder_forward.8} parent=43 // pred_check_branch
          %253 = sbr.rel (%p251) target = $region48
        $region47: #{feature_decoder_forward.8} parent=43 // pred_region
          %255 = dma.done [#allocation3], 4096
        $region48: #{feature_decoder_forward.8} parent=43 // pred_fallthru
          _
        %s256 = smul.u32 2, %s23
        %p257 = scmp.lt.s32.totalorder %s22, 1
        %s258 = scalar_select %p257, %s22, 1
        %p259 = scmp.lt.s32.totalorder %s256, 1
        %s260 = scalar_select %p259, %s256, 1
        %s261 = smul.addr %s258, 2
        %s262 = sadd.s32 %s260, %s261
        %s263 = smul.addr %s262, 4
        %s264 = scalar_lea.vmem %s0, %s263
        %p265 = pneg %p53
        %p266 = pneg %p50
        %p267 = pneg %p74
        %p268 = pneg %p71
        %p269 = pneg %p95
        %p270 = pneg %p92
        %p271 = pneg %p116
        %p272 = pneg %p113
        %p273 = pneg %p137
        %p274 = pneg %p134
        %p275 = pneg %p158
        %p276 = pneg %p155
        %p277 = pneg %p186
        %p278 = pneg %p183
        %s279 = smul.u32 2, %s23
        %p280 = scmp.lt.s32.totalorder %s22, 1
        %s281 = scalar_select %p280, %s22, 1
        %p282 = scmp.lt.s32.totalorder %s279, 1
        %s283 = scalar_select %p282, %s279, 1
        %s284 = smul.addr %s281, 2
        %s285 = sadd.s32 %s283, %s284
        %s286 = smul.addr %s285, 4
        %s287 = scalar_lea.vmem %s6, %s286
        %s288 = smul.u32 2, %s23
        %p289 = scmp.lt.s32.totalorder %s22, 1
        %s290 = scalar_select %p289, %s22, 1
        %p291 = scmp.lt.s32.totalorder %s288, 1
        %s292 = scalar_select %p291, %s288, 1
        %s293 = smul.addr %s290, 2
        %s294 = sadd.s32 %s292, %s293
        %s295 = smul.addr %s294, 4
        %s296 = scalar_lea.vmem %s0, %s295
        %s297 = smul.u32 2, %s23
        %s298 = smul.u32 2, %s23
        %p299 = scmp.lt.s32.totalorder %s22, 1
        %s300 = scalar_select %p299, %s22, 1
        %p301 = scmp.lt.s32.totalorder %s298, 1
        %s302 = scalar_select %p301, %s298, 1
        %s303 = smul.addr %s300, 2
        %s304 = sadd.s32 %s302, %s303
        %s305 = smul.addr %s304, 4
        %s306 = scalar_lea.vmem %s6, %s305
        %s307 = smul.u32 2, %s23
        %v309 = vld [vmem:[%s296] sm:$0xf]
        %v310 = vld [vmem:[%s296 + $0x4] sm:$0xf]
        %v311 = vunpack.c.l.bf16 %v309
        %v312 = vunpack.c.l.bf16 %v310
        %313 = vadd.xlane.f32.xlu0 %v311
        %v314 = vpop.xlane.xlu0 %313
        %315 = vadd.xlane.f32.xlu0 %v312
        %v316 = vpop.xlane.xlu0 %315
        %v317 = vrcp.pop 128.0
        %v318 = vmul.f32 128.0, %v317
        %v319 = vsub.f32 1.0, %v318
        %v320 = vmul.f32 %v317, %v319
        %v321 = vadd.f32 %v317, %v320
        %vm322 = vweird.f32 %v317
        %v323 = vsel %vm322, %v317, %v321
        %v324 = vmul.f32 %v314, %v323
        %v325 = vmul.f32 %v316, %v323
        %v326 = vsub.f32 %v311, %v324
        %v327 = vsub.f32 %v312, %v325
        %v328 = vmul.f32 %v326, %v326
        %v329 = vmul.f32 %v327, %v327
        %330 = vadd.xlane.f32.xlu0 %v328
        %v331 = vpop.xlane.xlu0 %330
        %332 = vadd.xlane.f32.xlu0 %v329
        %v333 = vpop.xlane.xlu0 %332
        %v334 = vmul.f32 %v331, %v323
        %v335 = vmul.f32 %v333, %v323
        %v336 = vadd.f32 %v334, 1e-05
        %v337 = vadd.f32 %v335, 1e-05
        %v338 = vrsqrt.pop %v336
        %v339 = vmul.f32 %v338, %v336
        %v340 = vmul.f32 %v339, %v338
        %v341 = vmul.f32 0.5, %v340
        %v342 = vsub.f32 1.5, %v341
        %v343 = vmul.f32 %v338, %v342
        %vm344 = vweird.f32 %v336
        %vm345 = vweird.f32 %v338
        %vm346 = vmor %vm344, %vm345
        %v347 = vsel %vm346, %v338, %v343
        %v348 = vrsqrt.pop %v337
        %v349 = vmul.f32 %v348, %v337
        %v350 = vmul.f32 %v349, %v348
        %v351 = vmul.f32 0.5, %v350
        %v352 = vsub.f32 1.5, %v351
        %v353 = vmul.f32 %v348, %v352
        %vm354 = vweird.f32 %v337
        %vm355 = vweird.f32 %v348
        %vm356 = vmor %vm354, %vm355
        %v357 = vsel %vm356, %v348, %v353
        %v358 = vmul.f32 %v326, %v347
        %v359 = vmul.f32 %v327, %v357
        %v360 = vld [vmem:[%s1] sm:$0x1]
        %v361 = vperm.slane %v360, 0
        %v362 = vmul.f32 %v358, %v361
        %v363 = vmul.f32 %v359, %v361
        %v364 = vld [vmem:[%s1 + $0x1] sm:$0x1]
        %v365 = vperm.slane %v364, 0
        %v366 = vadd.f32 %v362, %v365
        %v367 = vadd.f32 %v363, %v365
        %v368 = vpack.c.bf16 %v367, %v366
        %v369 = vld [vmem:[%s2] sm:$0xff]
        %v370 = vld [vmem:[%s2 + $0x8] sm:$0xff]
        %v371 = vld [vmem:[%s2 + $0x10] sm:$0xff]
        %v372 = vld [vmem:[%s2 + $0x18] sm:$0xff]
        %v373 = vld [vmem:[%s2 + $0x20] sm:$0xff]
        %v374 = vld [vmem:[%s2 + $0x28] sm:$0xff]
        %v375 = vld [vmem:[%s2 + $0x30] sm:$0xff]
        %v376 = vld [vmem:[%s2 + $0x38] sm:$0xff]
        %v377 = vld [vmem:[%s2 + $0x40] sm:$0xff]
        %v378 = vld [vmem:[%s2 + $0x48] sm:$0xff]
        %v379 = vld [vmem:[%s2 + $0x50] sm:$0xff]
        %v380 = vld [vmem:[%s2 + $0x58] sm:$0xff]
        %v381 = vld [vmem:[%s2 + $0x60] sm:$0xff]
        %v382 = vld [vmem:[%s2 + $0x68] sm:$0xff]
        %v383 = vld [vmem:[%s2 + $0x70] sm:$0xff]
        %v384 = vld [vmem:[%s2 + $0x78] sm:$0xff]
        %v385 = vld [vmem:[%s2 + $0x80] sm:$0xff]
        %v386 = vld [vmem:[%s2 + $0x88] sm:$0xff]
        %v387 = vld [vmem:[%s2 + $0x90] sm:$0xff]
        %v388 = vld [vmem:[%s2 + $0x98] sm:$0xff]
        %v389 = vld [vmem:[%s2 + $0xa0] sm:$0xff]
        %v390 = vld [vmem:[%s2 + $0xa8] sm:$0xff]
        %v391 = vld [vmem:[%s2 + $0xb0] sm:$0xff]
        %v392 = vld [vmem:[%s2 + $0xb8] sm:$0xff]
        %v393 = vld [vmem:[%s2 + $0xc0] sm:$0xff]
        %v394 = vld [vmem:[%s2 + $0xc8] sm:$0xff]
        %v395 = vld [vmem:[%s2 + $0xd0] sm:$0xff]
        %v396 = vld [vmem:[%s2 + $0xd8] sm:$0xff]
        %v397 = vld [vmem:[%s2 + $0xe0] sm:$0xff]
        %v398 = vld [vmem:[%s2 + $0xe8] sm:$0xff]
        %v399 = vld [vmem:[%s2 + $0xf0] sm:$0xff]
        %v400 = vld [vmem:[%s2 + $0xf8] sm:$0xff]
        %v401 = vld [vmem:[%s3] sm:$0xf]
        %v403 = vperm.slane %v401, 0
        %v404 = vperm.slane %v401, 1
        %v405 = vperm.slane %v401, 2
        %v406 = vperm.slane %v401, 3
        %v443 = vunpack.c.l.b16 %v369
        %v444 = vunpack.c.h.b16 %v369
        %v445 = vunpack.c.l.b16 %v370
        %v446 = vunpack.c.h.b16 %v370
        %v447 = vunpack.c.l.b16 %v371
        %v448 = vunpack.c.h.b16 %v371
        %v449 = vunpack.c.l.b16 %v372
        %v450 = vunpack.c.h.b16 %v372
        %v451 = vunpack.c.l.b16 %v373
        %v452 = vunpack.c.h.b16 %v373
        %v453 = vunpack.c.l.b16 %v374
        %v454 = vunpack.c.h.b16 %v374
        %v455 = vunpack.c.l.b16 %v375
        %v456 = vunpack.c.h.b16 %v375
        %v457 = vunpack.c.l.b16 %v376
        %v458 = vunpack.c.h.b16 %v376
        %v459 = vunpack.c.l.b16 %v377
        %v460 = vunpack.c.h.b16 %v377
        %v461 = vunpack.c.l.b16 %v378
        %v462 = vunpack.c.h.b16 %v378
        %v463 = vunpack.c.l.b16 %v379
        %v464 = vunpack.c.h.b16 %v379
        %v465 = vunpack.c.l.b16 %v380
        %v466 = vunpack.c.h.b16 %v380
        %v467 = vunpack.c.l.b16 %v381
        %v468 = vunpack.c.h.b16 %v381
        %v469 = vunpack.c.l.b16 %v382
        %v470 = vunpack.c.h.b16 %v382
        %v471 = vunpack.c.l.b16 %v383
        %v472 = vunpack.c.h.b16 %v383
        %v473 = vunpack.c.l.b16 %v384
        %v474 = vunpack.c.h.b16 %v384
        %v475 = vunpack.c.l.b16 %v385
        %v476 = vunpack.c.h.b16 %v385
        %v477 = vunpack.c.l.b16 %v386
        %v478 = vunpack.c.h.b16 %v386
        %v479 = vunpack.c.l.b16 %v387
        %v480 = vunpack.c.h.b16 %v387
        %v481 = vunpack.c.l.b16 %v388
        %v482 = vunpack.c.h.b16 %v388
        %v483 = vunpack.c.l.b16 %v389
        %v484 = vunpack.c.h.b16 %v389
        %v485 = vunpack.c.l.b16 %v390
        %v486 = vunpack.c.h.b16 %v390
        %v487 = vunpack.c.l.b16 %v391
        %v488 = vunpack.c.h.b16 %v391
        %v489 = vunpack.c.l.b16 %v392
        %v490 = vunpack.c.h.b16 %v392
        %v491 = vunpack.c.l.b16 %v393
        %v492 = vunpack.c.h.b16 %v393
        %v493 = vunpack.c.l.b16 %v394
        %v494 = vunpack.c.h.b16 %v394
        %v495 = vunpack.c.l.b16 %v395
        %v496 = vunpack.c.h.b16 %v395
        %v497 = vunpack.c.l.b16 %v396
        %v498 = vunpack.c.h.b16 %v396
        %v499 = vunpack.c.l.b16 %v397
        %v500 = vunpack.c.h.b16 %v397
        %v501 = vunpack.c.l.b16 %v398
        %v502 = vunpack.c.h.b16 %v398
        %v503 = vunpack.c.l.b16 %v399
        %v504 = vunpack.c.h.b16 %v399
        %v505 = vunpack.c.l.b16 %v400
        %v506 = vunpack.c.h.b16 %v400
        %v507 = vpack.c.b16 %v447, %v443
        %v508 = vpack.c.b16 %v448, %v444
        %v509 = vpack.c.b16 %v449, %v445
        %v510 = vpack.c.b16 %v450, %v446
        %v511 = vpack.c.b16 %v455, %v451
        %v512 = vpack.c.b16 %v456, %v452
        %v513 = vpack.c.b16 %v457, %v453
        %v514 = vpack.c.b16 %v458, %v454
        %v515 = vpack.c.b16 %v463, %v459
        %v516 = vpack.c.b16 %v464, %v460
        %v517 = vpack.c.b16 %v465, %v461
        %v518 = vpack.c.b16 %v466, %v462
        %v519 = vpack.c.b16 %v471, %v467
        %v520 = vpack.c.b16 %v472, %v468
        %v521 = vpack.c.b16 %v473, %v469
        %v522 = vpack.c.b16 %v474, %v470
        %v523 = vpack.c.b16 %v479, %v475
        %v524 = vpack.c.b16 %v480, %v476
        %v525 = vpack.c.b16 %v481, %v477
        %v526 = vpack.c.b16 %v482, %v478
        %v527 = vpack.c.b16 %v487, %v483
        %v528 = vpack.c.b16 %v488, %v484
        %v529 = vpack.c.b16 %v489, %v485
        %v530 = vpack.c.b16 %v490, %v486
        %v531 = vpack.c.b16 %v495, %v491
        %v532 = vpack.c.b16 %v496, %v492
        %v533 = vpack.c.b16 %v497, %v493
        %v534 = vpack.c.b16 %v498, %v494
        %v535 = vpack.c.b16 %v503, %v499
        %v536 = vpack.c.b16 %v504, %v500
        %v537 = vpack.c.b16 %v505, %v501
        %v538 = vpack.c.b16 %v506, %v502
        %571 = vmatpush.bf16.msra.mxu0 %v535
        %572 = vmatpush.bf16.msra.mxu0 %v531
        %573 = vmatpush.bf16.msra.mxu0 %v527
        %574 = vmatpush.bf16.msra.mxu0 %v523
        %575 = vmatpush.bf16.msra.mxu0 %v519
        %576 = vmatpush.bf16.msra.mxu0 %v515
        %577 = vmatpush.bf16.msra.mxu0 %v511
        %578 = vmatpush.bf16.msra.mxu0 %v507
        %579 = vmatmul.bf16.gmra.mxu0 %v368
        %v580 = vpop.f32.mrf.mxu0
        %v581 = vadd.f32 %v403, %v580
        %v582 = vpop.f32.mrf.mxu0
        %v583 = vadd.f32 %v403, %v582
        %584 = vdwg.mxu0
        %585 = vmatpush.bf16.msra.mxu0 %v536
        %586 = vmatpush.bf16.msra.mxu0 %v532
        %587 = vmatpush.bf16.msra.mxu0 %v528
        %588 = vmatpush.bf16.msra.mxu0 %v524
        %589 = vmatpush.bf16.msra.mxu0 %v520
        %590 = vmatpush.bf16.msra.mxu0 %v516
        %591 = vmatpush.bf16.msra.mxu0 %v512
        %592 = vmatpush.bf16.msra.mxu0 %v508
        %593 = vmatmul.bf16.gmra.mxu0 %v368
        %v594 = vpop.f32.mrf.mxu0
        %v595 = vadd.f32 %v404, %v594
        %v596 = vpop.f32.mrf.mxu0
        %v597 = vadd.f32 %v404, %v596
        %598 = vdwg.mxu0
        %599 = vmatpush.bf16.msra.mxu0 %v537
        %600 = vmatpush.bf16.msra.mxu0 %v533
        %601 = vmatpush.bf16.msra.mxu0 %v529
        %602 = vmatpush.bf16.msra.mxu0 %v525
        %603 = vmatpush.bf16.msra.mxu0 %v521
        %604 = vmatpush.bf16.msra.mxu0 %v517
        %605 = vmatpush.bf16.msra.mxu0 %v513
        %606 = vmatpush.bf16.msra.mxu0 %v509
        %607 = vmatmul.bf16.gmra.mxu0 %v368
        %v608 = vpop.f32.mrf.mxu0
        %v609 = vadd.f32 %v405, %v608
        %v610 = vpop.f32.mrf.mxu0
        %v611 = vadd.f32 %v405, %v610
        %612 = vdwg.mxu0
        %613 = vmatpush.bf16.msra.mxu0 %v538
        %614 = vmatpush.bf16.msra.mxu0 %v534
        %615 = vmatpush.bf16.msra.mxu0 %v530
        %616 = vmatpush.bf16.msra.mxu0 %v526
        %617 = vmatpush.bf16.msra.mxu0 %v522
        %618 = vmatpush.bf16.msra.mxu0 %v518
        %619 = vmatpush.bf16.msra.mxu0 %v514
        %620 = vmatpush.bf16.msra.mxu0 %v510
        %621 = vmatmul.bf16.gmra.mxu0 %v368
        %v622 = vpop.f32.mrf.mxu0
        %v623 = vadd.f32 %v406, %v622
        %v624 = vpop.f32.mrf.mxu0
        %v625 = vadd.f32 %v406, %v624
        %626 = vdwg.mxu0
        %v627 = vmul.f32 %v581, 1.702
        %v628 = vmul.f32 %v595, 1.702
        %v629 = vmul.f32 %v609, 1.702
        %v630 = vmul.f32 %v623, 1.702
        %v631 = vmul.f32 %v583, 1.702
        %v632 = vmul.f32 %v597, 1.702
        %v633 = vmul.f32 %v611, 1.702
        %v634 = vmul.f32 %v625, 1.702
        %v635 = vpack.c.bf16 %v628, %v627
        %v636 = vpack.c.bf16 %v630, %v629
        %v637 = vpack.c.bf16 %v632, %v631
        %v638 = vpack.c.bf16 %v634, %v633
        %v639 = vxor.u32 %v635, 2147516416
        %v640 = vxor.u32 %v636, 2147516416
        %v641 = vxor.u32 %v637, 2147516416
        %v642 = vxor.u32 %v638, 2147516416
        %v643 = vunpack.c.l.bf16 %v639
        %v644 = vunpack.c.h.bf16 %v639
        %v645 = vunpack.c.l.bf16 %v640
        %v646 = vunpack.c.h.bf16 %v640
        %v647 = vunpack.c.l.bf16 %v641
        %v648 = vunpack.c.h.bf16 %v641
        %v649 = vunpack.c.l.bf16 %v642
        %v650 = vunpack.c.h.bf16 %v642
        %v651 = vmul.f32 %v643, 1.442695
        %v652 = vpow.pop %v651
        %v653 = vmul.f32 %v644, 1.442695
        %v654 = vpow.pop %v653
        %v655 = vmul.f32 %v645, 1.442695
        %v656 = vpow.pop %v655
        %v657 = vmul.f32 %v646, 1.442695
        %v658 = vpow.pop %v657
        %v659 = vmul.f32 %v647, 1.442695
        %v660 = vpow.pop %v659
        %v661 = vmul.f32 %v648, 1.442695
        %v662 = vpow.pop %v661
        %v663 = vmul.f32 %v649, 1.442695
        %v664 = vpow.pop %v663
        %v665 = vmul.f32 %v650, 1.442695
        %v666 = vpow.pop %v665
        %v667 = vpack.c.bf16 %v654, %v652
        %v668 = vpack.c.bf16 %v658, %v656
        %v669 = vpack.c.bf16 %v662, %v660
        %v670 = vpack.c.bf16 %v666, %v664
        %v671 = vunpack.c.l.bf16 %v667
        %v672 = vunpack.c.h.bf16 %v667
        %v673 = vunpack.c.l.bf16 %v668
        %v674 = vunpack.c.h.bf16 %v668
        %v675 = vunpack.c.l.bf16 %v669
        %v676 = vunpack.c.h.bf16 %v669
        %v677 = vunpack.c.l.bf16 %v670
        %v678 = vunpack.c.h.bf16 %v670
        %v679 = vadd.f32 %v671, 1.0
        %v680 = vadd.f32 %v672, 1.0
        %v681 = vadd.f32 %v673, 1.0
        %v682 = vadd.f32 %v674, 1.0
        %v683 = vadd.f32 %v675, 1.0
        %v684 = vadd.f32 %v676, 1.0
        %v685 = vadd.f32 %v677, 1.0
        %v686 = vadd.f32 %v678, 1.0
        %v687 = vpack.c.bf16 %v680, %v679
        %v688 = vpack.c.bf16 %v682, %v681
        %v689 = vpack.c.bf16 %v684, %v683
        %v690 = vpack.c.bf16 %v686, %v685
        %v691 = vunpack.c.h.bf16 1065369472
        %v692 = vunpack.c.l.bf16 1065369472
        %v693 = vunpack.c.h.bf16 %v687
        %v694 = vunpack.c.l.bf16 %v687
        %v695 = vrcp.pop %v693
        %v696 = vmul.f32 %v691, %v695
        %v697 = vrcp.pop %v694
        %v698 = vmul.f32 %v692, %v697
        %v699 = vpack.c.bf16 %v696, %v698
        %v700 = vunpack.c.h.bf16 %v688
        %v701 = vunpack.c.l.bf16 %v688
        %v702 = vrcp.pop %v700
        %v703 = vmul.f32 %v691, %v702
        %v704 = vrcp.pop %v701
        %v705 = vmul.f32 %v692, %v704
        %v706 = vpack.c.bf16 %v703, %v705
        %v707 = vunpack.c.h.bf16 %v689
        %v708 = vunpack.c.l.bf16 %v689
        %v709 = vrcp.pop %v707
        %v710 = vmul.f32 %v691, %v709
        %v711 = vrcp.pop %v708
        %v712 = vmul.f32 %v692, %v711
        %v713 = vpack.c.bf16 %v710, %v712
        %v714 = vunpack.c.h.bf16 %v690
        %v715 = vunpack.c.l.bf16 %v690
        %v716 = vrcp.pop %v714
        %v717 = vmul.f32 %v691, %v716
        %v718 = vrcp.pop %v715
        %v719 = vmul.f32 %v692, %v718
        %v720 = vpack.c.bf16 %v717, %v719
        %v721 = vunpack.c.l.bf16 %v699
        %v722 = vunpack.c.h.bf16 %v699
        %v723 = vunpack.c.l.bf16 %v706
        %v724 = vunpack.c.h.bf16 %v706
        %v725 = vunpack.c.l.bf16 %v713
        %v726 = vunpack.c.h.bf16 %v713
        %v727 = vunpack.c.l.bf16 %v720
        %v728 = vunpack.c.h.bf16 %v720
        %v729 = vmul.f32 %v581, %v721
        %v730 = vmul.f32 %v595, %v722
        %v731 = vmul.f32 %v609, %v723
        %v732 = vmul.f32 %v623, %v724
        %v733 = vmul.f32 %v583, %v725
        %v734 = vmul.f32 %v597, %v726
        %v735 = vmul.f32 %v611, %v727
        %v736 = vmul.f32 %v625, %v728
        %v737 = vpack.c.bf16 %v733, %v729
        %v738 = vpack.c.bf16 %v734, %v730
        %v739 = vpack.c.bf16 %v735, %v731
        %v740 = vpack.c.bf16 %v736, %v732
        %v741 = vld [vmem:[#allocation2] sm:$0xf]
        %v742 = vld [vmem:[#allocation2 + $0x4] sm:$0xf]
        %v743 = vld [vmem:[#allocation2 + $0x8] sm:$0xf]
        %v744 = vld [vmem:[#allocation2 + $0xc] sm:$0xf]
        %v745 = vld [vmem:[#allocation2 + $0x10] sm:$0xf]
        %v746 = vld [vmem:[#allocation2 + $0x14] sm:$0xf]
        %v747 = vld [vmem:[#allocation2 + $0x18] sm:$0xf]
        %v748 = vld [vmem:[#allocation2 + $0x1c] sm:$0xf]
        %v749 = vld [vmem:[#allocation2 + $0x20] sm:$0xf]
        %v750 = vld [vmem:[#allocation2 + $0x24] sm:$0xf]
        %v751 = vld [vmem:[#allocation2 + $0x28] sm:$0xf]
        %v752 = vld [vmem:[#allocation2 + $0x2c] sm:$0xf]
        %v753 = vld [vmem:[#allocation2 + $0x30] sm:$0xf]
        %v754 = vld [vmem:[#allocation2 + $0x34] sm:$0xf]
        %v755 = vld [vmem:[#allocation2 + $0x38] sm:$0xf]
        %v756 = vld [vmem:[#allocation2 + $0x3c] sm:$0xf]
        %v757 = vld [vmem:[#allocation2 + $0x40] sm:$0xf]
        %v758 = vld [vmem:[#allocation2 + $0x44] sm:$0xf]
        %v759 = vld [vmem:[#allocation2 + $0x48] sm:$0xf]
        %v760 = vld [vmem:[#allocation2 + $0x4c] sm:$0xf]
        %v761 = vld [vmem:[#allocation2 + $0x50] sm:$0xf]
        %v762 = vld [vmem:[#allocation2 + $0x54] sm:$0xf]
        %v763 = vld [vmem:[#allocation2 + $0x58] sm:$0xf]
        %v764 = vld [vmem:[#allocation2 + $0x5c] sm:$0xf]
        %v765 = vld [vmem:[#allocation2 + $0x60] sm:$0xf]
        %v766 = vld [vmem:[#allocation2 + $0x64] sm:$0xf]
        %v767 = vld [vmem:[#allocation2 + $0x68] sm:$0xf]
        %v768 = vld [vmem:[#allocation2 + $0x6c] sm:$0xf]
        %v769 = vld [vmem:[#allocation2 + $0x70] sm:$0xf]
        %v770 = vld [vmem:[#allocation2 + $0x74] sm:$0xf]
        %v771 = vld [vmem:[#allocation2 + $0x78] sm:$0xf]
        %v772 = vld [vmem:[#allocation2 + $0x7c] sm:$0xf]
        %v773 = vld [vmem:[#allocation2 + $0x80] sm:$0xf]
        %v774 = vld [vmem:[#allocation2 + $0x84] sm:$0xf]
        %v775 = vld [vmem:[#allocation2 + $0x88] sm:$0xf]
        %v776 = vld [vmem:[#allocation2 + $0x8c] sm:$0xf]
        %v777 = vld [vmem:[#allocation2 + $0x90] sm:$0xf]
        %v778 = vld [vmem:[#allocation2 + $0x94] sm:$0xf]
        %v779 = vld [vmem:[#allocation2 + $0x98] sm:$0xf]
        %v780 = vld [vmem:[#allocation2 + $0x9c] sm:$0xf]
        %v781 = vld [vmem:[#allocation2 + $0xa0] sm:$0xf]
        %v782 = vld [vmem:[#allocation2 + $0xa4] sm:$0xf]
        %v783 = vld [vmem:[#allocation2 + $0xa8] sm:$0xf]
        %v784 = vld [vmem:[#allocation2 + $0xac] sm:$0xf]
        %v785 = vld [vmem:[#allocation2 + $0xb0] sm:$0xf]
        %v786 = vld [vmem:[#allocation2 + $0xb4] sm:$0xf]
        %v787 = vld [vmem:[#allocation2 + $0xb8] sm:$0xf]
        %v788 = vld [vmem:[#allocation2 + $0xbc] sm:$0xf]
        %v789 = vld [vmem:[#allocation2 + $0xc0] sm:$0xf]
        %v790 = vld [vmem:[#allocation2 + $0xc4] sm:$0xf]
        %v791 = vld [vmem:[#allocation2 + $0xc8] sm:$0xf]
        %v792 = vld [vmem:[#allocation2 + $0xcc] sm:$0xf]
        %v793 = vld [vmem:[#allocation2 + $0xd0] sm:$0xf]
        %v794 = vld [vmem:[#allocation2 + $0xd4] sm:$0xf]
        %v795 = vld [vmem:[#allocation2 + $0xd8] sm:$0xf]
        %v796 = vld [vmem:[#allocation2 + $0xdc] sm:$0xf]
        %v797 = vld [vmem:[#allocation2 + $0xe0] sm:$0xf]
        %v798 = vld [vmem:[#allocation2 + $0xe4] sm:$0xf]
        %v799 = vld [vmem:[#allocation2 + $0xe8] sm:$0xf]
        %v800 = vld [vmem:[#allocation2 + $0xec] sm:$0xf]
        %v801 = vld [vmem:[#allocation2 + $0xf0] sm:$0xf]
        %v802 = vld [vmem:[#allocation2 + $0xf4] sm:$0xf]
        %v803 = vld [vmem:[#allocation2 + $0xf8] sm:$0xf]
        %v804 = vld [vmem:[#allocation2 + $0xfc] sm:$0xf]
        %v805 = vld [vmem:[%s5] sm:$0x1]
        %v807 = vperm.slane %v805, 0
        %v873 = vunpack.c.l.b16 %v741
        %v874 = vunpack.c.l.b16 %v742
        %v875 = vunpack.c.l.b16 %v743
        %v876 = vunpack.c.l.b16 %v744
        %v877 = vunpack.c.l.b16 %v745
        %v878 = vunpack.c.l.b16 %v746
        %v879 = vunpack.c.l.b16 %v747
        %v880 = vunpack.c.l.b16 %v748
        %v881 = vunpack.c.l.b16 %v749
        %v882 = vunpack.c.l.b16 %v750
        %v883 = vunpack.c.l.b16 %v751
        %v884 = vunpack.c.l.b16 %v752
        %v885 = vunpack.c.l.b16 %v753
        %v886 = vunpack.c.l.b16 %v754
        %v887 = vunpack.c.l.b16 %v755
        %v888 = vunpack.c.l.b16 %v756
        %v889 = vunpack.c.l.b16 %v757
        %v890 = vunpack.c.l.b16 %v758
        %v891 = vunpack.c.l.b16 %v759
        %v892 = vunpack.c.l.b16 %v760
        %v893 = vunpack.c.l.b16 %v761
        %v894 = vunpack.c.l.b16 %v762
        %v895 = vunpack.c.l.b16 %v763
        %v896 = vunpack.c.l.b16 %v764
        %v897 = vunpack.c.l.b16 %v765
        %v898 = vunpack.c.l.b16 %v766
        %v899 = vunpack.c.l.b16 %v767
        %v900 = vunpack.c.l.b16 %v768
        %v901 = vunpack.c.l.b16 %v769
        %v902 = vunpack.c.l.b16 %v770
        %v903 = vunpack.c.l.b16 %v771
        %v904 = vunpack.c.l.b16 %v772
        %v905 = vunpack.c.l.b16 %v773
        %v906 = vunpack.c.l.b16 %v774
        %v907 = vunpack.c.l.b16 %v775
        %v908 = vunpack.c.l.b16 %v776
        %v909 = vunpack.c.l.b16 %v777
        %v910 = vunpack.c.l.b16 %v778
        %v911 = vunpack.c.l.b16 %v779
        %v912 = vunpack.c.l.b16 %v780
        %v913 = vunpack.c.l.b16 %v781
        %v914 = vunpack.c.l.b16 %v782
        %v915 = vunpack.c.l.b16 %v783
        %v916 = vunpack.c.l.b16 %v784
        %v917 = vunpack.c.l.b16 %v785
        %v918 = vunpack.c.l.b16 %v786
        %v919 = vunpack.c.l.b16 %v787
        %v920 = vunpack.c.l.b16 %v788
        %v921 = vunpack.c.l.b16 %v789
        %v922 = vunpack.c.l.b16 %v790
        %v923 = vunpack.c.l.b16 %v791
        %v924 = vunpack.c.l.b16 %v792
        %v925 = vunpack.c.l.b16 %v793
        %v926 = vunpack.c.l.b16 %v794
        %v927 = vunpack.c.l.b16 %v795
        %v928 = vunpack.c.l.b16 %v796
        %v929 = vunpack.c.l.b16 %v797
        %v930 = vunpack.c.l.b16 %v798
        %v931 = vunpack.c.l.b16 %v799
        %v932 = vunpack.c.l.b16 %v800
        %v933 = vunpack.c.l.b16 %v801
        %v934 = vunpack.c.l.b16 %v802
        %v935 = vunpack.c.l.b16 %v803
        %v936 = vunpack.c.l.b16 %v804
        %v937 = vpack.c.b16 %v874, %v873
        %v938 = vpack.c.b16 %v876, %v875
        %v939 = vpack.c.b16 %v878, %v877
        %v940 = vpack.c.b16 %v880, %v879
        %v941 = vpack.c.b16 %v882, %v881
        %v942 = vpack.c.b16 %v884, %v883
        %v943 = vpack.c.b16 %v886, %v885
        %v944 = vpack.c.b16 %v888, %v887
        %v945 = vpack.c.b16 %v890, %v889
        %v946 = vpack.c.b16 %v892, %v891
        %v947 = vpack.c.b16 %v894, %v893
        %v948 = vpack.c.b16 %v896, %v895
        %v949 = vpack.c.b16 %v898, %v897
        %v950 = vpack.c.b16 %v900, %v899
        %v951 = vpack.c.b16 %v902, %v901
        %v952 = vpack.c.b16 %v904, %v903
        %v953 = vpack.c.b16 %v906, %v905
        %v954 = vpack.c.b16 %v908, %v907
        %v955 = vpack.c.b16 %v910, %v909
        %v956 = vpack.c.b16 %v912, %v911
        %v957 = vpack.c.b16 %v914, %v913
        %v958 = vpack.c.b16 %v916, %v915
        %v959 = vpack.c.b16 %v918, %v917
        %v960 = vpack.c.b16 %v920, %v919
        %v961 = vpack.c.b16 %v922, %v921
        %v962 = vpack.c.b16 %v924, %v923
        %v963 = vpack.c.b16 %v926, %v925
        %v964 = vpack.c.b16 %v928, %v927
        %v965 = vpack.c.b16 %v930, %v929
        %v966 = vpack.c.b16 %v932, %v931
        %v967 = vpack.c.b16 %v934, %v933
        %v968 = vpack.c.b16 %v936, %v935
        %1001 = vmatpush.bf16.msra.mxu0 %v944
        %1002 = vmatpush.bf16.msra.mxu0 %v943
        %1003 = vmatpush.bf16.msra.mxu0 %v942
        %1004 = vmatpush.bf16.msra.mxu0 %v941
        %1005 = vmatpush.bf16.msra.mxu0 %v940
        %1006 = vmatpush.bf16.msra.mxu0 %v939
        %1007 = vmatpush.bf16.msra.mxu0 %v938
        %1008 = vmatpush.bf16.msra.mxu0 %v937
        %1009 = vmatmul.bf16.gmra.mxu0 %v737
        %v1010 = vpop.f32.mrf.mxu0
        %v1011 = vadd.f32 %v807, %v1010
        %v1012 = vpop.f32.mrf.mxu0
        %v1013 = vadd.f32 %v807, %v1012
        %1014 = vdwg.mxu0
        %1015 = vmatpush.bf16.msra.mxu0 %v952
        %1016 = vmatpush.bf16.msra.mxu0 %v951
        %1017 = vmatpush.bf16.msra.mxu0 %v950
        %1018 = vmatpush.bf16.msra.mxu0 %v949
        %1019 = vmatpush.bf16.msra.mxu0 %v948
        %1020 = vmatpush.bf16.msra.mxu0 %v947
        %1021 = vmatpush.bf16.msra.mxu0 %v946
        %1022 = vmatpush.bf16.msra.mxu0 %v945
        %1023 = vmatmul.bf16.gmra.mxu0 %v738
        %v1024 = vpop.f32.mrf.mxu0
        %v1025 = vadd.f32 %v1011, %v1024
        %v1026 = vpop.f32.mrf.mxu0
        %v1027 = vadd.f32 %v1013, %v1026
        %1028 = vdwg.mxu0
        %1029 = vmatpush.bf16.msra.mxu0 %v960
        %1030 = vmatpush.bf16.msra.mxu0 %v959
        %1031 = vmatpush.bf16.msra.mxu0 %v958
        %1032 = vmatpush.bf16.msra.mxu0 %v957
        %1033 = vmatpush.bf16.msra.mxu0 %v956
        %1034 = vmatpush.bf16.msra.mxu0 %v955
        %1035 = vmatpush.bf16.msra.mxu0 %v954
        %1036 = vmatpush.bf16.msra.mxu0 %v953
        %1037 = vmatmul.bf16.gmra.mxu0 %v739
        %v1038 = vpop.f32.mrf.mxu0
        %v1039 = vadd.f32 %v1025, %v1038
        %v1040 = vpop.f32.mrf.mxu0
        %v1041 = vadd.f32 %v1027, %v1040
        %1042 = vdwg.mxu0
        %1043 = vmatpush.bf16.msra.mxu0 %v968
        %1044 = vmatpush.bf16.msra.mxu0 %v967
        %1045 = vmatpush.bf16.msra.mxu0 %v966
        %1046 = vmatpush.bf16.msra.mxu0 %v965
        %1047 = vmatpush.bf16.msra.mxu0 %v964
        %1048 = vmatpush.bf16.msra.mxu0 %v963
        %1049 = vmatpush.bf16.msra.mxu0 %v962
        %1050 = vmatpush.bf16.msra.mxu0 %v961
        %1051 = vmatmul.bf16.gmra.mxu0 %v740
        %v1052 = vpop.f32.mrf.mxu0
        %v1053 = vadd.f32 %v1039, %v1052
        %v1054 = vpop.f32.mrf.mxu0
        %v1055 = vadd.f32 %v1041, %v1054
        %1056 = vdwg.mxu0
        %v1057 = vadd.f32 %v311, %v1053
        %v1058 = vadd.f32 %v312, %v1055
        %v1059 = vpack.c.bf16 %v1057, %v1057
        %v1060 = vpack.c.bf16 %v1058, %v1058
        %1061 = vst [vmem:[%s306] sm:$0xf] %v1059
        %1062 = vst [vmem:[%s306 + $0x4] sm:$0xf] %v1060
        %s1063 = smul.u32 2, %s23
        %p1064 = scmp.lt.s32.totalorder %s22, 1
        %s1065 = scalar_select %p1064, %s22, 1
        %p1066 = scmp.lt.s32.totalorder %s1063, 1
        %s1067 = scalar_select %p1066, %s1063, 1
        %s1068 = smul.addr %s1065, 2
        %s1069 = sadd.s32 %s1067, %s1068
        %s1070 = smul.addr %s1069, 4
        %s1071 = scalar_lea.vmem %s6, %s1070
        // Predicated region
        $region49: #{feature_decoder_forward.8} parent=43 // pred_check
          %p1072 = pneg %p183
        $region50: #{feature_decoder_forward.8} parent=43 // pred_check_branch
          %1074 = sbr.rel (%p1072) target = $region52
        $region51: #{feature_decoder_forward.8} parent=43 // pred_region
          %s1075 = smul.u32 2, %s23
        $region52: #{feature_decoder_forward.8} parent=43 // pred_fallthru
          _
      $region44: #{feature_decoder_forward.8} parent=5 // pred_fallthru
        _
      %p1076 = scmp.le.s32.totalorder 2, %s13
      // Predicated region
      $region53: #{feature_decoder_forward.8} parent=5 // pred_check
        %p1077 = pneg %p1076
      $region54: #{feature_decoder_forward.8} parent=5 // pred_check_branch
        %1079 = sbr.rel (%p1077) target = $region56
      $region55: #{feature_decoder_forward.8} parent=5 // pred_region
        %s1080 = ssub.s32 %s13, 2
        // Predicated region
        $region57: #{feature_decoder_forward.8} parent=55 // pred_check
          %p1081 = pneg %p189
        $region58: #{feature_decoder_forward.8} parent=55 // pred_check_branch
          %1083 = sbr.rel (%p1081) target = $region60
        $region59: #{feature_decoder_forward.8} parent=55 // pred_region
          %s1084 = smul.u32 2, %s25
          %p1085 = scmp.lt.s32.totalorder %s24, 1
          %s1086 = scalar_select %p1085, %s24, 1
          %p1087 = scmp.lt.s32.totalorder %s1084, 1
          %s1088 = scalar_select %p1087, %s1084, 1
          %s1089 = smul.addr %s1086, 2
          %s1090 = sadd.s32 %s1088, %s1089
          %s1091 = smul.addr %s1090, 4
          %s1092 = scalar_lea.vmem %s6, %s1091
        $region60: #{feature_decoder_forward.8} parent=55 // pred_fallthru
          _
      $region56: #{feature_decoder_forward.8} parent=5 // pred_fallthru
        _
    $region6: #{feature_decoder_forward.8} parent=1 // loop_footer
      %s17 = sadd.s32 1, %s13
    $region7: #{feature_decoder_forward.8} parent=1 // loop_footer_branch
      %12 = sbr.rel target = $region3
    $region8: #{feature_decoder_forward.8} parent=1 // loop_exit
      _
    %1093 = vsyncpa [#allocation3], 1
    %s1094 = scalar_lea.sflag [#allocation3], 1
    %1095 = vsyncpa %s1094, 1

// kernel: feature_decoder_forward.6
$region0: #{feature_decoder_forward.6}
  #allocation0 [shape = 'u32[]', space=smem, size = 0x4, offset = 0x4, fixed_abs, tag = 'smem constant byte address 0x4 - core index']
  #allocation1 [shape = 'u32[72,128]{1,0:T(1,128)}', space=vmem, size = 0x9000, scoped, tag = 'internal scratch']
  %s0 = inlined_call_operand.hbm [shape: f32[2,3,16,64], index: 0, kind: input, shape index: {}]
  %s1 = inlined_call_operand.hbm [shape: bf16[3,64,128], index: 1, kind: input, shape index: {}]
  %s2 = inlined_call_operand.vmem [shape: f32[3,1,128], index: 2, kind: input, shape index: {}]
  %s3 = inlined_call_operand.hbm [shape: bf16[3,128,128], index: 3, kind: input, shape index: {}]
  %s4 = inlined_call_operand.vmem [shape: f32[3,1,128], index: 4, kind: input, shape index: {}]
  %s5 = inlined_call_operand.hbm [shape: bf16[3,128,128], index: 5, kind: input, shape index: {}]
  %s6 = inlined_call_operand.vmem [shape: f32[1,128], index: 6, kind: input, shape index: {}]
  %s7 = inlined_call_operand.hbm [shape: f32[2,16,128], index: 7, kind: output, shape index: {0}]
  %s8 = inlined_call_operand.vmem [shape: bf16[2,16,128], index: 8, kind: output, shape index: {1}]
  %9 = xla_tuple %s7, %s8
  %s10 = sld [smem:[#allocation0]]
  $region85: #{feature_decoder_forward.6} parent=0
    _
  %s12 = ssub.s32 1, %s10
  %s13 = scalar_select 0, %s12, %s10
  $region1: #{feature_decoder_forward.6} parent=0
    #allocation2 [shape = 'u8[49152]{0}', space=vmem, size = 0xc000, scoped, tag = 'input window, operand 0']
    #allocation3 [shape = 's32[2]{0}', space=sflag, size = 0x8, scoped, tag = 'scoped memory for feature_decoder_forward.6']
    #allocation4 [shape = 's32[2]{0}', space=sflag, size = 0x8, scoped, tag = 'scoped memory for feature_decoder_forward.6']
    #allocation5 [shape = 'u8[49152]{0}', space=vmem, size = 0xc000, scoped, tag = 'input window, operand 1, single buffered']
    #allocation6 [shape = 's32[1]{0}', space=sflag, size = 0x4, scoped, tag = 'scoped memory for feature_decoder_forward.6']
    #allocation7 [shape = 'u8[98304]{0}', space=vmem, size = 0x18000, scoped, tag = 'input window, operand 3, single buffered']
    #allocation8 [shape = 'u8[98304]{0}', space=vmem, size = 0x18000, scoped, tag = 'input window, operand 5, single buffered']
    #allocation9 [shape = 's32[1]{0}', space=sflag, size = 0x4, scoped, tag = 'scoped memory for feature_decoder_forward.6']
    #allocation10 [shape = 'u8[16384]{0}', space=vmem, size = 0x4000, scoped, tag = 'output window, operand 0']
    %14 = vsyncpa [#allocation3], 0
    %s15 = scalar_lea.sflag [#allocation3], 1
    %16 = vsyncpa %s15, 0
    %17 = vsyncpa [#allocation6], 0
    %18 = vsyncpa [#allocation9], 0
    %19 = vsyncpa [#allocation4], 0
    %s20 = scalar_lea.sflag [#allocation4], 1
    %21 = vsyncpa %s20, 0
    loop: start=0, step=1, limit=4
    $region2: #{feature_decoder_forward.6} parent=1 // loop_pre_header
      _
    $region3: #{feature_decoder_forward.6} parent=1 // loop_header
      %s23 = sphi 0, %s27
      %p24 = scmp.ge.s32.totalorder %s23, 4
      %s30 = sphi 0, %s42
      %s31 = sphi 0, %s38
      %s32 = sphi 0, %s30
      %s33 = sphi 0, %s31
      %s34 = sphi 0, %s32
      %s35 = sphi 0, %s33
      %s47 = sphi 0, %s49
      %s50 = sphi 0, %s47
      %s51 = sphi 0, %s50
      %s67 = sphi 0, %s51
      %s71 = sphi 0, %s71
      %s73 = sphi 0, %s71
      %s74 = sphi 0, %s73
      %s88 = sphi 0, %s74
      %s92 = sphi 0, %s92
      %s94 = sphi 0, %s92
      %s95 = sphi 0, %s94
      %s109 = sphi 0, %s95
      %s113 = sphi 0, %s113
      %s115 = sphi 0, %s113
      %s116 = sphi 0, %s115
      %s130 = sphi 0, %s116
      %s134 = sphi 0, %s134
      %s136 = sphi 0, %s134
      %s137 = sphi 0, %s136
      %s151 = sphi 0, %s137
      %s155 = sphi 0, %s155
      %s157 = sphi 0, %s155
      %s158 = sphi 0, %s157
      %s172 = sphi 0, %s158
      %s176 = sphi 0, %s176
      %s178 = sphi 0, %s176
      %s179 = sphi 0, %s178
      %s193 = sphi 0, %s179
      %s201 = sphi 0, %s203
      %s204 = sphi 0, %s201
      %s205 = sphi 0, %s204
      %s221 = sphi 0, %s205
      %s229 = sphi 0, %s231
      %s232 = sphi 0, %s229
      %s233 = sphi 0, %s232
      %s249 = sphi 0, %s233
    $region4: #{feature_decoder_forward.6} parent=1 // loop_header_branch
      %26 = sbr.rel (%p24) target = $region8
    $region5: #{feature_decoder_forward.6} parent=1 // loop_body
      %s28 = ssub.s32 %s23, 1
      %s29 = ssub.s32 %s23, 2
      %s36 = sadd.s32 1, %s31
      %p37 = scmp.ge.s32.totalorder %s36, 1
      %s38 = scalar_select %p37, 0, %s36
      %s39 = sadd.s32 1, %s30
      %s40 = scalar_select %p37, %s39, %s30
      %p41 = scmp.ge.s32.totalorder %s40, 2
      %s42 = scalar_select %p41, 0, %s40
      %s43 = ssub.s32 %s30, %s42
      %s44 = ssub.s32 %s31, %s38
      %s45 = sor.u32 %s43, %s44
      %p46 = scmp.eq.s32.totalorder %s45, 0
      %s48 = sadd.s32 %s47, 1
      %s49 = scalar_select %p46, %s47, %s48
      %p52 = pneg %p46
      %p53 = scmp.eq.s32.totalorder %s23, 1
      %p54 = por %p52, %p53
      %p55 = scmp.ne.s32.totalorder %s47, %s50
      %p56 = scmp.eq.s32.totalorder %s23, 0
      %p57 = por %p55, %p56
      %p58 = scmp.ne.s32.totalorder %s47, %s50
      %p59 = scmp.eq.s32.totalorder %s28, 1
      %p60 = por %p58, %p59
      %p61 = scmp.ne.s32.totalorder %s50, %s51
      %p62 = scmp.eq.s32.totalorder %s28, 0
      %p63 = por %p61, %p62
      %p64 = scmp.ne.s32.totalorder %s50, %s51
      %p65 = scmp.eq.s32.totalorder %s29, 1
      %p66 = por %p64, %p65
      %p68 = scmp.ne.s32.totalorder %s51, %s67
      %p69 = scmp.eq.s32.totalorder %s29, 0
      %p70 = por %p68, %p69
      %s72 = sadd.s32 %s71, 1
      %p75 = scmp.eq.s32.totalorder %s23, 1
      %p76 = scmp.ne.s32.totalorder %s71, %s73
      %p77 = scmp.eq.s32.totalorder %s23, 0
      %p78 = por %p76, %p77
      %p79 = scmp.ne.s32.totalorder %s71, %s73
      %p80 = scmp.eq.s32.totalorder %s28, 1
      %p81 = por %p79, %p80
      %p82 = scmp.ne.s32.totalorder %s73, %s74
      %p83 = scmp.eq.s32.totalorder %s28, 0
      %p84 = por %p82, %p83
      %p85 = scmp.ne.s32.totalorder %s73, %s74
      %p86 = scmp.eq.s32.totalorder %s29, 1
      %p87 = por %p85, %p86
      %p89 = scmp.ne.s32.totalorder %s74, %s88
      %p90 = scmp.eq.s32.totalorder %s29, 0
      %p91 = por %p89, %p90
      %s93 = sadd.s32 %s92, 1
      %p96 = scmp.eq.s32.totalorder %s23, 1
      %p97 = scmp.ne.s32.totalorder %s92, %s94
      %p98 = scmp.eq.s32.totalorder %s23, 0
      %p99 = por %p97, %p98
      %p100 = scmp.ne.s32.totalorder %s92, %s94
      %p101 = scmp.eq.s32.totalorder %s28, 1
      %p102 = por %p100, %p101
      %p103 = scmp.ne.s32.totalorder %s94, %s95
      %p104 = scmp.eq.s32.totalorder %s28, 0
      %p105 = por %p103, %p104
      %p106 = scmp.ne.s32.totalorder %s94, %s95
      %p107 = scmp.eq.s32.totalorder %s29, 1
      %p108 = por %p106, %p107
      %p110 = scmp.ne.s32.totalorder %s95, %s109
      %p111 = scmp.eq.s32.totalorder %s29, 0
      %p112 = por %p110, %p111
      %s114 = sadd.s32 %s113, 1
      %p117 = scmp.eq.s32.totalorder %s23, 1
      %p118 = scmp.ne.s32.totalorder %s113, %s115
      %p119 = scmp.eq.s32.totalorder %s23, 0
      %p120 = por %p118, %p119
      %p121 = scmp.ne.s32.totalorder %s113, %s115
      %p122 = scmp.eq.s32.totalorder %s28, 1
      %p123 = por %p121, %p122
      %p124 = scmp.ne.s32.totalorder %s115, %s116
      %p125 = scmp.eq.s32.totalorder %s28, 0
      %p126 = por %p124, %p125
      %p127 = scmp.ne.s32.totalorder %s115, %s116
      %p128 = scmp.eq.s32.totalorder %s29, 1
      %p129 = por %p127, %p128
      %p131 = scmp.ne.s32.totalorder %s116, %s130
      %p132 = scmp.eq.s32.totalorder %s29, 0
      %p133 = por %p131, %p132
      %s135 = sadd.s32 %s134, 1
      %p138 = scmp.eq.s32.totalorder %s23, 1
      %p139 = scmp.ne.s32.totalorder %s134, %s136
      %p140 = scmp.eq.s32.totalorder %s23, 0
      %p141 = por %p139, %p140
      %p142 = scmp.ne.s32.totalorder %s134, %s136
      %p143 = scmp.eq.s32.totalorder %s28, 1
      %p144 = por %p142, %p143
      %p145 = scmp.ne.s32.totalorder %s136, %s137
      %p146 = scmp.eq.s32.totalorder %s28, 0
      %p147 = por %p145, %p146
      %p148 = scmp.ne.s32.totalorder %s136, %s137
      %p149 = scmp.eq.s32.totalorder %s29, 1
      %p150 = por %p148, %p149
      %p152 = scmp.ne.s32.totalorder %s137, %s151
      %p153 = scmp.eq.s32.totalorder %s29, 0
      %p154 = por %p152, %p153
      %s156 = sadd.s32 %s155, 1
      %p159 = scmp.eq.s32.totalorder %s23, 1
      %p160 = scmp.ne.s32.totalorder %s155, %s157
      %p161 = scmp.eq.s32.totalorder %s23, 0
      %p162 = por %p160, %p161
      %p163 = scmp.ne.s32.totalorder %s155, %s157
      %p164 = scmp.eq.s32.totalorder %s28, 1
      %p165 = por %p163, %p164
      %p166 = scmp.ne.s32.totalorder %s157, %s158
      %p167 = scmp.eq.s32.totalorder %s28, 0
      %p168 = por %p166, %p167
      %p169 = scmp.ne.s32.totalorder %s157, %s158
      %p170 = scmp.eq.s32.totalorder %s29, 1
      %p171 = por %p169, %p170
      %p173 = scmp.ne.s32.totalorder %s158, %s172
      %p174 = scmp.eq.s32.totalorder %s29, 0
      %p175 = por %p173, %p174
      %s177 = sadd.s32 %s176, 1
      %p180 = scmp.eq.s32.totalorder %s23, 1
      %p181 = scmp.ne.s32.totalorder %s176, %s178
      %p182 = scmp.eq.s32.totalorder %s23, 0
      %p183 = por %p181, %p182
      %p184 = scmp.ne.s32.totalorder %s176, %s178
      %p185 = scmp.eq.s32.totalorder %s28, 1
      %p186 = por %p184, %p185
      %p187 = scmp.ne.s32.totalorder %s178, %s179
      %p188 = scmp.eq.s32.totalorder %s28, 0
      %p189 = por %p187, %p188
      %p190 = scmp.ne.s32.totalorder %s178, %s179
      %p191 = scmp.eq.s32.totalorder %s29, 1
      %p192 = por %p190, %p191
      %p194 = scmp.ne.s32.totalorder %s179, %s193
      %p195 = scmp.eq.s32.totalorder %s29, 0
      %p196 = por %p194, %p195
      %s197 = ssub.s32 %s30, %s42
      %s198 = ssub.s32 %s31, %s38
      %s199 = sor.u32 %s197, %s198
      %p200 = scmp.eq.s32.totalorder %s199, 0
      %s202 = sadd.s32 %s201, 1
      %s203 = scalar_select %p200, %s201, %s202
      %p206 = pneg %p200
      %p207 = scmp.eq.s32.totalorder %s23, 1
      %p208 = por %p206, %p207
      %p209 = scmp.ne.s32.totalorder %s201, %s204
      %p210 = scmp.eq.s32.totalorder %s23, 0
      %p211 = por %p209, %p210
      %p212 = scmp.ne.s32.totalorder %s201, %s204
      %p213 = scmp.eq.s32.totalorder %s28, 1
      %p214 = por %p212, %p213
      %p215 = scmp.ne.s32.totalorder %s204, %s205
      %p216 = scmp.eq.s32.totalorder %s28, 0
      %p217 = por %p215, %p216
      %p218 = scmp.ne.s32.totalorder %s204, %s205
      %p219 = scmp.eq.s32.totalorder %s29, 1
      %p220 = por %p218, %p219
      %p222 = scmp.ne.s32.totalorder %s205, %s221
      %p223 = scmp.eq.s32.totalorder %s29, 0
      %p224 = por %p222, %p223
      %s225 = ssub.s32 %s30, %s42
      %s226 = ssub.s32 %s31, %s38
      %s227 = sor.u32 %s225, %s226
      %p228 = scmp.eq.s32.totalorder %s227, 0
      %s230 = sadd.s32 %s229, 1
      %s231 = scalar_select %p228, %s229, %s230
      %p234 = pneg %p228
      %p235 = scmp.eq.s32.totalorder %s23, 1
      %p236 = por %p234, %p235
      %p237 = scmp.ne.s32.totalorder %s229, %s232
      %p238 = scmp.eq.s32.totalorder %s23, 0
      %p239 = por %p237, %p238
      %p240 = scmp.ne.s32.totalorder %s229, %s232
      %p241 = scmp.eq.s32.totalorder %s28, 1
      %p242 = por %p240, %p241
      %p243 = scmp.ne.s32.totalorder %s232, %s233
      %p244 = scmp.eq.s32.totalorder %s28, 0
      %p245 = por %p243, %p244
      %p246 = scmp.ne.s32.totalorder %s232, %s233
      %p247 = scmp.eq.s32.totalorder %s29, 1
      %p248 = por %p246, %p247
      %p250 = scmp.ne.s32.totalorder %s233, %s249
      %p251 = scmp.eq.s32.totalorder %s29, 0
      %p252 = por %p250, %p251
      %p253 = scmp.le.s32.totalorder 1, %s23
      %p254 = scmp.lt.s32.totalorder %s23, 3
      %p255 = pnand %p253, %p254
      %p256 = pneg %p255
      // Predicated region
      $region9: #{feature_decoder_forward.6} parent=5 // pred_check
        _
      $region10: #{feature_decoder_forward.6} parent=5 // pred_check_branch
        %258 = sbr.rel (%p255) target = $region12
      $region11: #{feature_decoder_forward.6} parent=5 // pred_region
        %s259 = ssub.s32 %s23, 1
        // Predicated region
        $region13: #{feature_decoder_forward.6} parent=11 // pred_check
          %p260 = pneg %p84
        $region14: #{feature_decoder_forward.6} parent=11 // pred_check_branch
          %262 = sbr.rel (%p260) target = $region16
        $region15: #{feature_decoder_forward.6} parent=11 // pred_region
          %264 = vsyncadd [#allocation6], 0
          %s265 = sshll.u32 %s1, 4
          %s266 = int_to_ptr.hbm [resolvable:$true] %s265
          %s267 = sshll.u32 [#allocation5], 4
          %s268 = int_to_ptr.vmem [resolvable:$true] %s267
          %273 = dma.hbm_to_vmem [thread:$0]  %s266, 1536, %s268, [#allocation6], 64, 64, 4
        $region16: #{feature_decoder_forward.6} parent=11 // pred_fallthru
          _
        // Predicated region
        $region17: #{feature_decoder_forward.6} parent=11 // pred_check
          %p274 = pneg %p105
        $region18: #{feature_decoder_forward.6} parent=11 // pred_check_branch
          %276 = sbr.rel (%p274) target = $region20
        $region19: #{feature_decoder_forward.6} parent=11 // pred_region
          _
        $region20: #{feature_decoder_forward.6} parent=11 // pred_fallthru
          _
        // Predicated region
        $region21: #{feature_decoder_forward.6} parent=11 // pred_check
          %p277 = pneg %p126
        $region22: #{feature_decoder_forward.6} parent=11 // pred_check_branch
          %279 = sbr.rel (%p277) target = $region24
        $region23: #{feature_decoder_forward.6} parent=11 // pred_region
          %281 = vsyncadd [#allocation6], 0
          %s282 = sshll.u32 %s3, 4
          %s283 = int_to_ptr.hbm [resolvable:$true] %s282
          %s284 = sshll.u32 [#allocation7], 4
          %s285 = int_to_ptr.vmem [resolvable:$true] %s284
          %290 = dma.hbm_to_vmem [thread:$0]  %s283, 3072, %s285, [#allocation6], 64, 64, 4
        $region24: #{feature_decoder_forward.6} parent=11 // pred_fallthru
          _
        // Predicated region
        $region25: #{feature_decoder_forward.6} parent=11 // pred_check
          %p291 = pneg %p147
        $region26: #{feature_decoder_forward.6} parent=11 // pred_check_branch
          %293 = sbr.rel (%p291) target = $region28
        $region27: #{feature_decoder_forward.6} parent=11 // pred_region
          _
        $region28: #{feature_decoder_forward.6} parent=11 // pred_fallthru
          _
        // Predicated region
        $region29: #{feature_decoder_forward.6} parent=11 // pred_check
          %p294 = pneg %p168
        $region30: #{feature_decoder_forward.6} parent=11 // pred_check_branch
          %296 = sbr.rel (%p294) target = $region32
        $region31: #{feature_decoder_forward.6} parent=11 // pred_region
          %298 = vsyncadd [#allocation9], 0
          %s299 = sshll.u32 %s5, 4
          %s300 = int_to_ptr.hbm [resolvable:$true] %s299
          %s301 = sshll.u32 [#allocation8], 4
          %s302 = int_to_ptr.vmem [resolvable:$true] %s301
          %307 = dma.hbm_to_vmem [thread:$0]  %s300, 3072, %s302, [#allocation9], 64, 64, 4
        $region32: #{feature_decoder_forward.6} parent=11 // pred_fallthru
          _
        // Predicated region
        $region33: #{feature_decoder_forward.6} parent=11 // pred_check
          %p308 = pneg %p189
        $region34: #{feature_decoder_forward.6} parent=11 // pred_check_branch
          %310 = sbr.rel (%p308) target = $region36
        $region35: #{feature_decoder_forward.6} parent=11 // pred_region
          _
        $region36: #{feature_decoder_forward.6} parent=11 // pred_fallthru
          _
      $region12: #{feature_decoder_forward.6} parent=5 // pred_fallthru
        _
      %p311 = scmp.lt.s32.totalorder %s23, 2
      // Predicated region
      $region37: #{feature_decoder_forward.6} parent=5 // pred_check
        %p312 = pneg %p311
      $region38: #{feature_decoder_forward.6} parent=5 // pred_check_branch
        %314 = sbr.rel (%p312) target = $region40
      $region39: #{feature_decoder_forward.6} parent=5 // pred_region
        // Predicated region
        $region41: #{feature_decoder_forward.6} parent=39 // pred_check
          %p315 = pneg %p57
        $region42: #{feature_decoder_forward.6} parent=39 // pred_check_branch
          %317 = sbr.rel (%p315) target = $region44
        $region43: #{feature_decoder_forward.6} parent=39 // pred_region
          %s318 = sand.u32 %s47, 1
          %s319 = scalar_lea.sflag [#allocation3], %s318
          %s320 = sand.u32 %s47, 1
          %s321 = smul.addr %s320, 48
          %s322 = scalar_lea.vmem [#allocation2], %s321
          %s323 = smul.u32 2, %s31
          %325 = vsyncadd %s319, 0
          %s326 = smul.addr %s30, 6
          %s327 = sadd.s32 %s323, %s326
          %s328 = smul.addr %s327, 8
          %s329 = scalar_lea.hbm %s0, %s328
          %s330 = sshll.u32 %s329, 4
          %s331 = int_to_ptr.hbm [resolvable:$true] %s330
          %s332 = sshll.u32 %s322, 4
          %s333 = int_to_ptr.vmem [resolvable:$true] %s332
          %338 = dma.hbm_to_vmem [thread:$0]  %s331, 768, %s333, %s319, 128, 128, 8
        $region44: #{feature_decoder_forward.6} parent=39 // pred_fallthru
          _
      $region40: #{feature_decoder_forward.6} parent=5 // pred_fallthru
        _
      %p339 = scmp.le.s32.totalorder 1, %s23
      %p340 = scmp.lt.s32.totalorder %s23, 3
      %p341 = pnand %p339, %p340
      %p342 = pneg %p341
      // Predicated region
      $region45: #{feature_decoder_forward.6} parent=5 // pred_check
        _
      $region46: #{feature_decoder_forward.6} parent=5 // pred_check_branch
        %344 = sbr.rel (%p341) target = $region48
      $region47: #{feature_decoder_forward.6} parent=5 // pred_region
        %s345 = ssub.s32 %s23, 1
        %s346 = sand.u32 %s50, 1
        %s347 = scalar_lea.sflag [#allocation3], %s346
        %s348 = sand.u32 %s50, 1
        %s349 = smul.addr %s348, 48
        %s350 = scalar_lea.vmem [#allocation2], %s349
        // Predicated region
        $region49: #{feature_decoder_forward.6} parent=47 // pred_check
          %p351 = pneg %p63
        $region50: #{feature_decoder_forward.6} parent=47 // pred_check_branch
          %353 = sbr.rel (%p351) target = $region52
        $region51: #{feature_decoder_forward.6} parent=47 // pred_region
          %355 = dma.done %s347, 768
        $region52: #{feature_decoder_forward.6} parent=47 // pred_fallthru
          _
        // Predicated region
        $region53: #{feature_decoder_forward.6} parent=47 // pred_check
          %p356 = pneg %p84
        $region54: #{feature_decoder_forward.6} parent=47 // pred_check_branch
          %358 = sbr.rel (%p356) target = $region56
        $region55: #{feature_decoder_forward.6} parent=47 // pred_region
          %360 = dma.done [#allocation6], 1536
        $region56: #{feature_decoder_forward.6} parent=47 // pred_fallthru
          _
        // Predicated region
        $region57: #{feature_decoder_forward.6} parent=47 // pred_check
          %p361 = pneg %p126
        $region58: #{feature_decoder_forward.6} parent=47 // pred_check_branch
          %363 = sbr.rel (%p361) target = $region60
        $region59: #{feature_decoder_forward.6} parent=47 // pred_region
          %365 = dma.done [#allocation6], 3072
        $region60: #{feature_decoder_forward.6} parent=47 // pred_fallthru
          _
        // Predicated region
        $region61: #{feature_decoder_forward.6} parent=47 // pred_check
          %p366 = pneg %p168
        $region62: #{feature_decoder_forward.6} parent=47 // pred_check_branch
          %368 = sbr.rel (%p366) target = $region64
        $region63: #{feature_decoder_forward.6} parent=47 // pred_region
          %370 = dma.done [#allocation9], 3072
        $region64: #{feature_decoder_forward.6} parent=47 // pred_fallthru
          _
        %s371 = sand.u32 %s50, 1
        %s372 = scalar_lea.sflag [#allocation3], %s371
        %s373 = sand.u32 %s50, 1
        %s374 = smul.addr %s373, 48
        %s375 = scalar_lea.vmem [#allocation2], %s374
        %p376 = pneg %p63
        %p377 = pneg %p60
        %p378 = pneg %p84
        %p379 = pneg %p81
        %p380 = pneg %p105
        %p381 = pneg %p102
        %p382 = pneg %p126
        %p383 = pneg %p123
        %p384 = pneg %p147
        %p385 = pneg %p144
        %p386 = pneg %p168
        %p387 = pneg %p165
        %p388 = pneg %p189
        %p389 = pneg %p186
        %p390 = pneg %p217
        %p391 = pneg %p214
        %s392 = sand.u32 %s204, 1
        %s393 = scalar_lea.sflag [#allocation4], %s392
        %s394 = sand.u32 %s204, 1
        %s395 = smul.addr %s394, 16
        %s396 = scalar_lea.vmem [#allocation10], %s395
        %p397 = pneg %p245
        %p398 = pneg %p242
        %s399 = smul.u32 2, %s33
        %p400 = scmp.lt.s32.totalorder %s32, 1
        %s401 = scalar_select %p400, %s32, 1
        %p402 = scmp.lt.s32.totalorder %s399, 1
        %s403 = scalar_select %p402, %s399, 1
        %s404 = smul.addr %s401, 2
        %s405 = sadd.s32 %s403, %s404
        %s406 = smul.addr %s405, 4
        %s407 = scalar_lea.vmem %s8, %s406
        %s408 = smul.u32 2, %s33
        %s409 = smul.u32 2, %s33
        %s410 = smul.u32 2, %s33
        %p411 = scmp.lt.s32.totalorder %s32, 1
        %s412 = scalar_select %p411, %s32, 1
        %p413 = scmp.lt.s32.totalorder %s410, 1
        %s414 = scalar_select %p413, %s410, 1
        %s415 = smul.addr %s412, 2
        %s416 = sadd.s32 %s414, %s415
        %s417 = smul.addr %s416, 4
        %s418 = scalar_lea.vmem %s8, %s417
        %s419 = smul.u32 2, %s33
        %v421 = vld [vmem:[%s350] sm:$0xff]
        %v422 = vld [vmem:[%s350 + $0x8] sm:$0xff]
        %v423 = vpack.c.bf16 %v422, %v421
        %v424 = vld [vmem:[#allocation5] sm:$0xf]
        %v425 = vld [vmem:[#allocation5 + $0x4] sm:$0xf]
        %v426 = vld [vmem:[#allocation5 + $0x8] sm:$0xf]
        %v427 = vld [vmem:[#allocation5 + $0xc] sm:$0xf]
        %v428 = vld [vmem:[#allocation5 + $0x10] sm:$0xf]
        %v429 = vld [vmem:[#allocation5 + $0x14] sm:$0xf]
        %v430 = vld [vmem:[#allocation5 + $0x18] sm:$0xf]
        %v431 = vld [vmem:[#allocation5 + $0x1c] sm:$0xf]
        %v432 = vld [vmem:[%s2] sm:$0x1]
        %v434 = vperm.slane %v432, 0
        %v444 = vunpack.c.l.b16 %v424
        %v445 = vunpack.c.l.b16 %v425
        %v446 = vunpack.c.l.b16 %v426
        %v447 = vunpack.c.l.b16 %v427
        %v448 = vunpack.c.l.b16 %v428
        %v449 = vunpack.c.l.b16 %v429
        %v450 = vunpack.c.l.b16 %v430
        %v451 = vunpack.c.l.b16 %v431
        %v452 = vpack.c.b16 %v445, %v444
        %v453 = vpack.c.b16 %v447, %v446
        %v454 = vpack.c.b16 %v449, %v448
        %v455 = vpack.c.b16 %v451, %v450
        %vm460 = vcmask 523264
        %v462 = vsel %vm460, %v423, 0
        %464 = vmatpush.bf16.msra.mxu0 0
        %465 = vmatpush.bf16.msra.mxu0 0
        %466 = vmatpush.bf16.msra.mxu0 0
        %467 = vmatpush.bf16.msra.mxu0 0
        %468 = vmatpush.bf16.msra.mxu0 %v455
        %469 = vmatpush.bf16.msra.mxu0 %v454
        %470 = vmatpush.bf16.msra.mxu0 %v453
        %471 = vmatpush.bf16.msra.mxu0 %v452
        %472 = vmatmul.bf16.gmra.mxu0 %v462
        %v473 = vpop.f32.mrf.mxu0
        %v474 = vadd.f32 %v434, %v473
        %v475 = vpop.f32.mrf.mxu0
        %v476 = vadd.f32 %v434, %v475
        %477 = vdwg.mxu0
        %v478 = vmax.f32 %v474, 0.0
        %v479 = vmax.f32 %v476, 0.0
        %v480 = vpack.c.bf16 %v479, %v478
        %v481 = vld [vmem:[#allocation7] sm:$0xf]
        %v482 = vld [vmem:[#allocation7 + $0x4] sm:$0xf]
        %v483 = vld [vmem:[#allocation7 + $0x8] sm:$0xf]
        %v484 = vld [vmem:[#allocation7 + $0xc] sm:$0xf]
        %v485 = vld [vmem:[#allocation7 + $0x10] sm:$0xf]
        %v486 = vld [vmem:[#allocation7 + $0x14] sm:$0xf]
        %v487 = vld [vmem:[#allocation7 + $0x18] sm:$0xf]
        %v488 = vld [vmem:[#allocation7 + $0x1c] sm:$0xf]
        %v489 = vld [vmem:[#allocation7 + $0x20] sm:$0xf]
        %v490 = vld [vmem:[#allocation7 + $0x24] sm:$0xf]
        %v491 = vld [vmem:[#allocation7 + $0x28] sm:$0xf]
        %v492 = vld [vmem:[#allocation7 + $0x2c] sm:$0xf]
        %v493 = vld [vmem:[#allocation7 + $0x30] sm:$0xf]
        %v494 = vld [vmem:[#allocation7 + $0x34] sm:$0xf]
        %v495 = vld [vmem:[#allocation7 + $0x38] sm:$0xf]
        %v496 = vld [vmem:[#allocation7 + $0x3c] sm:$0xf]
        %v497 = vld [vmem:[%s4] sm:$0x1]
        %v499 = vperm.slane %v497, 0
        %v517 = vunpack.c.l.b16 %v481
        %v518 = vunpack.c.l.b16 %v482
        %v519 = vunpack.c.l.b16 %v483
        %v520 = vunpack.c.l.b16 %v484
        %v521 = vunpack.c.l.b16 %v485
        %v522 = vunpack.c.l.b16 %v486
        %v523 = vunpack.c.l.b16 %v487
        %v524 = vunpack.c.l.b16 %v488
        %v525 = vunpack.c.l.b16 %v489
        %v526 = vunpack.c.l.b16 %v490
        %v527 = vunpack.c.l.b16 %v491
        %v528 = vunpack.c.l.b16 %v492
        %v529 = vunpack.c.l.b16 %v493
        %v530 = vunpack.c.l.b16 %v494
        %v531 = vunpack.c.l.b16 %v495
        %v532 = vunpack.c.l.b16 %v496
        %v533 = vpack.c.b16 %v518, %v517
        %v534 = vpack.c.b16 %v520, %v519
        %v535 = vpack.c.b16 %v522, %v521
        %v536 = vpack.c.b16 %v524, %v523
        %v537 = vpack.c.b16 %v526, %v525
        %v538 = vpack.c.b16 %v528, %v527
        %v539 = vpack.c.b16 %v530, %v529
        %v540 = vpack.c.b16 %v532, %v531
        %549 = vmatpush.bf16.msra.mxu0 %v540
        %550 = vmatpush.bf16.msra.mxu0 %v539
        %551 = vmatpush.bf16.msra.mxu0 %v538
        %552 = vmatpush.bf16.msra.mxu0 %v537
        %553 = vmatpush.bf16.msra.mxu0 %v536
        %554 = vmatpush.bf16.msra.mxu0 %v535
        %555 = vmatpush.bf16.msra.mxu0 %v534
        %556 = vmatpush.bf16.msra.mxu0 %v533
        %557 = vmatmul.bf16.gmra.mxu0 %v480
        %v558 = vpop.f32.mrf.mxu0
        %v559 = vadd.f32 %v499, %v558
        %v560 = vpop.f32.mrf.mxu0
        %v561 = vadd.f32 %v499, %v560
        %562 = vdwg.mxu0
        %v563 = vpack.c.bf16 %v561, %v559
        %v564 = vld [vmem:[#allocation8] sm:$0xf]
        %v565 = vld [vmem:[#allocation8 + $0x4] sm:$0xf]
        %v566 = vld [vmem:[#allocation8 + $0x8] sm:$0xf]
        %v567 = vld [vmem:[#allocation8 + $0xc] sm:$0xf]
        %v568 = vld [vmem:[#allocation8 + $0x10] sm:$0xf]
        %v569 = vld [vmem:[#allocation8 + $0x14] sm:$0xf]
        %v570 = vld [vmem:[#allocation8 + $0x18] sm:$0xf]
        %v571 = vld [vmem:[#allocation8 + $0x1c] sm:$0xf]
        %v572 = vld [vmem:[#allocation8 + $0x20] sm:$0xf]
        %v573 = vld [vmem:[#allocation8 + $0x24] sm:$0xf]
        %v574 = vld [vmem:[#allocation8 + $0x28] sm:$0xf]
        %v575 = vld [vmem:[#allocation8 + $0x2c] sm:$0xf]
        %v576 = vld [vmem:[#allocation8 + $0x30] sm:$0xf]
        %v577 = vld [vmem:[#allocation8 + $0x34] sm:$0xf]
        %v578 = vld [vmem:[#allocation8 + $0x38] sm:$0xf]
        %v579 = vld [vmem:[#allocation8 + $0x3c] sm:$0xf]
        %s580 = scalar_lea.vmem %s350, 16 [#allocation2]
        %v581 = vld [vmem:[%s580] sm:$0xff]
        %v582 = vld [vmem:[%s580 + $0x8] sm:$0xff]
        %v583 = vpack.c.bf16 %v582, %v581
        %s584 = scalar_lea.vmem [#allocation5], 32
        %v585 = vld [vmem:[%s584] sm:$0xf]
        %v586 = vld [vmem:[%s584 + $0x4] sm:$0xf]
        %v587 = vld [vmem:[%s584 + $0x8] sm:$0xf]
        %v588 = vld [vmem:[%s584 + $0xc] sm:$0xf]
        %v589 = vld [vmem:[%s584 + $0x10] sm:$0xf]
        %v590 = vld [vmem:[%s584 + $0x14] sm:$0xf]
        %v591 = vld [vmem:[%s584 + $0x18] sm:$0xf]
        %v592 = vld [vmem:[%s584 + $0x1c] sm:$0xf]
        %s593 = scalar_lea.vmem %s2, 1
        %v594 = vld [vmem:[%s593] sm:$0x1]
        %v596 = vperm.slane %v594, 0
        %v606 = vunpack.c.l.b16 %v585
        %v607 = vunpack.c.l.b16 %v586
        %v608 = vunpack.c.l.b16 %v587
        %v609 = vunpack.c.l.b16 %v588
        %v610 = vunpack.c.l.b16 %v589
        %v611 = vunpack.c.l.b16 %v590
        %v612 = vunpack.c.l.b16 %v591
        %v613 = vunpack.c.l.b16 %v592
        %v614 = vpack.c.b16 %v607, %v606
        %v615 = vpack.c.b16 %v609, %v608
        %v616 = vpack.c.b16 %v611, %v610
        %v617 = vpack.c.b16 %v613, %v612
        %v623 = vsel %vm460, %v583, 0
        %625 = vmatpush.bf16.msra.mxu0 0
        %626 = vmatpush.bf16.msra.mxu0 0
        %627 = vmatpush.bf16.msra.mxu0 0
        %628 = vmatpush.bf16.msra.mxu0 0
        %629 = vmatpush.bf16.msra.mxu0 %v617
        %630 = vmatpush.bf16.msra.mxu0 %v616
        %631 = vmatpush.bf16.msra.mxu0 %v615
        %632 = vmatpush.bf16.msra.mxu0 %v614
        %633 = vmatmul.bf16.gmra.mxu0 %v623
        %v634 = vpop.f32.mrf.mxu0
        %v635 = vadd.f32 %v596, %v634
        %v636 = vpop.f32.mrf.mxu0
        %v637 = vadd.f32 %v596, %v636
        %638 = vdwg.mxu0
        %v639 = vmax.f32 %v635, 0.0
        %v640 = vmax.f32 %v637, 0.0
        %v641 = vpack.c.bf16 %v640, %v639
        %s642 = scalar_lea.vmem [#allocation7], 64
        %v643 = vld [vmem:[%s642] sm:$0xf]
        %v644 = vld [vmem:[%s642 + $0x4] sm:$0xf]
        %v645 = vld [vmem:[%s642 + $0x8] sm:$0xf]
        %v646 = vld [vmem:[%s642 + $0xc] sm:$0xf]
        %v647 = vld [vmem:[%s642 + $0x10] sm:$0xf]
        %v648 = vld [vmem:[%s642 + $0x14] sm:$0xf]
        %v649 = vld [vmem:[%s642 + $0x18] sm:$0xf]
        %v650 = vld [vmem:[%s642 + $0x1c] sm:$0xf]
        %v651 = vld [vmem:[%s642 + $0x20] sm:$0xf]
        %v652 = vld [vmem:[%s642 + $0x24] sm:$0xf]
        %v653 = vld [vmem:[%s642 + $0x28] sm:$0xf]
        %v654 = vld [vmem:[%s642 + $0x2c] sm:$0xf]
        %v655 = vld [vmem:[%s642 + $0x30] sm:$0xf]
        %v656 = vld [vmem:[%s642 + $0x34] sm:$0xf]
        %v657 = vld [vmem:[%s642 + $0x38] sm:$0xf]
        %v658 = vld [vmem:[%s642 + $0x3c] sm:$0xf]
        %s659 = scalar_lea.vmem %s4, 1
        %v660 = vld [vmem:[%s659] sm:$0x1]
        %v662 = vperm.slane %v660, 0
        %v680 = vunpack.c.l.b16 %v643
        %v681 = vunpack.c.l.b16 %v644
        %v682 = vunpack.c.l.b16 %v645
        %v683 = vunpack.c.l.b16 %v646
        %v684 = vunpack.c.l.b16 %v647
        %v685 = vunpack.c.l.b16 %v648
        %v686 = vunpack.c.l.b16 %v649
        %v687 = vunpack.c.l.b16 %v650
        %v688 = vunpack.c.l.b16 %v651
        %v689 = vunpack.c.l.b16 %v652
        %v690 = vunpack.c.l.b16 %v653
        %v691 = vunpack.c.l.b16 %v654
        %v692 = vunpack.c.l.b16 %v655
        %v693 = vunpack.c.l.b16 %v656
        %v694 = vunpack.c.l.b16 %v657
        %v695 = vunpack.c.l.b16 %v658
        %v696 = vpack.c.b16 %v681, %v680
        %v697 = vpack.c.b16 %v683, %v682
        %v698 = vpack.c.b16 %v685, %v684
        %v699 = vpack.c.b16 %v687, %v686
        %v700 = vpack.c.b16 %v689, %v688
        %v701 = vpack.c.b16 %v691, %v690
        %v702 = vpack.c.b16 %v693, %v692
        %v703 = vpack.c.b16 %v695, %v694
        %712 = vmatpush.bf16.msra.mxu0 %v703
        %713 = vmatpush.bf16.msra.mxu0 %v702
        %714 = vmatpush.bf16.msra.mxu0 %v701
        %715 = vmatpush.bf16.msra.mxu0 %v700
        %716 = vmatpush.bf16.msra.mxu0 %v699
        %717 = vmatpush.bf16.msra.mxu0 %v698
        %718 = vmatpush.bf16.msra.mxu0 %v697
        %719 = vmatpush.bf16.msra.mxu0 %v696
        %720 = vmatmul.bf16.gmra.mxu0 %v641
        %v721 = vpop.f32.mrf.mxu0
        %v722 = vadd.f32 %v662, %v721
        %v723 = vpop.f32.mrf.mxu0
        %v724 = vadd.f32 %v662, %v723
        %725 = vdwg.mxu0
        %v726 = vpack.c.bf16 %v724, %v722
        %s727 = scalar_lea.vmem [#allocation8], 64
        %v728 = vld [vmem:[%s727] sm:$0xf]
        %v729 = vld [vmem:[%s727 + $0x4] sm:$0xf]
        %v730 = vld [vmem:[%s727 + $0x8] sm:$0xf]
        %v731 = vld [vmem:[%s727 + $0xc] sm:$0xf]
        %v732 = vld [vmem:[%s727 + $0x10] sm:$0xf]
        %v733 = vld [vmem:[%s727 + $0x14] sm:$0xf]
        %v734 = vld [vmem:[%s727 + $0x18] sm:$0xf]
        %v735 = vld [vmem:[%s727 + $0x1c] sm:$0xf]
        %v736 = vld [vmem:[%s727 + $0x20] sm:$0xf]
        %v737 = vld [vmem:[%s727 + $0x24] sm:$0xf]
        %v738 = vld [vmem:[%s727 + $0x28] sm:$0xf]
        %v739 = vld [vmem:[%s727 + $0x2c] sm:$0xf]
        %v740 = vld [vmem:[%s727 + $0x30] sm:$0xf]
        %v741 = vld [vmem:[%s727 + $0x34] sm:$0xf]
        %v742 = vld [vmem:[%s727 + $0x38] sm:$0xf]
        %v743 = vld [vmem:[%s727 + $0x3c] sm:$0xf]
        %v760 = vunpack.c.l.b16 %v728
        %v761 = vunpack.c.l.b16 %v729
        %v762 = vunpack.c.l.b16 %v730
        %v763 = vunpack.c.l.b16 %v731
        %v764 = vunpack.c.l.b16 %v732
        %v765 = vunpack.c.l.b16 %v733
        %v766 = vunpack.c.l.b16 %v734
        %v767 = vunpack.c.l.b16 %v735
        %v768 = vunpack.c.l.b16 %v736
        %v769 = vunpack.c.l.b16 %v737
        %v770 = vunpack.c.l.b16 %v738
        %v771 = vunpack.c.l.b16 %v739
        %v772 = vunpack.c.l.b16 %v740
        %v773 = vunpack.c.l.b16 %v741
        %v774 = vunpack.c.l.b16 %v742
        %v775 = vunpack.c.l.b16 %v743
        %v776 = vpack.c.b16 %v761, %v760
        %v777 = vpack.c.b16 %v763, %v762
        %v778 = vpack.c.b16 %v765, %v764
        %v779 = vpack.c.b16 %v767, %v766
        %v780 = vpack.c.b16 %v769, %v768
        %v781 = vpack.c.b16 %v771, %v770
        %v782 = vpack.c.b16 %v773, %v772
        %v783 = vpack.c.b16 %v775, %v774
        %792 = vmatpush.bf16.msra.mxu0 %v783
        %793 = vmatpush.bf16.msra.mxu0 %v782
        %794 = vmatpush.bf16.msra.mxu0 %v781
        %795 = vmatpush.bf16.msra.mxu0 %v780
        %796 = vmatpush.bf16.msra.mxu0 %v779
        %797 = vmatpush.bf16.msra.mxu0 %v778
        %798 = vmatpush.bf16.msra.mxu0 %v777
        %799 = vmatpush.bf16.msra.mxu0 %v776
        %800 = vmatmul.bf16.gmra.mxu0 %v726
        %v801 = vpop.f32.mrf.mxu0
        %v802 = vadd.f32 0.0, %v801
        %v803 = vpop.f32.mrf.mxu0
        %v804 = vadd.f32 0.0, %v803
        %805 = vdwg.mxu0
        %v822 = vunpack.c.l.b16 %v564
        %v823 = vunpack.c.l.b16 %v565
        %v824 = vunpack.c.l.b16 %v566
        %v825 = vunpack.c.l.b16 %v567
        %v826 = vunpack.c.l.b16 %v568
        %v827 = vunpack.c.l.b16 %v569
        %v828 = vunpack.c.l.b16 %v570
        %v829 = vunpack.c.l.b16 %v571
        %v830 = vunpack.c.l.b16 %v572
        %v831 = vunpack.c.l.b16 %v573
        %v832 = vunpack.c.l.b16 %v574
        %v833 = vunpack.c.l.b16 %v575
        %v834 = vunpack.c.l.b16 %v576
        %v835 = vunpack.c.l.b16 %v577
        %v836 = vunpack.c.l.b16 %v578
        %v837 = vunpack.c.l.b16 %v579
        %v838 = vpack.c.b16 %v823, %v822
        %v839 = vpack.c.b16 %v825, %v824
        %v840 = vpack.c.b16 %v827, %v826
        %v841 = vpack.c.b16 %v829, %v828
        %v842 = vpack.c.b16 %v831, %v830
        %v843 = vpack.c.b16 %v833, %v832
        %v844 = vpack.c.b16 %v835, %v834
        %v845 = vpack.c.b16 %v837, %v836
        %854 = vmatpush.bf16.msra.mxu0 %v845
        %855 = vmatpush.bf16.msra.mxu0 %v844
        %856 = vmatpush.bf16.msra.mxu0 %v843
        %857 = vmatpush.bf16.msra.mxu0 %v842
        %858 = vmatpush.bf16.msra.mxu0 %v841
        %859 = vmatpush.bf16.msra.mxu0 %v840
        %860 = vmatpush.bf16.msra.mxu0 %v839
        %861 = vmatpush.bf16.msra.mxu0 %v838
        %862 = vmatmul.bf16.gmra.mxu0 %v563
        %v863 = vpop.f32.mrf.mxu0
        %v864 = vadd.f32 %v802, %v863
        %v865 = vpop.f32.mrf.mxu0
        %v866 = vadd.f32 %v804, %v865
        %867 = vdwg.mxu0
        %s868 = scalar_lea.vmem %s350, 32 [#allocation2]
        %v869 = vld [vmem:[%s868] sm:$0xff]
        %v870 = vld [vmem:[%s868 + $0x8] sm:$0xff]
        %v871 = vpack.c.bf16 %v870, %v869
        %s872 = scalar_lea.vmem [#allocation5], 64
        %v873 = vld [vmem:[%s872] sm:$0xf]
        %v874 = vld [vmem:[%s872 + $0x4] sm:$0xf]
        %v875 = vld [vmem:[%s872 + $0x8] sm:$0xf]
        %v876 = vld [vmem:[%s872 + $0xc] sm:$0xf]
        %v877 = vld [vmem:[%s872 + $0x10] sm:$0xf]
        %v878 = vld [vmem:[%s872 + $0x14] sm:$0xf]
        %v879 = vld [vmem:[%s872 + $0x18] sm:$0xf]
        %v880 = vld [vmem:[%s872 + $0x1c] sm:$0xf]
        %s881 = scalar_lea.vmem %s2, 2
        %v882 = vld [vmem:[%s881] sm:$0x1]
        %v884 = vperm.slane %v882, 0
        %v894 = vunpack.c.l.b16 %v873
        %v895 = vunpack.c.l.b16 %v874
        %v896 = vunpack.c.l.b16 %v875
        %v897 = vunpack.c.l.b16 %v876
        %v898 = vunpack.c.l.b16 %v877
        %v899 = vunpack.c.l.b16 %v878
        %v900 = vunpack.c.l.b16 %v879
        %v901 = vunpack.c.l.b16 %v880
        %v902 = vpack.c.b16 %v895, %v894
        %v903 = vpack.c.b16 %v897, %v896
        %v904 = vpack.c.b16 %v899, %v898
        %v905 = vpack.c.b16 %v901, %v900
        %v911 = vsel %vm460, %v871, 0
        %913 = vmatpush.bf16.msra.mxu0 0
        %914 = vmatpush.bf16.msra.mxu0 0
        %915 = vmatpush.bf16.msra.mxu0 0
        %916 = vmatpush.bf16.msra.mxu0 0
        %917 = vmatpush.bf16.msra.mxu0 %v905
        %918 = vmatpush.bf16.msra.mxu0 %v904
        %919 = vmatpush.bf16.msra.mxu0 %v903
        %920 = vmatpush.bf16.msra.mxu0 %v902
        %921 = vmatmul.bf16.gmra.mxu0 %v911
        %v922 = vpop.f32.mrf.mxu0
        %v923 = vadd.f32 %v884, %v922
        %v924 = vpop.f32.mrf.mxu0
        %v925 = vadd.f32 %v884, %v924
        %926 = vdwg.mxu0
        %v927 = vmax.f32 %v923, 0.0
        %v928 = vmax.f32 %v925, 0.0
        %v929 = vpack.c.bf16 %v928, %v927
        %s930 = scalar_lea.vmem [#allocation7], 128
        %v931 = vld [vmem:[%s930] sm:$0xf]
        %v932 = vld [vmem:[%s930 + $0x4] sm:$0xf]
        %v933 = vld [vmem:[%s930 + $0x8] sm:$0xf]
        %v934 = vld [vmem:[%s930 + $0xc] sm:$0xf]
        %v935 = vld [vmem:[%s930 + $0x10] sm:$0xf]
        %v936 = vld [vmem:[%s930 + $0x14] sm:$0xf]
        %v937 = vld [vmem:[%s930 + $0x18] sm:$0xf]
        %v938 = vld [vmem:[%s930 + $0x1c] sm:$0xf]
        %v939 = vld [vmem:[%s930 + $0x20] sm:$0xf]
        %v940 = vld [vmem:[%s930 + $0x24] sm:$0xf]
        %v941 = vld [vmem:[%s930 + $0x28] sm:$0xf]
        %v942 = vld [vmem:[%s930 + $0x2c] sm:$0xf]
        %v943 = vld [vmem:[%s930 + $0x30] sm:$0xf]
        %v944 = vld [vmem:[%s930 + $0x34] sm:$0xf]
        %v945 = vld [vmem:[%s930 + $0x38] sm:$0xf]
        %v946 = vld [vmem:[%s930 + $0x3c] sm:$0xf]
        %s947 = scalar_lea.vmem %s4, 2
        %v948 = vld [vmem:[%s947] sm:$0x1]
        %v950 = vperm.slane %v948, 0
        %v968 = vunpack.c.l.b16 %v931
        %v969 = vunpack.c.l.b16 %v932
        %v970 = vunpack.c.l.b16 %v933
        %v971 = vunpack.c.l.b16 %v934
        %v972 = vunpack.c.l.b16 %v935
        %v973 = vunpack.c.l.b16 %v936
        %v974 = vunpack.c.l.b16 %v937
        %v975 = vunpack.c.l.b16 %v938
        %v976 = vunpack.c.l.b16 %v939
        %v977 = vunpack.c.l.b16 %v940
        %v978 = vunpack.c.l.b16 %v941
        %v979 = vunpack.c.l.b16 %v942
        %v980 = vunpack.c.l.b16 %v943
        %v981 = vunpack.c.l.b16 %v944
        %v982 = vunpack.c.l.b16 %v945
        %v983 = vunpack.c.l.b16 %v946
        %v984 = vpack.c.b16 %v969, %v968
        %v985 = vpack.c.b16 %v971, %v970
        %v986 = vpack.c.b16 %v973, %v972
        %v987 = vpack.c.b16 %v975, %v974
        %v988 = vpack.c.b16 %v977, %v976
        %v989 = vpack.c.b16 %v979, %v978
        %v990 = vpack.c.b16 %v981, %v980
        %v991 = vpack.c.b16 %v983, %v982
        %1000 = vmatpush.bf16.msra.mxu0 %v991
        %1001 = vmatpush.bf16.msra.mxu0 %v990
        %1002 = vmatpush.bf16.msra.mxu0 %v989
        %1003 = vmatpush.bf16.msra.mxu0 %v988
        %1004 = vmatpush.bf16.msra.mxu0 %v987
        %1005 = vmatpush.bf16.msra.mxu0 %v986
        %1006 = vmatpush.bf16.msra.mxu0 %v985
        %1007 = vmatpush.bf16.msra.mxu0 %v984
        %1008 = vmatmul.bf16.gmra.mxu0 %v929
        %v1009 = vpop.f32.mrf.mxu0
        %v1010 = vadd.f32 %v950, %v1009
        %v1011 = vpop.f32.mrf.mxu0
        %v1012 = vadd.f32 %v950, %v1011
        %1013 = vdwg.mxu0
        %v1014 = vpack.c.bf16 %v1012, %v1010
        %s1015 = scalar_lea.vmem [#allocation8], 128
        %v1016 = vld [vmem:[%s1015] sm:$0xf]
        %v1017 = vld [vmem:[%s1015 + $0x4] sm:$0xf]
        %v1018 = vld [vmem:[%s1015 + $0x8] sm:$0xf]
        %v1019 = vld [vmem:[%s1015 + $0xc] sm:$0xf]
        %v1020 = vld [vmem:[%s1015 + $0x10] sm:$0xf]
        %v1021 = vld [vmem:[%s1015 + $0x14] sm:$0xf]
        %v1022 = vld [vmem:[%s1015 + $0x18] sm:$0xf]
        %v1023 = vld [vmem:[%s1015 + $0x1c] sm:$0xf]
        %v1024 = vld [vmem:[%s1015 + $0x20] sm:$0xf]
        %v1025 = vld [vmem:[%s1015 + $0x24] sm:$0xf]
        %v1026 = vld [vmem:[%s1015 + $0x28] sm:$0xf]
        %v1027 = vld [vmem:[%s1015 + $0x2c] sm:$0xf]
        %v1028 = vld [vmem:[%s1015 + $0x30] sm:$0xf]
        %v1029 = vld [vmem:[%s1015 + $0x34] sm:$0xf]
        %v1030 = vld [vmem:[%s1015 + $0x38] sm:$0xf]
        %v1031 = vld [vmem:[%s1015 + $0x3c] sm:$0xf]
        %v1048 = vunpack.c.l.b16 %v1016
        %v1049 = vunpack.c.l.b16 %v1017
        %v1050 = vunpack.c.l.b16 %v1018
        %v1051 = vunpack.c.l.b16 %v1019
        %v1052 = vunpack.c.l.b16 %v1020
        %v1053 = vunpack.c.l.b16 %v1021
        %v1054 = vunpack.c.l.b16 %v1022
        %v1055 = vunpack.c.l.b16 %v1023
        %v1056 = vunpack.c.l.b16 %v1024
        %v1057 = vunpack.c.l.b16 %v1025
        %v1058 = vunpack.c.l.b16 %v1026
        %v1059 = vunpack.c.l.b16 %v1027
        %v1060 = vunpack.c.l.b16 %v1028
        %v1061 = vunpack.c.l.b16 %v1029
        %v1062 = vunpack.c.l.b16 %v1030
        %v1063 = vunpack.c.l.b16 %v1031
        %v1064 = vpack.c.b16 %v1049, %v1048
        %v1065 = vpack.c.b16 %v1051, %v1050
        %v1066 = vpack.c.b16 %v1053, %v1052
        %v1067 = vpack.c.b16 %v1055, %v1054
        %v1068 = vpack.c.b16 %v1057, %v1056
        %v1069 = vpack.c.b16 %v1059, %v1058
        %v1070 = vpack.c.b16 %v1061, %v1060
        %v1071 = vpack.c.b16 %v1063, %v1062
        %1080 = vmatpush.bf16.msra.mxu0 %v1071
        %1081 = vmatpush.bf16.msra.mxu0 %v1070
        %1082 = vmatpush.bf16.msra.mxu0 %v1069
        %1083 = vmatpush.bf16.msra.mxu0 %v1068
        %1084 = vmatpush.bf16.msra.mxu0 %v1067
        %1085 = vmatpush.bf16.msra.mxu0 %v1066
        %1086 = vmatpush.bf16.msra.mxu0 %v1065
        %1087 = vmatpush.bf16.msra.mxu0 %v1064
        %1088 = vmatmul.bf16.gmra.mxu0 %v1014
        %v1089 = vpop.f32.mrf.mxu0
        %v1090 = vadd.f32 0.0, %v1089
        %v1091 = vpop.f32.mrf.mxu0
        %v1092 = vadd.f32 0.0, %v1091
        %1093 = vdwg.mxu0
        %v1094 = vadd.f32 %v864, %v1090
        %v1095 = vadd.f32 %v866, %v1092
        %v1096 = vld [vmem:[%s6] sm:$0x1]
        %v1098 = vperm.slane %v1096, 0
        %v1100 = vadd.f32 %v1094, %v1098
        %v1101 = vadd.f32 %v1095, %v1098
        %1102 = vst [vmem:[%s396] sm:$0xff] %v1100
        %1103 = vst [vmem:[%s396 + $0x8] sm:$0xff] %v1101
        %v1104 = vpack.c.bf16 %v1100, %v1100
        %v1105 = vpack.c.bf16 %v1101, %v1101
        %1106 = vst [vmem:[%s418] sm:$0xf] %v1104
        %1107 = vst [vmem:[%s418 + $0x4] sm:$0xf] %v1105
        %s1108 = sand.u32 %s204, 1
        %s1109 = scalar_lea.sflag [#allocation4], %s1108
        %s1110 = sand.u32 %s204, 1
        %s1111 = smul.addr %s1110, 16
        %s1112 = scalar_lea.vmem [#allocation10], %s1111
        %s1113 = smul.u32 2, %s33
        %p1114 = scmp.lt.s32.totalorder %s32, 1
        %s1115 = scalar_select %p1114, %s32, 1
        %p1116 = scmp.lt.s32.totalorder %s1113, 1
        %s1117 = scalar_select %p1116, %s1113, 1
        %s1118 = smul.addr %s1115, 2
        %s1119 = sadd.s32 %s1117, %s1118
        %s1120 = smul.addr %s1119, 4
        %s1121 = scalar_lea.vmem %s8, %s1120
        // Predicated region
        $region65: #{feature_decoder_forward.6} parent=47 // pred_check
          %p1122 = pneg %p214
        $region66: #{feature_decoder_forward.6} parent=47 // pred_check_branch
          %1124 = sbr.rel (%p1122) target = $region68
        $region67: #{feature_decoder_forward.6} parent=47 // pred_region
          %s1125 = smul.u32 2, %s33
          %1127 = vsyncadd %s1109, 0
          %s1128 = smul.addr %s32, 2
          %s1129 = sadd.s32 %s1125, %s1128
          %s1130 = smul.addr %s1129, 8
          %s1131 = scalar_lea.hbm %s7, %s1130
          %s1132 = sshll.u32 %s1112, 4
          %s1133 = int_to_ptr.vmem [resolvable:$true] %s1132
          %s1134 = sshll.u32 %s1131, 4
          %s1135 = int_to_ptr.hbm [resolvable:$true] %s1134
          %1140 = dma.vmem_to_hbm [thread:$0]  %s1133, 256, %s1135, %s1109, 128, 128, 8
        $region68: #{feature_decoder_forward.6} parent=47 // pred_fallthru
          _
        // Predicated region
        $region69: #{feature_decoder_forward.6} parent=47 // pred_check
          %p1141 = pneg %p242
        $region70: #{feature_decoder_forward.6} parent=47 // pred_check_branch
          %1143 = sbr.rel (%p1141) target = $region72
        $region71: #{feature_decoder_forward.6} parent=47 // pred_region
          %s1144 = smul.u32 2, %s33
        $region72: #{feature_decoder_forward.6} parent=47 // pred_fallthru
          _
      $region48: #{feature_decoder_forward.6} parent=5 // pred_fallthru
        _
      %p1145 = scmp.le.s32.totalorder 2, %s23
      // Predicated region
      $region73: #{feature_decoder_forward.6} parent=5 // pred_check
        %p1146 = pneg %p1145
      $region74: #{feature_decoder_forward.6} parent=5 // pred_check_branch
        %1148 = sbr.rel (%p1146) target = $region76
      $region75: #{feature_decoder_forward.6} parent=5 // pred_region
        %s1149 = ssub.s32 %s23, 2
        // Predicated region
        $region77: #{feature_decoder_forward.6} parent=75 // pred_check
          %p1150 = pneg %p220
        $region78: #{feature_decoder_forward.6} parent=75 // pred_check_branch
          %1152 = sbr.rel (%p1150) target = $region80
        $region79: #{feature_decoder_forward.6} parent=75 // pred_region
          %s1153 = sand.u32 %s205, 1
          %s1154 = scalar_lea.sflag [#allocation4], %s1153
          %s1155 = sand.u32 %s205, 1
          %s1156 = smul.addr %s1155, 16
          %s1157 = scalar_lea.vmem [#allocation10], %s1156
          %1159 = dma.done %s1154, 256
        $region80: #{feature_decoder_forward.6} parent=75 // pred_fallthru
          _
        // Predicated region
        $region81: #{feature_decoder_forward.6} parent=75 // pred_check
          %p1160 = pneg %p248
        $region82: #{feature_decoder_forward.6} parent=75 // pred_check_branch
          %1162 = sbr.rel (%p1160) target = $region84
        $region83: #{feature_decoder_forward.6} parent=75 // pred_region
          %s1163 = smul.u32 2, %s35
          %p1164 = scmp.lt.s32.totalorder %s34, 1
          %s1165 = scalar_select %p1164, %s34, 1
          %p1166 = scmp.lt.s32.totalorder %s1163, 1
          %s1167 = scalar_select %p1166, %s1163, 1
          %s1168 = smul.addr %s1165, 2
          %s1169 = sadd.s32 %s1167, %s1168
          %s1170 = smul.addr %s1169, 4
          %s1171 = scalar_lea.vmem %s8, %s1170
        $region84: #{feature_decoder_forward.6} parent=75 // pred_fallthru
          _
      $region76: #{feature_decoder_forward.6} parent=5 // pred_fallthru
        _
    $region6: #{feature_decoder_forward.6} parent=1 // loop_footer
      %s27 = sadd.s32 1, %s23
    $region7: #{feature_decoder_forward.6} parent=1 // loop_footer_branch
      %22 = sbr.rel target = $region3
    $region8: #{feature_decoder_forward.6} parent=1 // loop_exit
      _
    %1172 = vsyncpa [#allocation3], 1
    %s1173 = scalar_lea.sflag [#allocation3], 1
    %1174 = vsyncpa %s1173, 1
    %1175 = vsyncpa [#allocation6], 1
    %1176 = vsyncpa [#allocation9], 1
    %1177 = vsyncpa [#allocation4], 1
    %s1178 = scalar_lea.sflag [#allocation4], 1
    %1179 = vsyncpa %s1178, 1

// kernel: feature_decoder_forward.9
$region0: #{feature_decoder_forward.9}
  #allocation0 [shape = 'u32[]', space=smem, size = 0x4, offset = 0x4, fixed_abs, tag = 'smem constant byte address 0x4 - core index']
  #allocation1 [shape = 'u32[72,128]{1,0:T(1,128)}', space=vmem, size = 0x9000, scoped, tag = 'internal scratch']
  #allocation2 [shape = 'bf16[16,128]{1,0:T(8,128)(2,1)}', space=vmem, size = 0x1000, scoped, tag = 'scratch operand']
  #allocation3 [shape = 'f32[16,128]{1,0:T(8,128)}', space=vmem, size = 0x2000, scoped, tag = 'scratch operand']
  %s0 = inlined_call_operand.vmem [shape: bf16[2,16,128], index: 0, kind: input, shape index: {}]
  %s1 = inlined_call_operand.vmem [shape: bf16[4,128,96], index: 1, kind: input, shape index: {}]
  %s2 = inlined_call_operand.vmem [shape: f32[4,1,96], index: 2, kind: input, shape index: {}]
  %s3 = inlined_call_operand.vmem [shape: bf16[4,32,128], index: 3, kind: input, shape index: {}]
  %s4 = inlined_call_operand.vmem [shape: f32[1,128], index: 4, kind: input, shape index: {}]
  %s5 = inlined_call_operand.vmem [shape: f32[2,128], index: 5, kind: input, shape index: {}]
  %s6 = inlined_call_operand.vmem [shape: bf16[2,16,128], index: 6, kind: output, shape index: {}]
  %s7 = sld [smem:[#allocation0]]
  $region65: #{feature_decoder_forward.9} parent=0
    _
  %s9 = ssub.s32 1, %s7
  %s10 = scalar_select 0, %s9, %s7
  loop: start=0, step=1, limit=10
  $region2: #{feature_decoder_forward.9} parent=0 // loop_pre_header
    _
  $region3: #{feature_decoder_forward.9} parent=0 // loop_header
    %s12 = sphi 0, %s16
    %p13 = scmp.ge.s32.totalorder %s12, 10
    %s19 = sphi 0, %s31
    %s20 = sphi 0, %s27
    %s21 = sphi 0, %s19
    %s22 = sphi 0, %s20
    %s23 = sphi 0, %s21
    %s24 = sphi 0, %s22
    %s34 = sphi 0, %s36
    %s37 = sphi 0, %s34
    %s38 = sphi 0, %s37
    %s54 = sphi 0, %s38
    %s60 = sphi 0, %s62
    %s63 = sphi 0, %s60
    %s64 = sphi 0, %s63
    %s80 = sphi 0, %s64
    %s86 = sphi 0, %s88
    %s89 = sphi 0, %s86
    %s90 = sphi 0, %s89
    %s106 = sphi 0, %s90
    %s112 = sphi 0, %s114
    %s115 = sphi 0, %s112
    %s116 = sphi 0, %s115
    %s132 = sphi 0, %s116
    %s136 = sphi 0, %s136
    %s138 = sphi 0, %s136
    %s139 = sphi 0, %s138
    %s153 = sphi 0, %s139
    %s157 = sphi 0, %s157
    %s159 = sphi 0, %s157
    %s160 = sphi 0, %s159
    %s174 = sphi 0, %s160
    %s180 = sphi 0, %s182
    %s183 = sphi 0, %s180
    %s184 = sphi 0, %s183
    %s200 = sphi 0, %s184
  $region4: #{feature_decoder_forward.9} parent=0 // loop_header_branch
    %15 = sbr.rel (%p13) target = $region8
  $region5: #{feature_decoder_forward.9} parent=0 // loop_body
    %s17 = ssub.s32 %s12, 1
    %s18 = ssub.s32 %s12, 2
    %s25 = sadd.s32 1, %s20
    %p26 = scmp.ge.s32.totalorder %s25, 4
    %s27 = scalar_select %p26, 0, %s25
    %s28 = sadd.s32 1, %s19
    %s29 = scalar_select %p26, %s28, %s19
    %p30 = scmp.ge.s32.totalorder %s29, 2
    %s31 = scalar_select %p30, 0, %s29
    %s32 = ssub.s32 %s19, %s31
    %p33 = scmp.eq.s32.totalorder %s32, 0
    %s35 = sadd.s32 %s34, 1
    %s36 = scalar_select %p33, %s34, %s35
    %p39 = pneg %p33
    %p40 = scmp.eq.s32.totalorder %s12, 7
    %p41 = por %p39, %p40
    %p42 = scmp.ne.s32.totalorder %s34, %s37
    %p43 = scmp.eq.s32.totalorder %s12, 0
    %p44 = por %p42, %p43
    %p45 = scmp.ne.s32.totalorder %s34, %s37
    %p46 = scmp.eq.s32.totalorder %s17, 7
    %p47 = por %p45, %p46
    %p48 = scmp.ne.s32.totalorder %s37, %s38
    %p49 = scmp.eq.s32.totalorder %s17, 0
    %p50 = por %p48, %p49
    %p51 = scmp.ne.s32.totalorder %s37, %s38
    %p52 = scmp.eq.s32.totalorder %s18, 7
    %p53 = por %p51, %p52
    %p55 = scmp.ne.s32.totalorder %s38, %s54
    %p56 = scmp.eq.s32.totalorder %s18, 0
    %p57 = por %p55, %p56
    %s58 = ssub.s32 %s20, %s27
    %p59 = scmp.eq.s32.totalorder %s58, 0
    %s61 = sadd.s32 %s60, 1
    %s62 = scalar_select %p59, %s60, %s61
    %p65 = pneg %p59
    %p66 = scmp.eq.s32.totalorder %s12, 7
    %p67 = por %p65, %p66
    %p68 = scmp.ne.s32.totalorder %s60, %s63
    %p69 = scmp.eq.s32.totalorder %s12, 0
    %p70 = por %p68, %p69
    %p71 = scmp.ne.s32.totalorder %s60, %s63
    %p72 = scmp.eq.s32.totalorder %s17, 7
    %p73 = por %p71, %p72
    %p74 = scmp.ne.s32.totalorder %s63, %s64
    %p75 = scmp.eq.s32.totalorder %s17, 0
    %p76 = por %p74, %p75
    %p77 = scmp.ne.s32.totalorder %s63, %s64
    %p78 = scmp.eq.s32.totalorder %s18, 7
    %p79 = por %p77, %p78
    %p81 = scmp.ne.s32.totalorder %s64, %s80
    %p82 = scmp.eq.s32.totalorder %s18, 0
    %p83 = por %p81, %p82
    %s84 = ssub.s32 %s20, %s27
    %p85 = scmp.eq.s32.totalorder %s84, 0
    %s87 = sadd.s32 %s86, 1
    %s88 = scalar_select %p85, %s86, %s87
    %p91 = pneg %p85
    %p92 = scmp.eq.s32.totalorder %s12, 7
    %p93 = por %p91, %p92
    %p94 = scmp.ne.s32.totalorder %s86, %s89
    %p95 = scmp.eq.s32.totalorder %s12, 0
    %p96 = por %p94, %p95
    %p97 = scmp.ne.s32.totalorder %s86, %s89
    %p98 = scmp.eq.s32.totalorder %s17, 7
    %p99 = por %p97, %p98
    %p100 = scmp.ne.s32.totalorder %s89, %s90
    %p101 = scmp.eq.s32.totalorder %s17, 0
    %p102 = por %p100, %p101
    %p103 = scmp.ne.s32.totalorder %s89, %s90
    %p104 = scmp.eq.s32.totalorder %s18, 7
    %p105 = por %p103, %p104
    %p107 = scmp.ne.s32.totalorder %s90, %s106
    %p108 = scmp.eq.s32.totalorder %s18, 0
    %p109 = por %p107, %p108
    %s110 = ssub.s32 %s20, %s27
    %p111 = scmp.eq.s32.totalorder %s110, 0
    %s113 = sadd.s32 %s112, 1
    %s114 = scalar_select %p111, %s112, %s113
    %p117 = pneg %p111
    %p118 = scmp.eq.s32.totalorder %s12, 7
    %p119 = por %p117, %p118
    %p120 = scmp.ne.s32.totalorder %s112, %s115
    %p121 = scmp.eq.s32.totalorder %s12, 0
    %p122 = por %p120, %p121
    %p123 = scmp.ne.s32.totalorder %s112, %s115
    %p124 = scmp.eq.s32.totalorder %s17, 7
    %p125 = por %p123, %p124
    %p126 = scmp.ne.s32.totalorder %s115, %s116
    %p127 = scmp.eq.s32.totalorder %s17, 0
    %p128 = por %p126, %p127
    %p129 = scmp.ne.s32.totalorder %s115, %s116
    %p130 = scmp.eq.s32.totalorder %s18, 7
    %p131 = por %p129, %p130
    %p133 = scmp.ne.s32.totalorder %s116, %s132
    %p134 = scmp.eq.s32.totalorder %s18, 0
    %p135 = por %p133, %p134
    %s137 = sadd.s32 %s136, 1
    %p140 = scmp.eq.s32.totalorder %s12, 7
    %p141 = scmp.ne.s32.totalorder %s136, %s138
    %p142 = scmp.eq.s32.totalorder %s12, 0
    %p143 = por %p141, %p142
    %p144 = scmp.ne.s32.totalorder %s136, %s138
    %p145 = scmp.eq.s32.totalorder %s17, 7
    %p146 = por %p144, %p145
    %p147 = scmp.ne.s32.totalorder %s138, %s139
    %p148 = scmp.eq.s32.totalorder %s17, 0
    %p149 = por %p147, %p148
    %p150 = scmp.ne.s32.totalorder %s138, %s139
    %p151 = scmp.eq.s32.totalorder %s18, 7
    %p152 = por %p150, %p151
    %p154 = scmp.ne.s32.totalorder %s139, %s153
    %p155 = scmp.eq.s32.totalorder %s18, 0
    %p156 = por %p154, %p155
    %s158 = sadd.s32 %s157, 1
    %p161 = scmp.eq.s32.totalorder %s12, 7
    %p162 = scmp.ne.s32.totalorder %s157, %s159
    %p163 = scmp.eq.s32.totalorder %s12, 0
    %p164 = por %p162, %p163
    %p165 = scmp.ne.s32.totalorder %s157, %s159
    %p166 = scmp.eq.s32.totalorder %s17, 7
    %p167 = por %p165, %p166
    %p168 = scmp.ne.s32.totalorder %s159, %s160
    %p169 = scmp.eq.s32.totalorder %s17, 0
    %p170 = por %p168, %p169
    %p171 = scmp.ne.s32.totalorder %s159, %s160
    %p172 = scmp.eq.s32.totalorder %s18, 7
    %p173 = por %p171, %p172
    %p175 = scmp.ne.s32.totalorder %s160, %s174
    %p176 = scmp.eq.s32.totalorder %s18, 0
    %p177 = por %p175, %p176
    %s178 = ssub.s32 %s19, %s31
    %p179 = scmp.eq.s32.totalorder %s178, 0
    %s181 = sadd.s32 %s180, 1
    %s182 = scalar_select %p179, %s180, %s181
    %p185 = pneg %p179
    %p186 = scmp.eq.s32.totalorder %s12, 7
    %p187 = por %p185, %p186
    %p188 = scmp.ne.s32.totalorder %s180, %s183
    %p189 = scmp.eq.s32.totalorder %s12, 0
    %p190 = por %p188, %p189
    %p191 = scmp.ne.s32.totalorder %s180, %s183
    %p192 = scmp.eq.s32.totalorder %s17, 7
    %p193 = por %p191, %p192
    %p194 = scmp.ne.s32.totalorder %s183, %s184
    %p195 = scmp.eq.s32.totalorder %s17, 0
    %p196 = por %p194, %p195
    %p197 = scmp.ne.s32.totalorder %s183, %s184
    %p198 = scmp.eq.s32.totalorder %s18, 7
    %p199 = por %p197, %p198
    %p201 = scmp.ne.s32.totalorder %s184, %s200
    %p202 = scmp.eq.s32.totalorder %s18, 0
    %p203 = por %p201, %p202
    %p204 = scmp.le.s32.totalorder 1, %s12
    %p205 = scmp.lt.s32.totalorder %s12, 9
    %p206 = pnand %p204, %p205
    %p207 = pneg %p206
    // Predicated region
    $region9: #{feature_decoder_forward.9} parent=5 // pred_check
      _
    $region10: #{feature_decoder_forward.9} parent=5 // pred_check_branch
      %209 = sbr.rel (%p206) target = $region12
    $region11: #{feature_decoder_forward.9} parent=5 // pred_region
      %s210 = ssub.s32 %s12, 1
      // Predicated region
      $region13: #{feature_decoder_forward.9} parent=11 // pred_check
        %p211 = pneg %p149
      $region14: #{feature_decoder_forward.9} parent=11 // pred_check_branch
        %213 = sbr.rel (%p211) target = $region16
      $region15: #{feature_decoder_forward.9} parent=11 // pred_region
        _
      $region16: #{feature_decoder_forward.9} parent=11 // pred_fallthru
        _
      // Predicated region
      $region17: #{feature_decoder_forward.9} parent=11 // pred_check
        %p214 = pneg %p170
      $region18: #{feature_decoder_forward.9} parent=11 // pred_check_branch
        %216 = sbr.rel (%p214) target = $region20
      $region19: #{feature_decoder_forward.9} parent=11 // pred_region
        _
      $region20: #{feature_decoder_forward.9} parent=11 // pred_fallthru
        _
    $region12: #{feature_decoder_forward.9} parent=5 // pred_fallthru
      _
    %p217 = scmp.lt.s32.totalorder %s12, 8
    // Predicated region
    $region21: #{feature_decoder_forward.9} parent=5 // pred_check
      %p218 = pneg %p217
    $region22: #{feature_decoder_forward.9} parent=5 // pred_check_branch
      %220 = sbr.rel (%p218) target = $region24
    $region23: #{feature_decoder_forward.9} parent=5 // pred_region
      // Predicated region
      $region25: #{feature_decoder_forward.9} parent=23 // pred_check
        %p221 = pneg %p44
      $region26: #{feature_decoder_forward.9} parent=23 // pred_check_branch
        %223 = sbr.rel (%p221) target = $region28
      $region27: #{feature_decoder_forward.9} parent=23 // pred_region
        %p224 = scmp.lt.s32.totalorder %s19, 1
        %s225 = scalar_select %p224, %s19, 1
        %s226 = smul.addr %s225, 2
        %s227 = smul.addr %s226, 4
        %s228 = scalar_lea.vmem %s0, %s227
      $region28: #{feature_decoder_forward.9} parent=23 // pred_fallthru
        _
      // Predicated region
      $region29: #{feature_decoder_forward.9} parent=23 // pred_check
        %p229 = pneg %p70
      $region30: #{feature_decoder_forward.9} parent=23 // pred_check_branch
        %231 = sbr.rel (%p229) target = $region32
      $region31: #{feature_decoder_forward.9} parent=23 // pred_region
        %p232 = scmp.lt.s32.totalorder %s20, 3
        %s233 = scalar_select %p232, %s20, 3
        %s234 = smul.addr %s233, 16
        %s235 = smul.addr %s234, 4
        %s236 = scalar_lea.vmem %s1, %s235
      $region32: #{feature_decoder_forward.9} parent=23 // pred_fallthru
        _
      // Predicated region
      $region33: #{feature_decoder_forward.9} parent=23 // pred_check
        %p237 = pneg %p96
      $region34: #{feature_decoder_forward.9} parent=23 // pred_check_branch
        %239 = sbr.rel (%p237) target = $region36
      $region35: #{feature_decoder_forward.9} parent=23 // pred_region
        %p240 = scmp.lt.s32.totalorder %s20, 3
        %s241 = scalar_select %p240, %s20, 3
        %s242 = scalar_lea.vmem %s2, %s241
      $region36: #{feature_decoder_forward.9} parent=23 // pred_fallthru
        _
      // Predicated region
      $region37: #{feature_decoder_forward.9} parent=23 // pred_check
        %p243 = pneg %p122
      $region38: #{feature_decoder_forward.9} parent=23 // pred_check_branch
        %245 = sbr.rel (%p243) target = $region40
      $region39: #{feature_decoder_forward.9} parent=23 // pred_region
        %p246 = scmp.lt.s32.totalorder %s20, 3
        %s247 = scalar_select %p246, %s20, 3
        %s248 = smul.addr %s247, 4
        %s249 = smul.addr %s248, 4
        %s250 = scalar_lea.vmem %s3, %s249
      $region40: #{feature_decoder_forward.9} parent=23 // pred_fallthru
        _
    $region24: #{feature_decoder_forward.9} parent=5 // pred_fallthru
      _
    %p251 = scmp.le.s32.totalorder 1, %s12
    %p252 = scmp.lt.s32.totalorder %s12, 9
    %p253 = pnand %p251, %p252
    %p254 = pneg %p253
    // Predicated region
    $region41: #{feature_decoder_forward.9} parent=5 // pred_check
      _
    $region42: #{feature_decoder_forward.9} parent=5 // pred_check_branch
      %256 = sbr.rel (%p253) target = $region44
    $region43: #{feature_decoder_forward.9} parent=5 // pred_region
      %s257 = ssub.s32 %s12, 1
      %p258 = scmp.lt.s32.totalorder %s21, 1
      %s259 = scalar_select %p258, %s21, 1
      %s260 = smul.addr %s259, 2
      %s261 = smul.addr %s260, 4
      %s262 = scalar_lea.vmem %s0, %s261
      %p263 = pneg %p50
      %p264 = pneg %p47
      %p265 = scmp.lt.s32.totalorder %s22, 3
      %s266 = scalar_select %p265, %s22, 3
      %s267 = smul.addr %s266, 16
      %s268 = smul.addr %s267, 4
      %s269 = scalar_lea.vmem %s1, %s268
      %p270 = pneg %p76
      %p271 = pneg %p73
      %p272 = scmp.lt.s32.totalorder %s22, 3
      %s273 = scalar_select %p272, %s22, 3
      %s274 = scalar_lea.vmem %s2, %s273
      %p275 = pneg %p102
      %p276 = pneg %p99
      %p277 = scmp.lt.s32.totalorder %s22, 3
      %s278 = scalar_select %p277, %s22, 3
      %s279 = smul.addr %s278, 4
      %s280 = smul.addr %s279, 4
      %s281 = scalar_lea.vmem %s3, %s280
      %p282 = pneg %p128
      %p283 = pneg %p125
      %p284 = pneg %p149
      %p285 = pneg %p146
      %p286 = pneg %p170
      %p287 = pneg %p167
      %p288 = pneg %p196
      %p289 = pneg %p193
      %p290 = scmp.lt.s32.totalorder %s21, 1
      %s291 = scalar_select %p290, %s21, 1
      %s292 = smul.addr %s291, 2
      %s293 = smul.addr %s292, 4
      %s294 = scalar_lea.vmem %s6, %s293
      %p295 = scmp.lt.s32.totalorder %s21, 1
      %s296 = scalar_select %p295, %s21, 1
      %s297 = smul.addr %s296, 2
      %s298 = smul.addr %s297, 4
      %s299 = scalar_lea.vmem %s0, %s298
      %p300 = scmp.lt.s32.totalorder %s22, 3
      %s301 = scalar_select %p300, %s22, 3
      %s302 = smul.addr %s301, 16
      %s303 = smul.addr %s302, 4
      %s304 = scalar_lea.vmem %s1, %s303
      %p305 = scmp.lt.s32.totalorder %s22, 3
      %s306 = scalar_select %p305, %s22, 3
      %s307 = scalar_lea.vmem %s2, %s306
      %p308 = scmp.lt.s32.totalorder %s22, 3
      %s309 = scalar_select %p308, %s22, 3
      %s310 = smul.addr %s309, 4
      %s311 = smul.addr %s310, 4
      %s312 = scalar_lea.vmem %s3, %s311
      %p313 = scmp.lt.s32.totalorder %s21, 1
      %s314 = scalar_select %p313, %s21, 1
      %s315 = smul.addr %s314, 2
      %s316 = smul.addr %s315, 4
      %s317 = scalar_lea.vmem %s6, %s316
      %p319 = scmp.eq.s32.totalorder %s22, 0
      // Predicated region
      $region45: #{feature_decoder_forward.9} parent=43 // pred_check
        %p320 = pneg %p319
      $region46: #{feature_decoder_forward.9} parent=43 // pred_check_branch
        %322 = sbr.rel (%p320) target = $region48
      $region47: #{feature_decoder_forward.9} parent=43 // pred_region
        %v323 = vld [vmem:[%s299] sm:$0xf]
        %v324 = vld [vmem:[%s299 + $0x4] sm:$0xf]
        %v325 = vunpack.c.l.bf16 %v323
        %v326 = vunpack.c.l.bf16 %v324
        %327 = vadd.xlane.f32.xlu0 %v325
        %v328 = vpop.xlane.xlu0 %327
        %329 = vadd.xlane.f32.xlu0 %v326
        %v330 = vpop.xlane.xlu0 %329
        %v331 = vrcp.pop 128.0
        %v332 = vmul.f32 128.0, %v331
        %v333 = vsub.f32 1.0, %v332
        %v334 = vmul.f32 %v331, %v333
        %v335 = vadd.f32 %v331, %v334
        %vm336 = vweird.f32 %v331
        %v337 = vsel %vm336, %v331, %v335
        %v338 = vmul.f32 %v328, %v337
        %v339 = vmul.f32 %v330, %v337
        %v340 = vsub.f32 %v325, %v338
        %v341 = vsub.f32 %v326, %v339
        %v342 = vmul.f32 %v340, %v340
        %v343 = vmul.f32 %v341, %v341
        %344 = vadd.xlane.f32.xlu0 %v342
        %v345 = vpop.xlane.xlu0 %344
        %346 = vadd.xlane.f32.xlu0 %v343
        %v347 = vpop.xlane.xlu0 %346
        %v348 = vmul.f32 %v345, %v337
        %v349 = vmul.f32 %v347, %v337
        %v350 = vadd.f32 %v348, 1e-05
        %v351 = vadd.f32 %v349, 1e-05
        %v352 = vrsqrt.pop %v350
        %v353 = vmul.f32 %v352, %v350
        %v354 = vmul.f32 %v353, %v352
        %v355 = vmul.f32 0.5, %v354
        %v356 = vsub.f32 1.5, %v355
        %v357 = vmul.f32 %v352, %v356
        %vm358 = vweird.f32 %v350
        %vm359 = vweird.f32 %v352
        %vm360 = vmor %vm358, %vm359
        %v361 = vsel %vm360, %v352, %v357
        %v362 = vrsqrt.pop %v351
        %v363 = vmul.f32 %v362, %v351
        %v364 = vmul.f32 %v363, %v362
        %v365 = vmul.f32 0.5, %v364
        %v366 = vsub.f32 1.5, %v365
        %v367 = vmul.f32 %v362, %v366
        %vm368 = vweird.f32 %v351
        %vm369 = vweird.f32 %v362
        %vm370 = vmor %vm368, %vm369
        %v371 = vsel %vm370, %v362, %v367
        %v372 = vmul.f32 %v340, %v361
        %v373 = vmul.f32 %v341, %v371
        %v374 = vld [vmem:[%s5] sm:$0x1]
        %v375 = vperm.slane %v374, 0
        %v376 = vmul.f32 %v372, %v375
        %v377 = vmul.f32 %v373, %v375
        %v378 = vld [vmem:[%s5 + $0x1] sm:$0x1]
        %v379 = vperm.slane %v378, 0
        %v380 = vadd.f32 %v376, %v379
        %v381 = vadd.f32 %v377, %v379
        %v382 = vpack.c.bf16 %v380, %v380
        %v383 = vpack.c.bf16 %v381, %v381
        %384 = vst [vmem:[#allocation2] sm:$0xf] %v382
        %385 = vst [vmem:[#allocation2 + $0x4] sm:$0xf] %v383
        %386 = vst [vmem:[#allocation3] sm:$0xff] 0.0
        %387 = vst [vmem:[#allocation3 + $0x8] sm:$0xff] 0.0
      $region48: #{feature_decoder_forward.9} parent=43 // pred_fallthru
        _
      %v388 = vld [vmem:[#allocation2] sm:$0xf]
      %v389 = vld [vmem:[#allocation2 + $0x4] sm:$0xf]
      %v390 = vld [vmem:[%s304] sm:$0xf]
      %v391 = vld [vmem:[%s304 + $0x4] sm:$0xf]
      %v392 = vld [vmem:[%s304 + $0x8] sm:$0xf]
      %v393 = vld [vmem:[%s304 + $0xc] sm:$0xf]
      %v394 = vld [vmem:[%s304 + $0x10] sm:$0xf]
      %v395 = vld [vmem:[%s304 + $0x14] sm:$0xf]
      %v396 = vld [vmem:[%s304 + $0x18] sm:$0xf]
      %v397 = vld [vmem:[%s304 + $0x1c] sm:$0xf]
      %v398 = vld [vmem:[%s304 + $0x20] sm:$0xf]
      %v399 = vld [vmem:[%s304 + $0x24] sm:$0xf]
      %v400 = vld [vmem:[%s304 + $0x28] sm:$0xf]
      %v401 = vld [vmem:[%s304 + $0x2c] sm:$0xf]
      %v402 = vld [vmem:[%s304 + $0x30] sm:$0xf]
      %v403 = vld [vmem:[%s304 + $0x34] sm:$0xf]
      %v404 = vld [vmem:[%s304 + $0x38] sm:$0xf]
      %v405 = vld [vmem:[%s304 + $0x3c] sm:$0xf]
      %v406 = vld [vmem:[%s307] sm:$0x1]
      %v408 = vperm.slane %v406, 0
      %v412 = vunpack.c.l.b16 %v388
      %v413 = vunpack.c.l.b16 %v389
      %v414 = vpack.c.b16 %v413, %v412
      %v432 = vunpack.c.l.b16 %v390
      %v433 = vunpack.c.l.b16 %v391
      %v434 = vunpack.c.l.b16 %v392
      %v435 = vunpack.c.l.b16 %v393
      %v436 = vunpack.c.l.b16 %v394
      %v437 = vunpack.c.l.b16 %v395
      %v438 = vunpack.c.l.b16 %v396
      %v439 = vunpack.c.l.b16 %v397
      %v440 = vunpack.c.l.b16 %v398
      %v441 = vunpack.c.l.b16 %v399
      %v442 = vunpack.c.l.b16 %v400
      %v443 = vunpack.c.l.b16 %v401
      %v444 = vunpack.c.l.b16 %v402
      %v445 = vunpack.c.l.b16 %v403
      %v446 = vunpack.c.l.b16 %v404
      %v447 = vunpack.c.l.b16 %v405
      %v448 = vpack.c.b16 %v433, %v432
      %v449 = vpack.c.b16 %v435, %v434
      %v450 = vpack.c.b16 %v437, %v436
      %v451 = vpack.c.b16 %v439, %v438
      %v452 = vpack.c.b16 %v441, %v440
      %v453 = vpack.c.b16 %v443, %v442
      %v454 = vpack.c.b16 %v445, %v444
      %v455 = vpack.c.b16 %v447, %v446
      %464 = vmatpush.bf16.msra.mxu0 %v455
      %465 = vmatpush.bf16.msra.mxu0 %v454
      %466 = vmatpush.bf16.msra.mxu0 %v453
      %467 = vmatpush.bf16.msra.mxu0 %v452
      %468 = vmatpush.bf16.msra.mxu0 %v451
      %469 = vmatpush.bf16.msra.mxu0 %v450
      %470 = vmatpush.bf16.msra.mxu0 %v449
      %471 = vmatpush.bf16.msra.mxu0 %v448
      %472 = vmatmul.bf16.gmra.mxu0 %v414
      %v473 = vpop.f32.mrf.mxu0
      %v474 = vadd.f32 %v408, %v473
      %v475 = vpop.f32.mrf.mxu0
      %v476 = vadd.f32 %v408, %v475
      %477 = vdwg.mxu0
      %v478 = vmul.f32 %v474, 0.17677669
      %v479 = vmul.f32 %v476, 0.17677669
      %v480 = vpack.c.bf16 %v479, %v478
      %v481 = vpack.c.bf16 %v476, %v474
      %483 = vrot.lane.b32.xlu0 %v481, 96
      %v484 = vpop.permute.xlu0 %483
      %vm485 = vcmask 261120
      %v487 = vsel %vm485, %v480, 0
      %v490 = vsel %vm485, %v484, 0
      %492 = vmatpush.bf16.xpose.msra.mxu0 0
      %493 = vmatpush.bf16.xpose.msra.mxu0 0
      %494 = vmatpush.bf16.xpose.msra.mxu0 0
      %495 = vmatpush.bf16.xpose.msra.mxu0 0
      %496 = vmatpush.bf16.xpose.msra.mxu0 0
      %497 = vmatpush.bf16.xpose.msra.mxu0 0
      %498 = vmatpush.bf16.xpose.msra.mxu0 0
      %499 = vmatpush.bf16.xpose.msra.mxu0 %v490
      %500 = vmatmul.bf16.gmra.mxu0 %v487
      %v501 = vpop.f32.mrf.mxu0
      %v502 = vadd.f32 0.0, %v501
      %v503 = vpop.f32.mrf.mxu0
      %v504 = vadd.f32 0.0, %v503
      %505 = vdwg.mxu0
      %vm506 = vcmask 130048
      %v507 = vsel %vm506, %v502, -inf
      %508 = vmax.xlane.f32.xlu0 %v507
      %v509 = vpop.xlane.xlu0 %508
      %v510 = vsel %vm506, %v504, -inf
      %511 = vmax.xlane.f32.xlu0 %v510
      %v512 = vpop.xlane.xlu0 %511
      %v513 = vsub.f32 %v502, %v509
      %v514 = vsub.f32 %v504, %v512
      %v515 = vmul.f32 %v513, 1.442695
      %v516 = vpow.pop %v515
      %v517 = vmul.f32 %v514, 1.442695
      %v518 = vpow.pop %v517
      %v519 = vsel %vm506, %v516, 0.0
      %520 = vadd.xlane.f32.xlu0 %v519
      %v521 = vpop.xlane.xlu0 %520
      %v522 = vsel %vm506, %v518, 0.0
      %523 = vadd.xlane.f32.xlu0 %v522
      %v524 = vpop.xlane.xlu0 %523
      %v525 = vrcp.pop %v521
      %v526 = vrcp.pop %v524
      %v527 = vmul.f32 %v516, %v525
      %v528 = vmul.f32 %v518, %v526
      %v529 = vpack.c.bf16 %v528, %v527
      %530 = vrot.lane.b32.xlu0 %v481, 64
      %v531 = vpop.permute.xlu0 %530
      %v534 = vsel %vm506, %v529, 0
      %536 = vmatpush.bf16.msra.mxu0 0
      %537 = vmatpush.bf16.msra.mxu0 0
      %538 = vmatpush.bf16.msra.mxu0 0
      %539 = vmatpush.bf16.msra.mxu0 0
      %540 = vmatpush.bf16.msra.mxu0 0
      %541 = vmatpush.bf16.msra.mxu0 0
      %542 = vmatpush.bf16.msra.mxu0 0
      %543 = vmatpush.bf16.msra.mxu0 %v531
      %544 = vmatmul.bf16.gmra.mxu0 %v534
      %v545 = vpop.f32.mrf.mxu0
      %v546 = vadd.f32 0.0, %v545
      %v547 = vpop.f32.mrf.mxu0
      %v548 = vadd.f32 0.0, %v547
      %549 = vdwg.mxu0
      %v550 = vld [vmem:[#allocation3] sm:$0xff]
      %v551 = vld [vmem:[#allocation3 + $0x8] sm:$0xff]
      %v552 = vpack.c.bf16 %v548, %v546
      %v553 = vld [vmem:[%s312] sm:$0xf]
      %v554 = vld [vmem:[%s312 + $0x4] sm:$0xf]
      %v555 = vld [vmem:[%s312 + $0x8] sm:$0xf]
      %v556 = vld [vmem:[%s312 + $0xc] sm:$0xf]
      %v561 = vunpack.c.l.b16 %v553
      %v562 = vunpack.c.l.b16 %v554
      %v563 = vunpack.c.l.b16 %v555
      %v564 = vunpack.c.l.b16 %v556
      %v565 = vpack.c.b16 %v562, %v561
      %v566 = vpack.c.b16 %v564, %v563
      %v570 = vsel %vm485, %v552, 0
      %572 = vmatpush.bf16.msra.mxu0 0
      %573 = vmatpush.bf16.msra.mxu0 0
      %574 = vmatpush.bf16.msra.mxu0 0
      %575 = vmatpush.bf16.msra.mxu0 0
      %576 = vmatpush.bf16.msra.mxu0 0
      %577 = vmatpush.bf16.msra.mxu0 0
      %578 = vmatpush.bf16.msra.mxu0 %v566
      %579 = vmatpush.bf16.msra.mxu0 %v565
      %580 = vmatmul.bf16.gmra.mxu0 %v570
      %v581 = vpop.f32.mrf.mxu0
      %v582 = vadd.f32 0.0, %v581
      %v583 = vpop.f32.mrf.mxu0
      %v584 = vadd.f32 0.0, %v583
      %585 = vdwg.mxu0
      %v586 = vadd.f32 %v550, %v582
      %v587 = vadd.f32 %v551, %v584
      %588 = vst [vmem:[#allocation3] sm:$0xff] %v586
      %589 = vst [vmem:[#allocation3 + $0x8] sm:$0xff] %v587
      %p590 = scmp.eq.s32.totalorder %s22, 3
      // Predicated region
      $region49: #{feature_decoder_forward.9} parent=43 // pred_check
        %p591 = pneg %p590
      $region50: #{feature_decoder_forward.9} parent=43 // pred_check_branch
        %593 = sbr.rel (%p591) target = $region52
      $region51: #{feature_decoder_forward.9} parent=43 // pred_region
        %v594 = vld [vmem:[%s299] sm:$0xf]
        %v595 = vld [vmem:[%s299 + $0x4] sm:$0xf]
        %v596 = vunpack.c.l.bf16 %v594
        %v597 = vunpack.c.l.bf16 %v595
        %v598 = vld [vmem:[#allocation3] sm:$0xff]
        %v599 = vld [vmem:[#allocation3 + $0x8] sm:$0xff]
        %v600 = vadd.f32 %v596, %v598
        %v601 = vadd.f32 %v597, %v599
        %v602 = vld [vmem:[%s4] sm:$0x1]
        %v604 = vperm.slane %v602, 0
        %v606 = vadd.f32 %v600, %v604
        %v607 = vadd.f32 %v601, %v604
        %v608 = vpack.c.bf16 %v606, %v606
        %v609 = vpack.c.bf16 %v607, %v607
        %610 = vst [vmem:[%s317] sm:$0xf] %v608
        %611 = vst [vmem:[%s317 + $0x4] sm:$0xf] %v609
      $region52: #{feature_decoder_forward.9} parent=43 // pred_fallthru
        _
      %p612 = scmp.lt.s32.totalorder %s21, 1
      %s613 = scalar_select %p612, %s21, 1
      %s614 = smul.addr %s613, 2
      %s615 = smul.addr %s614, 4
      %s616 = scalar_lea.vmem %s6, %s615
      // Predicated region
      $region53: #{feature_decoder_forward.9} parent=43 // pred_check
        %p617 = pneg %p193
      $region54: #{feature_decoder_forward.9} parent=43 // pred_check_branch
        %619 = sbr.rel (%p617) target = $region56
      $region55: #{feature_decoder_forward.9} parent=43 // pred_region
        _
      $region56: #{feature_decoder_forward.9} parent=43 // pred_fallthru
        _
    $region44: #{feature_decoder_forward.9} parent=5 // pred_fallthru
      _
    %p620 = scmp.le.s32.totalorder 2, %s12
    // Predicated region
    $region57: #{feature_decoder_forward.9} parent=5 // pred_check
      %p621 = pneg %p620
    $region58: #{feature_decoder_forward.9} parent=5 // pred_check_branch
      %623 = sbr.rel (%p621) target = $region60
    $region59: #{feature_decoder_forward.9} parent=5 // pred_region
      %s624 = ssub.s32 %s12, 2
      // Predicated region
      $region61: #{feature_decoder_forward.9} parent=59 // pred_check
        %p625 = pneg %p199
      $region62: #{feature_decoder_forward.9} parent=59 // pred_check_branch
        %627 = sbr.rel (%p625) target = $region64
      $region63: #{feature_decoder_forward.9} parent=59 // pred_region
        %p628 = scmp.lt.s32.totalorder %s23, 1
        %s629 = scalar_select %p628, %s23, 1
        %s630 = smul.addr %s629, 2
        %s631 = smul.addr %s630, 4
        %s632 = scalar_lea.vmem %s6, %s631
      $region64: #{feature_decoder_forward.9} parent=59 // pred_fallthru
        _
    $region60: #{feature_decoder_forward.9} parent=5 // pred_fallthru
      _
  $region6: #{feature_decoder_forward.9} parent=0 // loop_footer
    %s16 = sadd.s32 1, %s12
  $region7: #{feature_decoder_forward.9} parent=0 // loop_footer_branch
    %11 = sbr.rel target = $region3
  $region8: #{feature_decoder_forward.9} parent=0 // loop_exit
    _

// kernel: feature_decoder_forward.11
$region0: #{feature_decoder_forward.11}
  #allocation0 [shape = 'u32[]', space=smem, size = 0x4, offset = 0x4, fixed_abs, tag = 'smem constant byte address 0x4 - core index']
  #allocation1 [shape = 'u32[72,128]{1,0:T(1,128)}', space=vmem, size = 0x9000, scoped, tag = 'internal scratch']
  %s0 = inlined_call_operand.vmem [shape: bf16[2,128,16], index: 0, kind: input, shape index: {}]
  %s1 = inlined_call_operand.vmem [shape: bf16[8,128], index: 1, kind: input, shape index: {}]
  %s2 = inlined_call_operand.vmem [shape: f32[8,1], index: 2, kind: input, shape index: {}]
  %s3 = inlined_call_operand.vmem [shape: f32[2,8,16], index: 3, kind: output, shape index: {}]
  %s4 = sld [smem:[#allocation0]]
  $region45: #{feature_decoder_forward.11} parent=0
    _
  %s6 = ssub.s32 1, %s4
  %s7 = scalar_select 0, %s6, %s4
  loop: start=0, step=1, limit=4
  $region2: #{feature_decoder_forward.11} parent=0 // loop_pre_header
    _
  $region3: #{feature_decoder_forward.11} parent=0 // loop_header
    %s9 = sphi 0, %s13
    %p10 = scmp.ge.s32.totalorder %s9, 4
    %s19 = sphi 0, %s21
    %s22 = sphi 0, %s19
    %s23 = sphi 0, %s22
    %s39 = sphi 0, %s23
    %s43 = sphi 0, %s43
    %s45 = sphi 0, %s43
    %s46 = sphi 0, %s45
    %s60 = sphi 0, %s46
    %s64 = sphi 0, %s64
    %s66 = sphi 0, %s64
    %s67 = sphi 0, %s66
    %s81 = sphi 0, %s67
    %s87 = sphi 0, %s89
    %s90 = sphi 0, %s87
    %s91 = sphi 0, %s90
    %s107 = sphi 0, %s91
  $region4: #{feature_decoder_forward.11} parent=0 // loop_header_branch
    %12 = sbr.rel (%p10) target = $region8
  $region5: #{feature_decoder_forward.11} parent=0 // loop_body
    %s14 = ssub.s32 %s9, 1
    %s15 = ssub.s32 %s9, 2
    %s16 = sadd.s32 %s9, 1
    %s17 = ssub.s32 %s9, %s16
    %p18 = scmp.eq.s32.totalorder %s17, 0
    %s20 = sadd.s32 %s19, 1
    %s21 = scalar_select %p18, %s19, %s20
    %p24 = pneg %p18
    %p25 = scmp.eq.s32.totalorder %s9, 1
    %p26 = por %p24, %p25
    %p27 = scmp.ne.s32.totalorder %s19, %s22
    %p28 = scmp.eq.s32.totalorder %s9, 0
    %p29 = por %p27, %p28
    %p30 = scmp.ne.s32.totalorder %s19, %s22
    %p31 = scmp.eq.s32.totalorder %s14, 1
    %p32 = por %p30, %p31
    %p33 = scmp.ne.s32.totalorder %s22, %s23
    %p34 = scmp.eq.s32.totalorder %s14, 0
    %p35 = por %p33, %p34
    %p36 = scmp.ne.s32.totalorder %s22, %s23
    %p37 = scmp.eq.s32.totalorder %s15, 1
    %p38 = por %p36, %p37
    %p40 = scmp.ne.s32.totalorder %s23, %s39
    %p41 = scmp.eq.s32.totalorder %s15, 0
    %p42 = por %p40, %p41
    %s44 = sadd.s32 %s43, 1
    %p47 = scmp.eq.s32.totalorder %s9, 1
    %p48 = scmp.ne.s32.totalorder %s43, %s45
    %p49 = scmp.eq.s32.totalorder %s9, 0
    %p50 = por %p48, %p49
    %p51 = scmp.ne.s32.totalorder %s43, %s45
    %p52 = scmp.eq.s32.totalorder %s14, 1
    %p53 = por %p51, %p52
    %p54 = scmp.ne.s32.totalorder %s45, %s46
    %p55 = scmp.eq.s32.totalorder %s14, 0
    %p56 = por %p54, %p55
    %p57 = scmp.ne.s32.totalorder %s45, %s46
    %p58 = scmp.eq.s32.totalorder %s15, 1
    %p59 = por %p57, %p58
    %p61 = scmp.ne.s32.totalorder %s46, %s60
    %p62 = scmp.eq.s32.totalorder %s15, 0
    %p63 = por %p61, %p62
    %s65 = sadd.s32 %s64, 1
    %p68 = scmp.eq.s32.totalorder %s9, 1
    %p69 = scmp.ne.s32.totalorder %s64, %s66
    %p70 = scmp.eq.s32.totalorder %s9, 0
    %p71 = por %p69, %p70
    %p72 = scmp.ne.s32.totalorder %s64, %s66
    %p73 = scmp.eq.s32.totalorder %s14, 1
    %p74 = por %p72, %p73
    %p75 = scmp.ne.s32.totalorder %s66, %s67
    %p76 = scmp.eq.s32.totalorder %s14, 0
    %p77 = por %p75, %p76
    %p78 = scmp.ne.s32.totalorder %s66, %s67
    %p79 = scmp.eq.s32.totalorder %s15, 1
    %p80 = por %p78, %p79
    %p82 = scmp.ne.s32.totalorder %s67, %s81
    %p83 = scmp.eq.s32.totalorder %s15, 0
    %p84 = por %p82, %p83
    %s85 = ssub.s32 %s9, %s16
    %p86 = scmp.eq.s32.totalorder %s85, 0
    %s88 = sadd.s32 %s87, 1
    %s89 = scalar_select %p86, %s87, %s88
    %p92 = pneg %p86
    %p93 = scmp.eq.s32.totalorder %s9, 1
    %p94 = por %p92, %p93
    %p95 = scmp.ne.s32.totalorder %s87, %s90
    %p96 = scmp.eq.s32.totalorder %s9, 0
    %p97 = por %p95, %p96
    %p98 = scmp.ne.s32.totalorder %s87, %s90
    %p99 = scmp.eq.s32.totalorder %s14, 1
    %p100 = por %p98, %p99
    %p101 = scmp.ne.s32.totalorder %s90, %s91
    %p102 = scmp.eq.s32.totalorder %s14, 0
    %p103 = por %p101, %p102
    %p104 = scmp.ne.s32.totalorder %s90, %s91
    %p105 = scmp.eq.s32.totalorder %s15, 1
    %p106 = por %p104, %p105
    %p108 = scmp.ne.s32.totalorder %s91, %s107
    %p109 = scmp.eq.s32.totalorder %s15, 0
    %p110 = por %p108, %p109
    %p111 = scmp.le.s32.totalorder 1, %s9
    %p112 = scmp.lt.s32.totalorder %s9, 3
    %p113 = pnand %p111, %p112
    %p114 = pneg %p113
    // Predicated region
    $region9: #{feature_decoder_forward.11} parent=5 // pred_check
      _
    $region10: #{feature_decoder_forward.11} parent=5 // pred_check_branch
      %116 = sbr.rel (%p113) target = $region12
    $region11: #{feature_decoder_forward.11} parent=5 // pred_region
      %s117 = ssub.s32 %s9, 1
      // Predicated region
      $region13: #{feature_decoder_forward.11} parent=11 // pred_check
        %p118 = pneg %p56
      $region14: #{feature_decoder_forward.11} parent=11 // pred_check_branch
        %120 = sbr.rel (%p118) target = $region16
      $region15: #{feature_decoder_forward.11} parent=11 // pred_region
        _
      $region16: #{feature_decoder_forward.11} parent=11 // pred_fallthru
        _
      // Predicated region
      $region17: #{feature_decoder_forward.11} parent=11 // pred_check
        %p121 = pneg %p77
      $region18: #{feature_decoder_forward.11} parent=11 // pred_check_branch
        %123 = sbr.rel (%p121) target = $region20
      $region19: #{feature_decoder_forward.11} parent=11 // pred_region
        _
      $region20: #{feature_decoder_forward.11} parent=11 // pred_fallthru
        _
    $region12: #{feature_decoder_forward.11} parent=5 // pred_fallthru
      _
    %p124 = scmp.lt.s32.totalorder %s9, 2
    // Predicated region
    $region21: #{feature_decoder_forward.11} parent=5 // pred_check
      %p125 = pneg %p124
    $region22: #{feature_decoder_forward.11} parent=5 // pred_check_branch
      %127 = sbr.rel (%p125) target = $region24
    $region23: #{feature_decoder_forward.11} parent=5 // pred_region
      // Predicated region
      $region25: #{feature_decoder_forward.11} parent=23 // pred_check
        %p128 = pneg %p29
      $region26: #{feature_decoder_forward.11} parent=23 // pred_check_branch
        %130 = sbr.rel (%p128) target = $region28
      $region27: #{feature_decoder_forward.11} parent=23 // pred_region
        %p131 = scmp.lt.s32.totalorder %s9, 1
        %s132 = scalar_select %p131, %s9, 1
        %s133 = smul.addr %s132, 16
        %s134 = smul.addr %s133, 4
        %s135 = scalar_lea.vmem %s0, %s134
      $region28: #{feature_decoder_forward.11} parent=23 // pred_fallthru
        _
    $region24: #{feature_decoder_forward.11} parent=5 // pred_fallthru
      _
    %p136 = scmp.le.s32.totalorder 1, %s9
    %p137 = scmp.lt.s32.totalorder %s9, 3
    %p138 = pnand %p136, %p137
    %p139 = pneg %p138
    // Predicated region
    $region29: #{feature_decoder_forward.11} parent=5 // pred_check
      _
    $region30: #{feature_decoder_forward.11} parent=5 // pred_check_branch
      %141 = sbr.rel (%p138) target = $region32
    $region31: #{feature_decoder_forward.11} parent=5 // pred_region
      %s142 = ssub.s32 %s9, 1
      %p143 = scmp.lt.s32.totalorder %s14, 1
      %s144 = scalar_select %p143, %s14, 1
      %s145 = smul.addr %s144, 16
      %s146 = smul.addr %s145, 4
      %s147 = scalar_lea.vmem %s0, %s146
      %p148 = pneg %p35
      %p149 = pneg %p32
      %p150 = pneg %p56
      %p151 = pneg %p53
      %p152 = pneg %p77
      %p153 = pneg %p74
      %p154 = pneg %p103
      %p155 = pneg %p100
      %p156 = scmp.lt.s32.totalorder %s14, 1
      %s157 = scalar_select %p156, %s14, 1
      %s158 = smul.addr %s157, 8
      %s159 = scalar_lea.vmem %s3, %s158
      %p160 = scmp.lt.s32.totalorder %s14, 1
      %s161 = scalar_select %p160, %s14, 1
      %s162 = smul.addr %s161, 16
      %s163 = smul.addr %s162, 4
      %s164 = scalar_lea.vmem %s0, %s163
      %p165 = scmp.lt.s32.totalorder %s14, 1
      %s166 = scalar_select %p165, %s14, 1
      %s167 = smul.addr %s166, 8
      %s168 = scalar_lea.vmem %s3, %s167
      %v169 = vld [vmem:[%s164] sm:$0xf]
      %v170 = vld [vmem:[%s164 + $0x4] sm:$0xf]
      %v171 = vld [vmem:[%s164 + $0x8] sm:$0xf]
      %v172 = vld [vmem:[%s164 + $0xc] sm:$0xf]
      %v173 = vld [vmem:[%s164 + $0x10] sm:$0xf]
      %v174 = vld [vmem:[%s164 + $0x14] sm:$0xf]
      %v175 = vld [vmem:[%s164 + $0x18] sm:$0xf]
      %v176 = vld [vmem:[%s164 + $0x1c] sm:$0xf]
      %v177 = vld [vmem:[%s164 + $0x20] sm:$0xf]
      %v178 = vld [vmem:[%s164 + $0x24] sm:$0xf]
      %v179 = vld [vmem:[%s164 + $0x28] sm:$0xf]
      %v180 = vld [vmem:[%s164 + $0x2c] sm:$0xf]
      %v181 = vld [vmem:[%s164 + $0x30] sm:$0xf]
      %v182 = vld [vmem:[%s164 + $0x34] sm:$0xf]
      %v183 = vld [vmem:[%s164 + $0x38] sm:$0xf]
      %v184 = vld [vmem:[%s164 + $0x3c] sm:$0xf]
      %v185 = vld [vmem:[%s1] sm:$0xf]
      %v186 = vld [vmem:[%s2] sm:$0xff]
      %188 = vset.pattern.permute.xlu0 0
      %189 = vperm.xlu0 %188, %v186
      %v190 = vpop.permute.xlu0 %189
      %v208 = vunpack.c.l.b16 %v169
      %v209 = vunpack.c.l.b16 %v170
      %v210 = vunpack.c.l.b16 %v171
      %v211 = vunpack.c.l.b16 %v172
      %v212 = vunpack.c.l.b16 %v173
      %v213 = vunpack.c.l.b16 %v174
      %v214 = vunpack.c.l.b16 %v175
      %v215 = vunpack.c.l.b16 %v176
      %v216 = vunpack.c.l.b16 %v177
      %v217 = vunpack.c.l.b16 %v178
      %v218 = vunpack.c.l.b16 %v179
      %v219 = vunpack.c.l.b16 %v180
      %v220 = vunpack.c.l.b16 %v181
      %v221 = vunpack.c.l.b16 %v182
      %v222 = vunpack.c.l.b16 %v183
      %v223 = vunpack.c.l.b16 %v184
      %v224 = vpack.c.b16 %v209, %v208
      %v225 = vpack.c.b16 %v211, %v210
      %v226 = vpack.c.b16 %v213, %v212
      %v227 = vpack.c.b16 %v215, %v214
      %v228 = vpack.c.b16 %v217, %v216
      %v229 = vpack.c.b16 %v219, %v218
      %v230 = vpack.c.b16 %v221, %v220
      %v231 = vpack.c.b16 %v223, %v222
      %240 = vmatpush.bf16.msra.mxu0 %v231
      %241 = vmatpush.bf16.msra.mxu0 %v230
      %242 = vmatpush.bf16.msra.mxu0 %v229
      %243 = vmatpush.bf16.msra.mxu0 %v228
      %244 = vmatpush.bf16.msra.mxu0 %v227
      %245 = vmatpush.bf16.msra.mxu0 %v226
      %246 = vmatpush.bf16.msra.mxu0 %v225
      %247 = vmatpush.bf16.msra.mxu0 %v224
      %248 = vmatmul.bf16.gmra.mxu0 %v185
      %v249 = vpop.f32.mrf.mxu0
      %v250 = vadd.f32 %v190, %v249
      %v251 = vpop.f32.mrf.mxu0
      %252 = vdwg.mxu0
      %vm253 = vcmask 130048
      %254 = vst.msk [vmem:[%s168] sm:$0xff] %vm253, %v250
      %p255 = scmp.lt.s32.totalorder %s14, 1
      %s256 = scalar_select %p255, %s14, 1
      %s257 = smul.addr %s256, 8
      %s258 = scalar_lea.vmem %s3, %s257
      // Predicated region
      $region33: #{feature_decoder_forward.11} parent=31 // pred_check
        %p259 = pneg %p100
      $region34: #{feature_decoder_forward.11} parent=31 // pred_check_branch
        %261 = sbr.rel (%p259) target = $region36
      $region35: #{feature_decoder_forward.11} parent=31 // pred_region
        _
      $region36: #{feature_decoder_forward.11} parent=31 // pred_fallthru
        _
    $region32: #{feature_decoder_forward.11} parent=5 // pred_fallthru
      _
    %p262 = scmp.le.s32.totalorder 2, %s9
    // Predicated region
    $region37: #{feature_decoder_forward.11} parent=5 // pred_check
      %p263 = pneg %p262
    $region38: #{feature_decoder_forward.11} parent=5 // pred_check_branch
      %265 = sbr.rel (%p263) target = $region40
    $region39: #{feature_decoder_forward.11} parent=5 // pred_region
      %s266 = ssub.s32 %s9, 2
      // Predicated region
      $region41: #{feature_decoder_forward.11} parent=39 // pred_check
        %p267 = pneg %p106
      $region42: #{feature_decoder_forward.11} parent=39 // pred_check_branch
        %269 = sbr.rel (%p267) target = $region44
      $region43: #{feature_decoder_forward.11} parent=39 // pred_region
        %p270 = scmp.lt.s32.totalorder %s15, 1
        %s271 = scalar_select %p270, %s15, 1
        %s272 = smul.addr %s271, 8
        %s273 = scalar_lea.vmem %s3, %s272
      $region44: #{feature_decoder_forward.11} parent=39 // pred_fallthru
        _
    $region40: #{feature_decoder_forward.11} parent=5 // pred_fallthru
      _
  $region6: #{feature_decoder_forward.11} parent=0 // loop_footer
    %s13 = sadd.s32 1, %s9
  $region7: #{feature_decoder_forward.11} parent=0 // loop_footer_branch
    %8 = sbr.rel target = $region3
  $region8: #{feature_decoder_forward.11} parent=0 // loop_exit
    _

</llo_original>
